<compile_context>
chip_gen: v6e
topology: v6e:2x2x1
jax: 0.10.0
libtpu: 0.0.40
codegen_flags: <defaults>
</compile_context>

<pallas_src>
import functools

import jax
import jax.numpy as jnp
from jax.experimental import pallas as pl
from jax.experimental.pallas import tpu as pltpu


# -----------------------------------------------------------------------------
# Fused Pallas kernel: n_layers LSTM + final Linear
# -----------------------------------------------------------------------------
def _make_lstm_model_kernel(n_layers, T, B, H):
    """Builds the fused kernel.

    Ref layout (inputs, outputs, scratch):
      x_ref                : (T*B, I)    time-major, row-flattened input
      per layer l:
        wih_l              : (I_l, 4H)   input->hidden weights (gate order i,f,g,o)
        whh_l              : (H, 4H)     hidden->hidden weights
        b_l                : (1, 4H)     combined bias (b_ih + b_hh)
      fc_w                 : (H, L)
      fc_b                 : (1, L)
      seq_ref (out)        : (B, T*H)    top-layer hidden states, lane-dense
      logits_ref (out)     : (B, L)
      act_sc (scratch)     : (T*B, H)    inter-layer activation staging (VMEM)
    """

    def kernel(*refs):
        x_ref = refs[0]
        layer_refs = refs[1:1 + 3 * n_layers]
        fc_w_ref = refs[1 + 3 * n_layers]
        fc_b_ref = refs[2 + 3 * n_layers]
        seq_ref = refs[3 + 3 * n_layers]
        logits_ref = refs[4 + 3 * n_layers]
        act_sc = refs[5 + 3 * n_layers]

        layer_in = x_ref[...]                         # (T*B, I_0)
        h = None
        for layer in range(n_layers):
            wih = layer_refs[3 * layer][...]          # (I_l, 4H)  hoisted load
            whh = layer_refs[3 * layer + 1][...]      # (H, 4H)    hoisted load
            b = layer_refs[3 * layer + 2][...]        # (1, 4H)    hoisted load

            # Hoisted input projection: one matmul per layer, off the serial
            # recurrent path (includes the bias broadcast-add).
            gates_x = jnp.dot(layer_in, wih,
                              preferred_element_type=jnp.float32) + b  # (T*B, 4H)

            h = jnp.zeros((B, H), jnp.float32)
            c = jnp.zeros((B, H), jnp.float32)
            last_layer = (layer == n_layers - 1)

            for t in range(T):                        # static -> fully unrolled
                g = gates_x[t * B:(t + 1) * B, :] + jnp.dot(
                    h, whh, preferred_element_type=jnp.float32)        # (B, 4H)
                i_g = jax.nn.sigmoid(g[:, 0:H])
                f_g = jax.nn.sigmoid(g[:, H:2 * H])
                g_g = jnp.tanh(g[:, 2 * H:3 * H])
                o_g = jax.nn.sigmoid(g[:, 3 * H:4 * H])
                c = f_g * c + i_g * g_g
                h = o_g * jnp.tanh(c)
                if last_layer:
                    # Top layer: emit batch-major, time-flattened sequence.
                    seq_ref[:, t * H:(t + 1) * H] = h
                else:
                    # Lower layers: stage outputs in VMEM for the next layer.
                    act_sc[t * B:(t + 1) * B, :] = h

            if not last_layer:
                layer_in = act_sc[...]                # (T*B, H)
            # inter-layer dropout: identity in eval mode

        # Final FC on the last hidden state of the top layer (== ht[-1]).
        logits_ref[...] = (jnp.dot(h, fc_w_ref[...],
                                   preferred_element_type=jnp.float32)
                           + fc_b_ref[...])

    return kernel


# -----------------------------------------------------------------------------
# Wrapper
# -----------------------------------------------------------------------------
def lstm_model_forward(params, x, config):
    """x: (B, height, width)  ->  (sequence (B, T, H), logits (B, n_labels))."""
    H = config["hidden_size"]
    L = config["n_labels"]
    n_layers = config["n_layers"]
    B, I, T = x.shape

    # PyTorch: x.permute(0, 2, 1) -> (B, T, I), batch_first LSTM.
    # The kernel consumes it time-major and row-flattened as (T*B, I) so the
    # per-layer input projection is a single matmul.
    x_flat = jnp.transpose(x, (2, 0, 1)).reshape(T * B, I)

    args = [x_flat]
    for lp in params["lstm"]:
        args += [lp["wih"], lp["whh"], lp["b"]]
    args += [params["fc_w"], params["fc_b"]]

    kernel = _make_lstm_model_kernel(n_layers, T, B, H)
    seq_flat, logits = pl.pallas_call(
        kernel,
        out_shape=(jax.ShapeDtypeStruct((B, T * H), jnp.float32),
                   jax.ShapeDtypeStruct((B, L), jnp.float32)),
        scratch_shapes=[pltpu.VMEM((T * B, H), jnp.float32)],
    )(*args)

    sequence = seq_flat.reshape(B, T, H)              # pure reshape, no transpose
    return sequence, logits


def init_params(key, config):
    """Deterministic init mirroring PyTorch LSTM/Linear U(-k, k), k=1/sqrt(H)."""
    H = config["hidden_size"]
    n_layers = config["n_layers"]
    n_labels = config["n_labels"]
    k = 1.0 / jnp.sqrt(jnp.float32(H))

    params = {"lstm": []}
    for layer in range(n_layers):
        in_size = config["height"] if layer == 0 else H
        key, k1, k2, k3, k4 = jax.random.split(key, 5)
        wih = jax.random.uniform(k1, (in_size, 4 * H), jnp.float32, -k, k)
        whh = jax.random.uniform(k2, (H, 4 * H), jnp.float32, -k, k)
        b_ih = jax.random.uniform(k3, (4 * H,), jnp.float32, -k, k)
        b_hh = jax.random.uniform(k4, (4 * H,), jnp.float32, -k, k)
        params["lstm"].append(
            {"wih": wih, "whh": whh, "b": (b_ih + b_hh).reshape(1, 4 * H)})

    key, k5, k6 = jax.random.split(key, 3)
    params["fc_w"] = jax.random.uniform(k5, (H, n_labels), jnp.float32, -k, k)
    params["fc_b"] = jax.random.uniform(k6, (1, n_labels), jnp.float32, -k, k)
    return params


# -----------------------------------------------------------------------------
# Pure-JAX reference (correctness guard)
# -----------------------------------------------------------------------------
def _lstm_model_reference(params, x, config):
    H = config["hidden_size"]
    B, I, T = x.shape
    seq = jnp.transpose(x, (0, 2, 1))                 # (B, T, I)
    for lp in params["lstm"]:
        h = jnp.zeros((B, H), jnp.float32)
        c = jnp.zeros((B, H), jnp.float32)
        outs = []
        for t in range(T):
            g = seq[:, t, :] @ lp["wih"] + h @ lp["whh"] + lp["b"]
            i_g = jax.nn.sigmoid(g[:, 0:H])
            f_g = jax.nn.sigmoid(g[:, H:2 * H])
            g_g = jnp.tanh(g[:, 2 * H:3 * H])
            o_g = jax.nn.sigmoid(g[:, 3 * H:4 * H])
            c = f_g * c + i_g * g_g
            h = o_g * jnp.tanh(c)
            outs.append(h)
        seq = jnp.stack(outs, axis=1)                 # (B, T, H)
    logits = seq[:, -1, :] @ params["fc_w"] + params["fc_b"]
    return seq, logits


# -----------------------------------------------------------------------------
# Main
# -----------------------------------------------------------------------------
if __name__ == "__main__":
    config = {
        "height": 16,       # LSTM input_size (channel dim of NCW input)
        "hidden_size": 32,
        "n_layers": 2,
        "dropout": 0.0,
        "n_labels": 6,
    }
    B, T = 2, 12

    key = jax.random.PRNGKey(0)
    key, xkey = jax.random.split(key)
    x = jax.random.normal(xkey, (B, config["height"], T), jnp.float32)

    params = init_params(key, config)

    forward = jax.jit(functools.partial(lstm_model_forward, config=config))
    sequence, logits = forward(params, x)
    jax.block_until_ready((sequence, logits))

    assert sequence.shape == (B, T, config["hidden_size"])
    assert logits.shape == (B, config["n_labels"])

    ref_seq, ref_logits = _lstm_model_reference(params, x, config)
    assert bool(jnp.allclose(sequence, ref_seq, atol=1e-4, rtol=1e-4))
    assert bool(jnp.allclose(logits, ref_logits, atol=1e-4, rtol=1e-4))

    print("KERNEL_OK")
</pallas_src>

<mosaic_0001>
module attributes {stable_mosaic.version = 11 : i64} {
  func.func @kernel(%arg0: memref<24x16xf32, #tpu.memory_space<vmem>>, %arg1: memref<16x128xf32, #tpu.memory_space<vmem>>, %arg2: memref<32x128xf32, #tpu.memory_space<vmem>>, %arg3: memref<1x128xf32, #tpu.memory_space<vmem>>, %arg4: memref<32x128xf32, #tpu.memory_space<vmem>>, %arg5: memref<32x128xf32, #tpu.memory_space<vmem>>, %arg6: memref<1x128xf32, #tpu.memory_space<vmem>>, %arg7: memref<32x6xf32, #tpu.memory_space<vmem>>, %arg8: memref<1x6xf32, #tpu.memory_space<vmem>>, %arg9: memref<2x384xf32, #tpu.memory_space<vmem>>, %arg10: memref<2x6xf32, #tpu.memory_space<vmem>>, %arg11: memref<24x32xf32, #tpu.memory_space<vmem>>) attributes {dimension_semantics = [], scalar_prefetch = 0 : i64, scratch_operands = 1 : i64, tpu.core_type = #tpu.core_type<tc>} {
    %c0 = arith.constant 0 : index
    %c0_0 = arith.constant 0 : index
    %0 = vector.load %arg0[%c0, %c0_0] : memref<24x16xf32, #tpu.memory_space<vmem>>, vector<24x16xf32>
    %c0_1 = arith.constant 0 : index
    %c0_2 = arith.constant 0 : index
    %1 = vector.load %arg1[%c0_1, %c0_2] : memref<16x128xf32, #tpu.memory_space<vmem>>, vector<16x128xf32>
    %c0_3 = arith.constant 0 : index
    %c0_4 = arith.constant 0 : index
    %2 = vector.load %arg2[%c0_3, %c0_4] : memref<32x128xf32, #tpu.memory_space<vmem>>, vector<32x128xf32>
    %c0_5 = arith.constant 0 : index
    %c0_6 = arith.constant 0 : index
    %3 = vector.load %arg3[%c0_5, %c0_6] : memref<1x128xf32, #tpu.memory_space<vmem>>, vector<1x128xf32>
    %cst = arith.constant dense<0.000000e+00> : vector<24x128xf32>
    %4 = tpu.matmul %0, %1, %cst {dimension_numbers = #tpu.dot_dimension_numbers<[1], [0], [0], [1], [0, 0, 1, 1], [], []>} : vector<24x16xf32>, vector<16x128xf32>, vector<24x128xf32> -> vector<24x128xf32>
    %5 = vector.broadcast %3 : vector<1x128xf32> to vector<24x128xf32>
    %6 = arith.addf %4, %5 : vector<24x128xf32>
    %cst_7 = arith.constant 0.000000e+00 : f32
    %7 = vector.broadcast %cst_7 : f32 to vector<2x32xf32>
    %cst_8 = arith.constant 0.000000e+00 : f32
    %8 = vector.broadcast %cst_8 : f32 to vector<2x32xf32>
    %9 = vector.extract_strided_slice %6 {offsets = [0, 0], sizes = [2, 128], strides = [1, 1]} : vector<24x128xf32> to vector<2x128xf32>
    %cst_9 = arith.constant dense<0.000000e+00> : vector<2x128xf32>
    %10 = tpu.matmul %7, %2, %cst_9 {dimension_numbers = #tpu.dot_dimension_numbers<[1], [0], [0], [1], [0, 0, 1, 1], [], []>} : vector<2x32xf32>, vector<32x128xf32>, vector<2x128xf32> -> vector<2x128xf32>
    %11 = arith.addf %9, %10 : vector<2x128xf32>
    %12 = vector.extract_strided_slice %11 {offsets = [0, 0], sizes = [2, 32], strides = [1, 1]} : vector<2x128xf32> to vector<2x32xf32>
    %13 = arith.negf %12 : vector<2x32xf32>
    %14 = math.exp %13 : vector<2x32xf32>
    %cst_10 = arith.constant 1.000000e+00 : f32
    %15 = vector.broadcast %cst_10 : f32 to vector<2x32xf32>
    %16 = arith.addf %15, %14 : vector<2x32xf32>
    %17 = arith.divf %15, %16 : vector<2x32xf32>
    %18 = vector.extract_strided_slice %11 {offsets = [0, 32], sizes = [2, 32], strides = [1, 1]} : vector<2x128xf32> to vector<2x32xf32>
    %19 = arith.negf %18 : vector<2x32xf32>
    %20 = math.exp %19 : vector<2x32xf32>
    %cst_11 = arith.constant 1.000000e+00 : f32
    %21 = vector.broadcast %cst_11 : f32 to vector<2x32xf32>
    %22 = arith.addf %21, %20 : vector<2x32xf32>
    %23 = arith.divf %21, %22 : vector<2x32xf32>
    %24 = vector.extract_strided_slice %11 {offsets = [0, 64], sizes = [2, 32], strides = [1, 1]} : vector<2x128xf32> to vector<2x32xf32>
    %25 = math.tanh %24 : vector<2x32xf32>
    %26 = vector.extract_strided_slice %11 {offsets = [0, 96], sizes = [2, 32], strides = [1, 1]} : vector<2x128xf32> to vector<2x32xf32>
    %27 = arith.negf %26 : vector<2x32xf32>
    %28 = math.exp %27 : vector<2x32xf32>
    %cst_12 = arith.constant 1.000000e+00 : f32
    %29 = vector.broadcast %cst_12 : f32 to vector<2x32xf32>
    %30 = arith.addf %29, %28 : vector<2x32xf32>
    %31 = arith.divf %29, %30 : vector<2x32xf32>
    %32 = arith.mulf %23, %8 : vector<2x32xf32>
    %33 = arith.mulf %17, %25 : vector<2x32xf32>
    %34 = arith.addf %32, %33 : vector<2x32xf32>
    %35 = math.tanh %34 : vector<2x32xf32>
    %36 = arith.mulf %31, %35 : vector<2x32xf32>
    %c0_13 = arith.constant 0 : index
    %c0_14 = arith.constant 0 : index
    %37 = vector.load %arg11[%c0_13, %c0_14] : memref<24x32xf32, #tpu.memory_space<vmem>>, vector<2x32xf32>
    tpu.vector_store %arg11[%c0_13, %c0_14], %36 {strides = array<i32>} : memref<24x32xf32, #tpu.memory_space<vmem>>, vector<2x32xf32>,
    %38 = vector.extract_strided_slice %6 {offsets = [2, 0], sizes = [2, 128], strides = [1, 1]} : vector<24x128xf32> to vector<2x128xf32>
    %cst_15 = arith.constant dense<0.000000e+00> : vector<2x128xf32>
    %39 = tpu.matmul %36, %2, %cst_15 {dimension_numbers = #tpu.dot_dimension_numbers<[1], [0], [0], [1], [0, 0, 1, 1], [], []>} : vector<2x32xf32>, vector<32x128xf32>, vector<2x128xf32> -> vector<2x128xf32>
    %40 = arith.addf %38, %39 : vector<2x128xf32>
    %41 = vector.extract_strided_slice %40 {offsets = [0, 0], sizes = [2, 32], strides = [1, 1]} : vector<2x128xf32> to vector<2x32xf32>
    %42 = arith.negf %41 : vector<2x32xf32>
    %43 = math.exp %42 : vector<2x32xf32>
    %cst_16 = arith.constant 1.000000e+00 : f32
    %44 = vector.broadcast %cst_16 : f32 to vector<2x32xf32>
    %45 = arith.addf %44, %43 : vector<2x32xf32>
    %46 = arith.divf %44, %45 : vector<2x32xf32>
    %47 = vector.extract_strided_slice %40 {offsets = [0, 32], sizes = [2, 32], strides = [1, 1]} : vector<2x128xf32> to vector<2x32xf32>
    %48 = arith.negf %47 : vector<2x32xf32>
    %49 = math.exp %48 : vector<2x32xf32>
    %cst_17 = arith.constant 1.000000e+00 : f32
    %50 = vector.broadcast %cst_17 : f32 to vector<2x32xf32>
    %51 = arith.addf %50, %49 : vector<2x32xf32>
    %52 = arith.divf %50, %51 : vector<2x32xf32>
    %53 = vector.extract_strided_slice %40 {offsets = [0, 64], sizes = [2, 32], strides = [1, 1]} : vector<2x128xf32> to vector<2x32xf32>
    %54 = math.tanh %53 : vector<2x32xf32>
    %55 = vector.extract_strided_slice %40 {offsets = [0, 96], sizes = [2, 32], strides = [1, 1]} : vector<2x128xf32> to vector<2x32xf32>
    %56 = arith.negf %55 : vector<2x32xf32>
    %57 = math.exp %56 : vector<2x32xf32>
    %cst_18 = arith.constant 1.000000e+00 : f32
    %58 = vector.broadcast %cst_18 : f32 to vector<2x32xf32>
    %59 = arith.addf %58, %57 : vector<2x32xf32>
    %60 = arith.divf %58, %59 : vector<2x32xf32>
    %61 = arith.mulf %52, %34 : vector<2x32xf32>
    %62 = arith.mulf %46, %54 : vector<2x32xf32>
    %63 = arith.addf %61, %62 : vector<2x32xf32>
    %64 = math.tanh %63 : vector<2x32xf32>
    %65 = arith.mulf %60, %64 : vector<2x32xf32>
    %c2 = arith.constant 2 : index
    %c0_19 = arith.constant 0 : index
    %66 = vector.load %arg11[%c2, %c0_19] : memref<24x32xf32, #tpu.memory_space<vmem>>, vector<2x32xf32>
    tpu.vector_store %arg11[%c2, %c0_19], %65 {strides = array<i32>} : memref<24x32xf32, #tpu.memory_space<vmem>>, vector<2x32xf32>,
    %67 = vector.extract_strided_slice %6 {offsets = [4, 0], sizes = [2, 128], strides = [1, 1]} : vector<24x128xf32> to vector<2x128xf32>
    %cst_20 = arith.constant dense<0.000000e+00> : vector<2x128xf32>
    %68 = tpu.matmul %65, %2, %cst_20 {dimension_numbers = #tpu.dot_dimension_numbers<[1], [0], [0], [1], [0, 0, 1, 1], [], []>} : vector<2x32xf32>, vector<32x128xf32>, vector<2x128xf32> -> vector<2x128xf32>
    %69 = arith.addf %67, %68 : vector<2x128xf32>
    %70 = vector.extract_strided_slice %69 {offsets = [0, 0], sizes = [2, 32], strides = [1, 1]} : vector<2x128xf32> to vector<2x32xf32>
    %71 = arith.negf %70 : vector<2x32xf32>
    %72 = math.exp %71 : vector<2x32xf32>
    %cst_21 = arith.constant 1.000000e+00 : f32
    %73 = vector.broadcast %cst_21 : f32 to vector<2x32xf32>
    %74 = arith.addf %73, %72 : vector<2x32xf32>
    %75 = arith.divf %73, %74 : vector<2x32xf32>
    %76 = vector.extract_strided_slice %69 {offsets = [0, 32], sizes = [2, 32], strides = [1, 1]} : vector<2x128xf32> to vector<2x32xf32>
    %77 = arith.negf %76 : vector<2x32xf32>
    %78 = math.exp %77 : vector<2x32xf32>
    %cst_22 = arith.constant 1.000000e+00 : f32
    %79 = vector.broadcast %cst_22 : f32 to vector<2x32xf32>
    %80 = arith.addf %79, %78 : vector<2x32xf32>
    %81 = arith.divf %79, %80 : vector<2x32xf32>
    %82 = vector.extract_strided_slice %69 {offsets = [0, 64], sizes = [2, 32], strides = [1, 1]} : vector<2x128xf32> to vector<2x32xf32>
    %83 = math.tanh %82 : vector<2x32xf32>
    %84 = vector.extract_strided_slice %69 {offsets = [0, 96], sizes = [2, 32], strides = [1, 1]} : vector<2x128xf32> to vector<2x32xf32>
    %85 = arith.negf %84 : vector<2x32xf32>
    %86 = math.exp %85 : vector<2x32xf32>
    %cst_23 = arith.constant 1.000000e+00 : f32
    %87 = vector.broadcast %cst_23 : f32 to vector<2x32xf32>
    %88 = arith.addf %87, %86 : vector<2x32xf32>
    %89 = arith.divf %87, %88 : vector<2x32xf32>
    %90 = arith.mulf %81, %63 : vector<2x32xf32>
    %91 = arith.mulf %75, %83 : vector<2x32xf32>
    %92 = arith.addf %90, %91 : vector<2x32xf32>
    %93 = math.tanh %92 : vector<2x32xf32>
    %94 = arith.mulf %89, %93 : vector<2x32xf32>
    %c4 = arith.constant 4 : index
    %c0_24 = arith.constant 0 : index
    %95 = vector.load %arg11[%c4, %c0_24] : memref<24x32xf32, #tpu.memory_space<vmem>>, vector<2x32xf32>
    tpu.vector_store %arg11[%c4, %c0_24], %94 {strides = array<i32>} : memref<24x32xf32, #tpu.memory_space<vmem>>, vector<2x32xf32>,
    %96 = vector.extract_strided_slice %6 {offsets = [6, 0], sizes = [2, 128], strides = [1, 1]} : vector<24x128xf32> to vector<2x128xf32>
    %cst_25 = arith.constant dense<0.000000e+00> : vector<2x128xf32>
    %97 = tpu.matmul %94, %2, %cst_25 {dimension_numbers = #tpu.dot_dimension_numbers<[1], [0], [0], [1], [0, 0, 1, 1], [], []>} : vector<2x32xf32>, vector<32x128xf32>, vector<2x128xf32> -> vector<2x128xf32>
    %98 = arith.addf %96, %97 : vector<2x128xf32>
    %99 = vector.extract_strided_slice %98 {offsets = [0, 0], sizes = [2, 32], strides = [1, 1]} : vector<2x128xf32> to vector<2x32xf32>
    %100 = arith.negf %99 : vector<2x32xf32>
    %101 = math.exp %100 : vector<2x32xf32>
    %cst_26 = arith.constant 1.000000e+00 : f32
    %102 = vector.broadcast %cst_26 : f32 to vector<2x32xf32>
    %103 = arith.addf %102, %101 : vector<2x32xf32>
    %104 = arith.divf %102, %103 : vector<2x32xf32>
    %105 = vector.extract_strided_slice %98 {offsets = [0, 32], sizes = [2, 32], strides = [1, 1]} : vector<2x128xf32> to vector<2x32xf32>
    %106 = arith.negf %105 : vector<2x32xf32>
    %107 = math.exp %106 : vector<2x32xf32>
    %cst_27 = arith.constant 1.000000e+00 : f32
    %108 = vector.broadcast %cst_27 : f32 to vector<2x32xf32>
    %109 = arith.addf %108, %107 : vector<2x32xf32>
    %110 = arith.divf %108, %109 : vector<2x32xf32>
    %111 = vector.extract_strided_slice %98 {offsets = [0, 64], sizes = [2, 32], strides = [1, 1]} : vector<2x128xf32> to vector<2x32xf32>
    %112 = math.tanh %111 : vector<2x32xf32>
    %113 = vector.extract_strided_slice %98 {offsets = [0, 96], sizes = [2, 32], strides = [1, 1]} : vector<2x128xf32> to vector<2x32xf32>
    %114 = arith.negf %113 : vector<2x32xf32>
    %115 = math.exp %114 : vector<2x32xf32>
    %cst_28 = arith.constant 1.000000e+00 : f32
    %116 = vector.broadcast %cst_28 : f32 to vector<2x32xf32>
    %117 = arith.addf %116, %115 : vector<2x32xf32>
    %118 = arith.divf %116, %117 : vector<2x32xf32>
    %119 = arith.mulf %110, %92 : vector<2x32xf32>
    %120 = arith.mulf %104, %112 : vector<2x32xf32>
    %121 = arith.addf %119, %120 : vector<2x32xf32>
    %122 = math.tanh %121 : vector<2x32xf32>
    %123 = arith.mulf %118, %122 : vector<2x32xf32>
    %c6 = arith.constant 6 : index
    %c0_29 = arith.constant 0 : index
    %124 = vector.load %arg11[%c6, %c0_29] : memref<24x32xf32, #tpu.memory_space<vmem>>, vector<2x32xf32>
    tpu.vector_store %arg11[%c6, %c0_29], %123 {strides = array<i32>} : memref<24x32xf32, #tpu.memory_space<vmem>>, vector<2x32xf32>,
    %125 = vector.extract_strided_slice %6 {offsets = [8, 0], sizes = [2, 128], strides = [1, 1]} : vector<24x128xf32> to vector<2x128xf32>
    %cst_30 = arith.constant dense<0.000000e+00> : vector<2x128xf32>
    %126 = tpu.matmul %123, %2, %cst_30 {dimension_numbers = #tpu.dot_dimension_numbers<[1], [0], [0], [1], [0, 0, 1, 1], [], []>} : vector<2x32xf32>, vector<32x128xf32>, vector<2x128xf32> -> vector<2x128xf32>
    %127 = arith.addf %125, %126 : vector<2x128xf32>
    %128 = vector.extract_strided_slice %127 {offsets = [0, 0], sizes = [2, 32], strides = [1, 1]} : vector<2x128xf32> to vector<2x32xf32>
    %129 = arith.negf %128 : vector<2x32xf32>
    %130 = math.exp %129 : vector<2x32xf32>
    %cst_31 = arith.constant 1.000000e+00 : f32
    %131 = vector.broadcast %cst_31 : f32 to vector<2x32xf32>
    %132 = arith.addf %131, %130 : vector<2x32xf32>
    %133 = arith.divf %131, %132 : vector<2x32xf32>
    %134 = vector.extract_strided_slice %127 {offsets = [0, 32], sizes = [2, 32], strides = [1, 1]} : vector<2x128xf32> to vector<2x32xf32>
    %135 = arith.negf %134 : vector<2x32xf32>
    %136 = math.exp %135 : vector<2x32xf32>
    %cst_32 = arith.constant 1.000000e+00 : f32
    %137 = vector.broadcast %cst_32 : f32 to vector<2x32xf32>
    %138 = arith.addf %137, %136 : vector<2x32xf32>
    %139 = arith.divf %137, %138 : vector<2x32xf32>
    %140 = vector.extract_strided_slice %127 {offsets = [0, 64], sizes = [2, 32], strides = [1, 1]} : vector<2x128xf32> to vector<2x32xf32>
    %141 = math.tanh %140 : vector<2x32xf32>
    %142 = vector.extract_strided_slice %127 {offsets = [0, 96], sizes = [2, 32], strides = [1, 1]} : vector<2x128xf32> to vector<2x32xf32>
    %143 = arith.negf %142 : vector<2x32xf32>
    %144 = math.exp %143 : vector<2x32xf32>
    %cst_33 = arith.constant 1.000000e+00 : f32
    %145 = vector.broadcast %cst_33 : f32 to vector<2x32xf32>
    %146 = arith.addf %145, %144 : vector<2x32xf32>
    %147 = arith.divf %145, %146 : vector<2x32xf32>
    %148 = arith.mulf %139, %121 : vector<2x32xf32>
    %149 = arith.mulf %133, %141 : vector<2x32xf32>
    %150 = arith.addf %148, %149 : vector<2x32xf32>
    %151 = math.tanh %150 : vector<2x32xf32>
    %152 = arith.mulf %147, %151 : vector<2x32xf32>
    %c8 = arith.constant 8 : index
    %c0_34 = arith.constant 0 : index
    %153 = vector.load %arg11[%c8, %c0_34] : memref<24x32xf32, #tpu.memory_space<vmem>>, vector<2x32xf32>
    tpu.vector_store %arg11[%c8, %c0_34], %152 {strides = array<i32>} : memref<24x32xf32, #tpu.memory_space<vmem>>, vector<2x32xf32>,
    %154 = vector.extract_strided_slice %6 {offsets = [10, 0], sizes = [2, 128], strides = [1, 1]} : vector<24x128xf32> to vector<2x128xf32>
    %cst_35 = arith.constant dense<0.000000e+00> : vector<2x128xf32>
    %155 = tpu.matmul %152, %2, %cst_35 {dimension_numbers = #tpu.dot_dimension_numbers<[1], [0], [0], [1], [0, 0, 1, 1], [], []>} : vector<2x32xf32>, vector<32x128xf32>, vector<2x128xf32> -> vector<2x128xf32>
    %156 = arith.addf %154, %155 : vector<2x128xf32>
    %157 = vector.extract_strided_slice %156 {offsets = [0, 0], sizes = [2, 32], strides = [1, 1]} : vector<2x128xf32> to vector<2x32xf32>
    %158 = arith.negf %157 : vector<2x32xf32>
    %159 = math.exp %158 : vector<2x32xf32>
    %cst_36 = arith.constant 1.000000e+00 : f32
    %160 = vector.broadcast %cst_36 : f32 to vector<2x32xf32>
    %161 = arith.addf %160, %159 : vector<2x32xf32>
    %162 = arith.divf %160, %161 : vector<2x32xf32>
    %163 = vector.extract_strided_slice %156 {offsets = [0, 32], sizes = [2, 32], strides = [1, 1]} : vector<2x128xf32> to vector<2x32xf32>
    %164 = arith.negf %163 : vector<2x32xf32>
    %165 = math.exp %164 : vector<2x32xf32>
    %cst_37 = arith.constant 1.000000e+00 : f32
    %166 = vector.broadcast %cst_37 : f32 to vector<2x32xf32>
    %167 = arith.addf %166, %165 : vector<2x32xf32>
    %168 = arith.divf %166, %167 : vector<2x32xf32>
    %169 = vector.extract_strided_slice %156 {offsets = [0, 64], sizes = [2, 32], strides = [1, 1]} : vector<2x128xf32> to vector<2x32xf32>
    %170 = math.tanh %169 : vector<2x32xf32>
    %171 = vector.extract_strided_slice %156 {offsets = [0, 96], sizes = [2, 32], strides = [1, 1]} : vector<2x128xf32> to vector<2x32xf32>
    %172 = arith.negf %171 : vector<2x32xf32>
    %173 = math.exp %172 : vector<2x32xf32>
    %cst_38 = arith.constant 1.000000e+00 : f32
    %174 = vector.broadcast %cst_38 : f32 to vector<2x32xf32>
    %175 = arith.addf %174, %173 : vector<2x32xf32>
    %176 = arith.divf %174, %175 : vector<2x32xf32>
    %177 = arith.mulf %168, %150 : vector<2x32xf32>
    %178 = arith.mulf %162, %170 : vector<2x32xf32>
    %179 = arith.addf %177, %178 : vector<2x32xf32>
    %180 = math.tanh %179 : vector<2x32xf32>
    %181 = arith.mulf %176, %180 : vector<2x32xf32>
    %c10 = arith.constant 10 : index
    %c0_39 = arith.constant 0 : index
    %182 = vector.load %arg11[%c10, %c0_39] : memref<24x32xf32, #tpu.memory_space<vmem>>, vector<2x32xf32>
    tpu.vector_store %arg11[%c10, %c0_39], %181 {strides = array<i32>} : memref<24x32xf32, #tpu.memory_space<vmem>>, vector<2x32xf32>,
    %183 = vector.extract_strided_slice %6 {offsets = [12, 0], sizes = [2, 128], strides = [1, 1]} : vector<24x128xf32> to vector<2x128xf32>
    %cst_40 = arith.constant dense<0.000000e+00> : vector<2x128xf32>
    %184 = tpu.matmul %181, %2, %cst_40 {dimension_numbers = #tpu.dot_dimension_numbers<[1], [0], [0], [1], [0, 0, 1, 1], [], []>} : vector<2x32xf32>, vector<32x128xf32>, vector<2x128xf32> -> vector<2x128xf32>
    %185 = arith.addf %183, %184 : vector<2x128xf32>
    %186 = vector.extract_strided_slice %185 {offsets = [0, 0], sizes = [2, 32], strides = [1, 1]} : vector<2x128xf32> to vector<2x32xf32>
    %187 = arith.negf %186 : vector<2x32xf32>
    %188 = math.exp %187 : vector<2x32xf32>
    %cst_41 = arith.constant 1.000000e+00 : f32
    %189 = vector.broadcast %cst_41 : f32 to vector<2x32xf32>
    %190 = arith.addf %189, %188 : vector<2x32xf32>
    %191 = arith.divf %189, %190 : vector<2x32xf32>
    %192 = vector.extract_strided_slice %185 {offsets = [0, 32], sizes = [2, 32], strides = [1, 1]} : vector<2x128xf32> to vector<2x32xf32>
    %193 = arith.negf %192 : vector<2x32xf32>
    %194 = math.exp %193 : vector<2x32xf32>
    %cst_42 = arith.constant 1.000000e+00 : f32
    %195 = vector.broadcast %cst_42 : f32 to vector<2x32xf32>
    %196 = arith.addf %195, %194 : vector<2x32xf32>
    %197 = arith.divf %195, %196 : vector<2x32xf32>
    %198 = vector.extract_strided_slice %185 {offsets = [0, 64], sizes = [2, 32], strides = [1, 1]} : vector<2x128xf32> to vector<2x32xf32>
    %199 = math.tanh %198 : vector<2x32xf32>
    %200 = vector.extract_strided_slice %185 {offsets = [0, 96], sizes = [2, 32], strides = [1, 1]} : vector<2x128xf32> to vector<2x32xf32>
    %201 = arith.negf %200 : vector<2x32xf32>
    %202 = math.exp %201 : vector<2x32xf32>
    %cst_43 = arith.constant 1.000000e+00 : f32
    %203 = vector.broadcast %cst_43 : f32 to vector<2x32xf32>
    %204 = arith.addf %203, %202 : vector<2x32xf32>
    %205 = arith.divf %203, %204 : vector<2x32xf32>
    %206 = arith.mulf %197, %179 : vector<2x32xf32>
    %207 = arith.mulf %191, %199 : vector<2x32xf32>
    %208 = arith.addf %206, %207 : vector<2x32xf32>
    %209 = math.tanh %208 : vector<2x32xf32>
    %210 = arith.mulf %205, %209 : vector<2x32xf32>
    %c12 = arith.constant 12 : index
    %c0_44 = arith.constant 0 : index
    %211 = vector.load %arg11[%c12, %c0_44] : memref<24x32xf32, #tpu.memory_space<vmem>>, vector<2x32xf32>
    tpu.vector_store %arg11[%c12, %c0_44], %210 {strides = array<i32>} : memref<24x32xf32, #tpu.memory_space<vmem>>, vector<2x32xf32>,
    %212 = vector.extract_strided_slice %6 {offsets = [14, 0], sizes = [2, 128], strides = [1, 1]} : vector<24x128xf32> to vector<2x128xf32>
    %cst_45 = arith.constant dense<0.000000e+00> : vector<2x128xf32>
    %213 = tpu.matmul %210, %2, %cst_45 {dimension_numbers = #tpu.dot_dimension_numbers<[1], [0], [0], [1], [0, 0, 1, 1], [], []>} : vector<2x32xf32>, vector<32x128xf32>, vector<2x128xf32> -> vector<2x128xf32>
    %214 = arith.addf %212, %213 : vector<2x128xf32>
    %215 = vector.extract_strided_slice %214 {offsets = [0, 0], sizes = [2, 32], strides = [1, 1]} : vector<2x128xf32> to vector<2x32xf32>
    %216 = arith.negf %215 : vector<2x32xf32>
    %217 = math.exp %216 : vector<2x32xf32>
    %cst_46 = arith.constant 1.000000e+00 : f32
    %218 = vector.broadcast %cst_46 : f32 to vector<2x32xf32>
    %219 = arith.addf %218, %217 : vector<2x32xf32>
    %220 = arith.divf %218, %219 : vector<2x32xf32>
    %221 = vector.extract_strided_slice %214 {offsets = [0, 32], sizes = [2, 32], strides = [1, 1]} : vector<2x128xf32> to vector<2x32xf32>
    %222 = arith.negf %221 : vector<2x32xf32>
    %223 = math.exp %222 : vector<2x32xf32>
    %cst_47 = arith.constant 1.000000e+00 : f32
    %224 = vector.broadcast %cst_47 : f32 to vector<2x32xf32>
    %225 = arith.addf %224, %223 : vector<2x32xf32>
    %226 = arith.divf %224, %225 : vector<2x32xf32>
    %227 = vector.extract_strided_slice %214 {offsets = [0, 64], sizes = [2, 32], strides = [1, 1]} : vector<2x128xf32> to vector<2x32xf32>
    %228 = math.tanh %227 : vector<2x32xf32>
    %229 = vector.extract_strided_slice %214 {offsets = [0, 96], sizes = [2, 32], strides = [1, 1]} : vector<2x128xf32> to vector<2x32xf32>
    %230 = arith.negf %229 : vector<2x32xf32>
    %231 = math.exp %230 : vector<2x32xf32>
    %cst_48 = arith.constant 1.000000e+00 : f32
    %232 = vector.broadcast %cst_48 : f32 to vector<2x32xf32>
    %233 = arith.addf %232, %231 : vector<2x32xf32>
    %234 = arith.divf %232, %233 : vector<2x32xf32>
    %235 = arith.mulf %226, %208 : vector<2x32xf32>
    %236 = arith.mulf %220, %228 : vector<2x32xf32>
    %237 = arith.addf %235, %236 : vector<2x32xf32>
    %238 = math.tanh %237 : vector<2x32xf32>
    %239 = arith.mulf %234, %238 : vector<2x32xf32>
    %c14 = arith.constant 14 : index
    %c0_49 = arith.constant 0 : index
    %240 = vector.load %arg11[%c14, %c0_49] : memref<24x32xf32, #tpu.memory_space<vmem>>, vector<2x32xf32>
    tpu.vector_store %arg11[%c14, %c0_49], %239 {strides = array<i32>} : memref<24x32xf32, #tpu.memory_space<vmem>>, vector<2x32xf32>,
    %241 = vector.extract_strided_slice %6 {offsets = [16, 0], sizes = [2, 128], strides = [1, 1]} : vector<24x128xf32> to vector<2x128xf32>
    %cst_50 = arith.constant dense<0.000000e+00> : vector<2x128xf32>
    %242 = tpu.matmul %239, %2, %cst_50 {dimension_numbers = #tpu.dot_dimension_numbers<[1], [0], [0], [1], [0, 0, 1, 1], [], []>} : vector<2x32xf32>, vector<32x128xf32>, vector<2x128xf32> -> vector<2x128xf32>
    %243 = arith.addf %241, %242 : vector<2x128xf32>
    %244 = vector.extract_strided_slice %243 {offsets = [0, 0], sizes = [2, 32], strides = [1, 1]} : vector<2x128xf32> to vector<2x32xf32>
    %245 = arith.negf %244 : vector<2x32xf32>
    %246 = math.exp %245 : vector<2x32xf32>
    %cst_51 = arith.constant 1.000000e+00 : f32
    %247 = vector.broadcast %cst_51 : f32 to vector<2x32xf32>
    %248 = arith.addf %247, %246 : vector<2x32xf32>
    %249 = arith.divf %247, %248 : vector<2x32xf32>
    %250 = vector.extract_strided_slice %243 {offsets = [0, 32], sizes = [2, 32], strides = [1, 1]} : vector<2x128xf32> to vector<2x32xf32>
    %251 = arith.negf %250 : vector<2x32xf32>
    %252 = math.exp %251 : vector<2x32xf32>
    %cst_52 = arith.constant 1.000000e+00 : f32
    %253 = vector.broadcast %cst_52 : f32 to vector<2x32xf32>
    %254 = arith.addf %253, %252 : vector<2x32xf32>
    %255 = arith.divf %253, %254 : vector<2x32xf32>
    %256 = vector.extract_strided_slice %243 {offsets = [0, 64], sizes = [2, 32], strides = [1, 1]} : vector<2x128xf32> to vector<2x32xf32>
    %257 = math.tanh %256 : vector<2x32xf32>
    %258 = vector.extract_strided_slice %243 {offsets = [0, 96], sizes = [2, 32], strides = [1, 1]} : vector<2x128xf32> to vector<2x32xf32>
    %259 = arith.negf %258 : vector<2x32xf32>
    %260 = math.exp %259 : vector<2x32xf32>
    %cst_53 = arith.constant 1.000000e+00 : f32
    %261 = vector.broadcast %cst_53 : f32 to vector<2x32xf32>
    %262 = arith.addf %261, %260 : vector<2x32xf32>
    %263 = arith.divf %261, %262 : vector<2x32xf32>
    %264 = arith.mulf %255, %237 : vector<2x32xf32>
    %265 = arith.mulf %249, %257 : vector<2x32xf32>
    %266 = arith.addf %264, %265 : vector<2x32xf32>
    %267 = math.tanh %266 : vector<2x32xf32>
    %268 = arith.mulf %263, %267 : vector<2x32xf32>
    %c16 = arith.constant 16 : index
    %c0_54 = arith.constant 0 : index
    %269 = vector.load %arg11[%c16, %c0_54] : memref<24x32xf32, #tpu.memory_space<vmem>>, vector<2x32xf32>
    tpu.vector_store %arg11[%c16, %c0_54], %268 {strides = array<i32>} : memref<24x32xf32, #tpu.memory_space<vmem>>, vector<2x32xf32>,
    %270 = vector.extract_strided_slice %6 {offsets = [18, 0], sizes = [2, 128], strides = [1, 1]} : vector<24x128xf32> to vector<2x128xf32>
    %cst_55 = arith.constant dense<0.000000e+00> : vector<2x128xf32>
    %271 = tpu.matmul %268, %2, %cst_55 {dimension_numbers = #tpu.dot_dimension_numbers<[1], [0], [0], [1], [0, 0, 1, 1], [], []>} : vector<2x32xf32>, vector<32x128xf32>, vector<2x128xf32> -> vector<2x128xf32>
    %272 = arith.addf %270, %271 : vector<2x128xf32>
    %273 = vector.extract_strided_slice %272 {offsets = [0, 0], sizes = [2, 32], strides = [1, 1]} : vector<2x128xf32> to vector<2x32xf32>
    %274 = arith.negf %273 : vector<2x32xf32>
    %275 = math.exp %274 : vector<2x32xf32>
    %cst_56 = arith.constant 1.000000e+00 : f32
    %276 = vector.broadcast %cst_56 : f32 to vector<2x32xf32>
    %277 = arith.addf %276, %275 : vector<2x32xf32>
    %278 = arith.divf %276, %277 : vector<2x32xf32>
    %279 = vector.extract_strided_slice %272 {offsets = [0, 32], sizes = [2, 32], strides = [1, 1]} : vector<2x128xf32> to vector<2x32xf32>
    %280 = arith.negf %279 : vector<2x32xf32>
    %281 = math.exp %280 : vector<2x32xf32>
    %cst_57 = arith.constant 1.000000e+00 : f32
    %282 = vector.broadcast %cst_57 : f32 to vector<2x32xf32>
    %283 = arith.addf %282, %281 : vector<2x32xf32>
    %284 = arith.divf %282, %283 : vector<2x32xf32>
    %285 = vector.extract_strided_slice %272 {offsets = [0, 64], sizes = [2, 32], strides = [1, 1]} : vector<2x128xf32> to vector<2x32xf32>
    %286 = math.tanh %285 : vector<2x32xf32>
    %287 = vector.extract_strided_slice %272 {offsets = [0, 96], sizes = [2, 32], strides = [1, 1]} : vector<2x128xf32> to vector<2x32xf32>
    %288 = arith.negf %287 : vector<2x32xf32>
    %289 = math.exp %288 : vector<2x32xf32>
    %cst_58 = arith.constant 1.000000e+00 : f32
    %290 = vector.broadcast %cst_58 : f32 to vector<2x32xf32>
    %291 = arith.addf %290, %289 : vector<2x32xf32>
    %292 = arith.divf %290, %291 : vector<2x32xf32>
    %293 = arith.mulf %284, %266 : vector<2x32xf32>
    %294 = arith.mulf %278, %286 : vector<2x32xf32>
    %295 = arith.addf %293, %294 : vector<2x32xf32>
    %296 = math.tanh %295 : vector<2x32xf32>
    %297 = arith.mulf %292, %296 : vector<2x32xf32>
    %c18 = arith.constant 18 : index
    %c0_59 = arith.constant 0 : index
    %298 = vector.load %arg11[%c18, %c0_59] : memref<24x32xf32, #tpu.memory_space<vmem>>, vector<2x32xf32>
    tpu.vector_store %arg11[%c18, %c0_59], %297 {strides = array<i32>} : memref<24x32xf32, #tpu.memory_space<vmem>>, vector<2x32xf32>,
    %299 = vector.extract_strided_slice %6 {offsets = [20, 0], sizes = [2, 128], strides = [1, 1]} : vector<24x128xf32> to vector<2x128xf32>
    %cst_60 = arith.constant dense<0.000000e+00> : vector<2x128xf32>
    %300 = tpu.matmul %297, %2, %cst_60 {dimension_numbers = #tpu.dot_dimension_numbers<[1], [0], [0], [1], [0, 0, 1, 1], [], []>} : vector<2x32xf32>, vector<32x128xf32>, vector<2x128xf32> -> vector<2x128xf32>
    %301 = arith.addf %299, %300 : vector<2x128xf32>
    %302 = vector.extract_strided_slice %301 {offsets = [0, 0], sizes = [2, 32], strides = [1, 1]} : vector<2x128xf32> to vector<2x32xf32>
    %303 = arith.negf %302 : vector<2x32xf32>
    %304 = math.exp %303 : vector<2x32xf32>
    %cst_61 = arith.constant 1.000000e+00 : f32
    %305 = vector.broadcast %cst_61 : f32 to vector<2x32xf32>
    %306 = arith.addf %305, %304 : vector<2x32xf32>
    %307 = arith.divf %305, %306 : vector<2x32xf32>
    %308 = vector.extract_strided_slice %301 {offsets = [0, 32], sizes = [2, 32], strides = [1, 1]} : vector<2x128xf32> to vector<2x32xf32>
    %309 = arith.negf %308 : vector<2x32xf32>
    %310 = math.exp %309 : vector<2x32xf32>
    %cst_62 = arith.constant 1.000000e+00 : f32
    %311 = vector.broadcast %cst_62 : f32 to vector<2x32xf32>
    %312 = arith.addf %311, %310 : vector<2x32xf32>
    %313 = arith.divf %311, %312 : vector<2x32xf32>
    %314 = vector.extract_strided_slice %301 {offsets = [0, 64], sizes = [2, 32], strides = [1, 1]} : vector<2x128xf32> to vector<2x32xf32>
    %315 = math.tanh %314 : vector<2x32xf32>
    %316 = vector.extract_strided_slice %301 {offsets = [0, 96], sizes = [2, 32], strides = [1, 1]} : vector<2x128xf32> to vector<2x32xf32>
    %317 = arith.negf %316 : vector<2x32xf32>
    %318 = math.exp %317 : vector<2x32xf32>
    %cst_63 = arith.constant 1.000000e+00 : f32
    %319 = vector.broadcast %cst_63 : f32 to vector<2x32xf32>
    %320 = arith.addf %319, %318 : vector<2x32xf32>
    %321 = arith.divf %319, %320 : vector<2x32xf32>
    %322 = arith.mulf %313, %295 : vector<2x32xf32>
    %323 = arith.mulf %307, %315 : vector<2x32xf32>
    %324 = arith.addf %322, %323 : vector<2x32xf32>
    %325 = math.tanh %324 : vector<2x32xf32>
    %326 = arith.mulf %321, %325 : vector<2x32xf32>
    %c20 = arith.constant 20 : index
    %c0_64 = arith.constant 0 : index
    %327 = vector.load %arg11[%c20, %c0_64] : memref<24x32xf32, #tpu.memory_space<vmem>>, vector<2x32xf32>
    tpu.vector_store %arg11[%c20, %c0_64], %326 {strides = array<i32>} : memref<24x32xf32, #tpu.memory_space<vmem>>, vector<2x32xf32>,
    %328 = vector.extract_strided_slice %6 {offsets = [22, 0], sizes = [2, 128], strides = [1, 1]} : vector<24x128xf32> to vector<2x128xf32>
    %cst_65 = arith.constant dense<0.000000e+00> : vector<2x128xf32>
    %329 = tpu.matmul %326, %2, %cst_65 {dimension_numbers = #tpu.dot_dimension_numbers<[1], [0], [0], [1], [0, 0, 1, 1], [], []>} : vector<2x32xf32>, vector<32x128xf32>, vector<2x128xf32> -> vector<2x128xf32>
    %330 = arith.addf %328, %329 : vector<2x128xf32>
    %331 = vector.extract_strided_slice %330 {offsets = [0, 0], sizes = [2, 32], strides = [1, 1]} : vector<2x128xf32> to vector<2x32xf32>
    %332 = arith.negf %331 : vector<2x32xf32>
    %333 = math.exp %332 : vector<2x32xf32>
    %cst_66 = arith.constant 1.000000e+00 : f32
    %334 = vector.broadcast %cst_66 : f32 to vector<2x32xf32>
    %335 = arith.addf %334, %333 : vector<2x32xf32>
    %336 = arith.divf %334, %335 : vector<2x32xf32>
    %337 = vector.extract_strided_slice %330 {offsets = [0, 32], sizes = [2, 32], strides = [1, 1]} : vector<2x128xf32> to vector<2x32xf32>
    %338 = arith.negf %337 : vector<2x32xf32>
    %339 = math.exp %338 : vector<2x32xf32>
    %cst_67 = arith.constant 1.000000e+00 : f32
    %340 = vector.broadcast %cst_67 : f32 to vector<2x32xf32>
    %341 = arith.addf %340, %339 : vector<2x32xf32>
    %342 = arith.divf %340, %341 : vector<2x32xf32>
    %343 = vector.extract_strided_slice %330 {offsets = [0, 64], sizes = [2, 32], strides = [1, 1]} : vector<2x128xf32> to vector<2x32xf32>
    %344 = math.tanh %343 : vector<2x32xf32>
    %345 = vector.extract_strided_slice %330 {offsets = [0, 96], sizes = [2, 32], strides = [1, 1]} : vector<2x128xf32> to vector<2x32xf32>
    %346 = arith.negf %345 : vector<2x32xf32>
    %347 = math.exp %346 : vector<2x32xf32>
    %cst_68 = arith.constant 1.000000e+00 : f32
    %348 = vector.broadcast %cst_68 : f32 to vector<2x32xf32>
    %349 = arith.addf %348, %347 : vector<2x32xf32>
    %350 = arith.divf %348, %349 : vector<2x32xf32>
    %351 = arith.mulf %342, %324 : vector<2x32xf32>
    %352 = arith.mulf %336, %344 : vector<2x32xf32>
    %353 = arith.addf %351, %352 : vector<2x32xf32>
    %354 = math.tanh %353 : vector<2x32xf32>
    %355 = arith.mulf %350, %354 : vector<2x32xf32>
    %c22 = arith.constant 22 : index
    %c0_69 = arith.constant 0 : index
    %356 = vector.load %arg11[%c22, %c0_69] : memref<24x32xf32, #tpu.memory_space<vmem>>, vector<2x32xf32>
    tpu.vector_store %arg11[%c22, %c0_69], %355 {strides = array<i32>} : memref<24x32xf32, #tpu.memory_space<vmem>>, vector<2x32xf32>,
    %c0_70 = arith.constant 0 : index
    %c0_71 = arith.constant 0 : index
    %357 = vector.load %arg11[%c0_70, %c0_71] : memref<24x32xf32, #tpu.memory_space<vmem>>, vector<24x32xf32>
    %c0_72 = arith.constant 0 : index
    %c0_73 = arith.constant 0 : index
    %358 = vector.load %arg4[%c0_72, %c0_73] : memref<32x128xf32, #tpu.memory_space<vmem>>, vector<32x128xf32>
    %c0_74 = arith.constant 0 : index
    %c0_75 = arith.constant 0 : index
    %359 = vector.load %arg5[%c0_74, %c0_75] : memref<32x128xf32, #tpu.memory_space<vmem>>, vector<32x128xf32>
    %c0_76 = arith.constant 0 : index
    %c0_77 = arith.constant 0 : index
    %360 = vector.load %arg6[%c0_76, %c0_77] : memref<1x128xf32, #tpu.memory_space<vmem>>, vector<1x128xf32>
    %cst_78 = arith.constant dense<0.000000e+00> : vector<24x128xf32>
    %361 = tpu.matmul %357, %358, %cst_78 {dimension_numbers = #tpu.dot_dimension_numbers<[1], [0], [0], [1], [0, 0, 1, 1], [], []>} : vector<24x32xf32>, vector<32x128xf32>, vector<24x128xf32> -> vector<24x128xf32>
    %362 = vector.broadcast %360 : vector<1x128xf32> to vector<24x128xf32>
    %363 = arith.addf %361, %362 : vector<24x128xf32>
    %cst_79 = arith.constant 0.000000e+00 : f32
    %364 = vector.broadcast %cst_79 : f32 to vector<2x32xf32>
    %cst_80 = arith.constant 0.000000e+00 : f32
    %365 = vector.broadcast %cst_80 : f32 to vector<2x32xf32>
    %366 = vector.extract_strided_slice %363 {offsets = [0, 0], sizes = [2, 128], strides = [1, 1]} : vector<24x128xf32> to vector<2x128xf32>
    %cst_81 = arith.constant dense<0.000000e+00> : vector<2x128xf32>
    %367 = tpu.matmul %364, %359, %cst_81 {dimension_numbers = #tpu.dot_dimension_numbers<[1], [0], [0], [1], [0, 0, 1, 1], [], []>} : vector<2x32xf32>, vector<32x128xf32>, vector<2x128xf32> -> vector<2x128xf32>
    %368 = arith.addf %366, %367 : vector<2x128xf32>
    %369 = vector.extract_strided_slice %368 {offsets = [0, 0], sizes = [2, 32], strides = [1, 1]} : vector<2x128xf32> to vector<2x32xf32>
    %370 = arith.negf %369 : vector<2x32xf32>
    %371 = math.exp %370 : vector<2x32xf32>
    %cst_82 = arith.constant 1.000000e+00 : f32
    %372 = vector.broadcast %cst_82 : f32 to vector<2x32xf32>
    %373 = arith.addf %372, %371 : vector<2x32xf32>
    %374 = arith.divf %372, %373 : vector<2x32xf32>
    %375 = vector.extract_strided_slice %368 {offsets = [0, 32], sizes = [2, 32], strides = [1, 1]} : vector<2x128xf32> to vector<2x32xf32>
    %376 = arith.negf %375 : vector<2x32xf32>
    %377 = math.exp %376 : vector<2x32xf32>
    %cst_83 = arith.constant 1.000000e+00 : f32
    %378 = vector.broadcast %cst_83 : f32 to vector<2x32xf32>
    %379 = arith.addf %378, %377 : vector<2x32xf32>
    %380 = arith.divf %378, %379 : vector<2x32xf32>
    %381 = vector.extract_strided_slice %368 {offsets = [0, 64], sizes = [2, 32], strides = [1, 1]} : vector<2x128xf32> to vector<2x32xf32>
    %382 = math.tanh %381 : vector<2x32xf32>
    %383 = vector.extract_strided_slice %368 {offsets = [0, 96], sizes = [2, 32], strides = [1, 1]} : vector<2x128xf32> to vector<2x32xf32>
    %384 = arith.negf %383 : vector<2x32xf32>
    %385 = math.exp %384 : vector<2x32xf32>
    %cst_84 = arith.constant 1.000000e+00 : f32
    %386 = vector.broadcast %cst_84 : f32 to vector<2x32xf32>
    %387 = arith.addf %386, %385 : vector<2x32xf32>
    %388 = arith.divf %386, %387 : vector<2x32xf32>
    %389 = arith.mulf %380, %365 : vector<2x32xf32>
    %390 = arith.mulf %374, %382 : vector<2x32xf32>
    %391 = arith.addf %389, %390 : vector<2x32xf32>
    %392 = math.tanh %391 : vector<2x32xf32>
    %393 = arith.mulf %388, %392 : vector<2x32xf32>
    %c0_85 = arith.constant 0 : index
    %c0_86 = arith.constant 0 : index
    %394 = vector.load %arg9[%c0_85, %c0_86] : memref<2x384xf32, #tpu.memory_space<vmem>>, vector<2x32xf32>
    tpu.vector_store %arg9[%c0_85, %c0_86], %393 {strides = array<i32>} : memref<2x384xf32, #tpu.memory_space<vmem>>, vector<2x32xf32>,
    %395 = vector.extract_strided_slice %363 {offsets = [2, 0], sizes = [2, 128], strides = [1, 1]} : vector<24x128xf32> to vector<2x128xf32>
    %cst_87 = arith.constant dense<0.000000e+00> : vector<2x128xf32>
    %396 = tpu.matmul %393, %359, %cst_87 {dimension_numbers = #tpu.dot_dimension_numbers<[1], [0], [0], [1], [0, 0, 1, 1], [], []>} : vector<2x32xf32>, vector<32x128xf32>, vector<2x128xf32> -> vector<2x128xf32>
    %397 = arith.addf %395, %396 : vector<2x128xf32>
    %398 = vector.extract_strided_slice %397 {offsets = [0, 0], sizes = [2, 32], strides = [1, 1]} : vector<2x128xf32> to vector<2x32xf32>
    %399 = arith.negf %398 : vector<2x32xf32>
    %400 = math.exp %399 : vector<2x32xf32>
    %cst_88 = arith.constant 1.000000e+00 : f32
    %401 = vector.broadcast %cst_88 : f32 to vector<2x32xf32>
    %402 = arith.addf %401, %400 : vector<2x32xf32>
    %403 = arith.divf %401, %402 : vector<2x32xf32>
    %404 = vector.extract_strided_slice %397 {offsets = [0, 32], sizes = [2, 32], strides = [1, 1]} : vector<2x128xf32> to vector<2x32xf32>
    %405 = arith.negf %404 : vector<2x32xf32>
    %406 = math.exp %405 : vector<2x32xf32>
    %cst_89 = arith.constant 1.000000e+00 : f32
    %407 = vector.broadcast %cst_89 : f32 to vector<2x32xf32>
    %408 = arith.addf %407, %406 : vector<2x32xf32>
    %409 = arith.divf %407, %408 : vector<2x32xf32>
    %410 = vector.extract_strided_slice %397 {offsets = [0, 64], sizes = [2, 32], strides = [1, 1]} : vector<2x128xf32> to vector<2x32xf32>
    %411 = math.tanh %410 : vector<2x32xf32>
    %412 = vector.extract_strided_slice %397 {offsets = [0, 96], sizes = [2, 32], strides = [1, 1]} : vector<2x128xf32> to vector<2x32xf32>
    %413 = arith.negf %412 : vector<2x32xf32>
    %414 = math.exp %413 : vector<2x32xf32>
    %cst_90 = arith.constant 1.000000e+00 : f32
    %415 = vector.broadcast %cst_90 : f32 to vector<2x32xf32>
    %416 = arith.addf %415, %414 : vector<2x32xf32>
    %417 = arith.divf %415, %416 : vector<2x32xf32>
    %418 = arith.mulf %409, %391 : vector<2x32xf32>
    %419 = arith.mulf %403, %411 : vector<2x32xf32>
    %420 = arith.addf %418, %419 : vector<2x32xf32>
    %421 = math.tanh %420 : vector<2x32xf32>
    %422 = arith.mulf %417, %421 : vector<2x32xf32>
    %c0_91 = arith.constant 0 : index
    %c32 = arith.constant 32 : index
    %423 = vector.load %arg9[%c0_91, %c32] : memref<2x384xf32, #tpu.memory_space<vmem>>, vector<2x32xf32>
    tpu.vector_store %arg9[%c0_91, %c32], %422 {strides = array<i32>} : memref<2x384xf32, #tpu.memory_space<vmem>>, vector<2x32xf32>,
    %424 = vector.extract_strided_slice %363 {offsets = [4, 0], sizes = [2, 128], strides = [1, 1]} : vector<24x128xf32> to vector<2x128xf32>
    %cst_92 = arith.constant dense<0.000000e+00> : vector<2x128xf32>
    %425 = tpu.matmul %422, %359, %cst_92 {dimension_numbers = #tpu.dot_dimension_numbers<[1], [0], [0], [1], [0, 0, 1, 1], [], []>} : vector<2x32xf32>, vector<32x128xf32>, vector<2x128xf32> -> vector<2x128xf32>
    %426 = arith.addf %424, %425 : vector<2x128xf32>
    %427 = vector.extract_strided_slice %426 {offsets = [0, 0], sizes = [2, 32], strides = [1, 1]} : vector<2x128xf32> to vector<2x32xf32>
    %428 = arith.negf %427 : vector<2x32xf32>
    %429 = math.exp %428 : vector<2x32xf32>
    %cst_93 = arith.constant 1.000000e+00 : f32
    %430 = vector.broadcast %cst_93 : f32 to vector<2x32xf32>
    %431 = arith.addf %430, %429 : vector<2x32xf32>
    %432 = arith.divf %430, %431 : vector<2x32xf32>
    %433 = vector.extract_strided_slice %426 {offsets = [0, 32], sizes = [2, 32], strides = [1, 1]} : vector<2x128xf32> to vector<2x32xf32>
    %434 = arith.negf %433 : vector<2x32xf32>
    %435 = math.exp %434 : vector<2x32xf32>
    %cst_94 = arith.constant 1.000000e+00 : f32
    %436 = vector.broadcast %cst_94 : f32 to vector<2x32xf32>
    %437 = arith.addf %436, %435 : vector<2x32xf32>
    %438 = arith.divf %436, %437 : vector<2x32xf32>
    %439 = vector.extract_strided_slice %426 {offsets = [0, 64], sizes = [2, 32], strides = [1, 1]} : vector<2x128xf32> to vector<2x32xf32>
    %440 = math.tanh %439 : vector<2x32xf32>
    %441 = vector.extract_strided_slice %426 {offsets = [0, 96], sizes = [2, 32], strides = [1, 1]} : vector<2x128xf32> to vector<2x32xf32>
    %442 = arith.negf %441 : vector<2x32xf32>
    %443 = math.exp %442 : vector<2x32xf32>
    %cst_95 = arith.constant 1.000000e+00 : f32
    %444 = vector.broadcast %cst_95 : f32 to vector<2x32xf32>
    %445 = arith.addf %444, %443 : vector<2x32xf32>
    %446 = arith.divf %444, %445 : vector<2x32xf32>
    %447 = arith.mulf %438, %420 : vector<2x32xf32>
    %448 = arith.mulf %432, %440 : vector<2x32xf32>
    %449 = arith.addf %447, %448 : vector<2x32xf32>
    %450 = math.tanh %449 : vector<2x32xf32>
    %451 = arith.mulf %446, %450 : vector<2x32xf32>
    %c0_96 = arith.constant 0 : index
    %c64 = arith.constant 64 : index
    %452 = vector.load %arg9[%c0_96, %c64] : memref<2x384xf32, #tpu.memory_space<vmem>>, vector<2x32xf32>
    tpu.vector_store %arg9[%c0_96, %c64], %451 {strides = array<i32>} : memref<2x384xf32, #tpu.memory_space<vmem>>, vector<2x32xf32>,
    %453 = vector.extract_strided_slice %363 {offsets = [6, 0], sizes = [2, 128], strides = [1, 1]} : vector<24x128xf32> to vector<2x128xf32>
    %cst_97 = arith.constant dense<0.000000e+00> : vector<2x128xf32>
    %454 = tpu.matmul %451, %359, %cst_97 {dimension_numbers = #tpu.dot_dimension_numbers<[1], [0], [0], [1], [0, 0, 1, 1], [], []>} : vector<2x32xf32>, vector<32x128xf32>, vector<2x128xf32> -> vector<2x128xf32>
    %455 = arith.addf %453, %454 : vector<2x128xf32>
    %456 = vector.extract_strided_slice %455 {offsets = [0, 0], sizes = [2, 32], strides = [1, 1]} : vector<2x128xf32> to vector<2x32xf32>
    %457 = arith.negf %456 : vector<2x32xf32>
    %458 = math.exp %457 : vector<2x32xf32>
    %cst_98 = arith.constant 1.000000e+00 : f32
    %459 = vector.broadcast %cst_98 : f32 to vector<2x32xf32>
    %460 = arith.addf %459, %458 : vector<2x32xf32>
    %461 = arith.divf %459, %460 : vector<2x32xf32>
    %462 = vector.extract_strided_slice %455 {offsets = [0, 32], sizes = [2, 32], strides = [1, 1]} : vector<2x128xf32> to vector<2x32xf32>
    %463 = arith.negf %462 : vector<2x32xf32>
    %464 = math.exp %463 : vector<2x32xf32>
    %cst_99 = arith.constant 1.000000e+00 : f32
    %465 = vector.broadcast %cst_99 : f32 to vector<2x32xf32>
    %466 = arith.addf %465, %464 : vector<2x32xf32>
    %467 = arith.divf %465, %466 : vector<2x32xf32>
    %468 = vector.extract_strided_slice %455 {offsets = [0, 64], sizes = [2, 32], strides = [1, 1]} : vector<2x128xf32> to vector<2x32xf32>
    %469 = math.tanh %468 : vector<2x32xf32>
    %470 = vector.extract_strided_slice %455 {offsets = [0, 96], sizes = [2, 32], strides = [1, 1]} : vector<2x128xf32> to vector<2x32xf32>
    %471 = arith.negf %470 : vector<2x32xf32>
    %472 = math.exp %471 : vector<2x32xf32>
    %cst_100 = arith.constant 1.000000e+00 : f32
    %473 = vector.broadcast %cst_100 : f32 to vector<2x32xf32>
    %474 = arith.addf %473, %472 : vector<2x32xf32>
    %475 = arith.divf %473, %474 : vector<2x32xf32>
    %476 = arith.mulf %467, %449 : vector<2x32xf32>
    %477 = arith.mulf %461, %469 : vector<2x32xf32>
    %478 = arith.addf %476, %477 : vector<2x32xf32>
    %479 = math.tanh %478 : vector<2x32xf32>
    %480 = arith.mulf %475, %479 : vector<2x32xf32>
    %c0_101 = arith.constant 0 : index
    %c96 = arith.constant 96 : index
    %481 = vector.load %arg9[%c0_101, %c96] : memref<2x384xf32, #tpu.memory_space<vmem>>, vector<2x32xf32>
    tpu.vector_store %arg9[%c0_101, %c96], %480 {strides = array<i32>} : memref<2x384xf32, #tpu.memory_space<vmem>>, vector<2x32xf32>,
    %482 = vector.extract_strided_slice %363 {offsets = [8, 0], sizes = [2, 128], strides = [1, 1]} : vector<24x128xf32> to vector<2x128xf32>
    %cst_102 = arith.constant dense<0.000000e+00> : vector<2x128xf32>
    %483 = tpu.matmul %480, %359, %cst_102 {dimension_numbers = #tpu.dot_dimension_numbers<[1], [0], [0], [1], [0, 0, 1, 1], [], []>} : vector<2x32xf32>, vector<32x128xf32>, vector<2x128xf32> -> vector<2x128xf32>
    %484 = arith.addf %482, %483 : vector<2x128xf32>
    %485 = vector.extract_strided_slice %484 {offsets = [0, 0], sizes = [2, 32], strides = [1, 1]} : vector<2x128xf32> to vector<2x32xf32>
    %486 = arith.negf %485 : vector<2x32xf32>
    %487 = math.exp %486 : vector<2x32xf32>
    %cst_103 = arith.constant 1.000000e+00 : f32
    %488 = vector.broadcast %cst_103 : f32 to vector<2x32xf32>
    %489 = arith.addf %488, %487 : vector<2x32xf32>
    %490 = arith.divf %488, %489 : vector<2x32xf32>
    %491 = vector.extract_strided_slice %484 {offsets = [0, 32], sizes = [2, 32], strides = [1, 1]} : vector<2x128xf32> to vector<2x32xf32>
    %492 = arith.negf %491 : vector<2x32xf32>
    %493 = math.exp %492 : vector<2x32xf32>
    %cst_104 = arith.constant 1.000000e+00 : f32
    %494 = vector.broadcast %cst_104 : f32 to vector<2x32xf32>
    %495 = arith.addf %494, %493 : vector<2x32xf32>
    %496 = arith.divf %494, %495 : vector<2x32xf32>
    %497 = vector.extract_strided_slice %484 {offsets = [0, 64], sizes = [2, 32], strides = [1, 1]} : vector<2x128xf32> to vector<2x32xf32>
    %498 = math.tanh %497 : vector<2x32xf32>
    %499 = vector.extract_strided_slice %484 {offsets = [0, 96], sizes = [2, 32], strides = [1, 1]} : vector<2x128xf32> to vector<2x32xf32>
    %500 = arith.negf %499 : vector<2x32xf32>
    %501 = math.exp %500 : vector<2x32xf32>
    %cst_105 = arith.constant 1.000000e+00 : f32
    %502 = vector.broadcast %cst_105 : f32 to vector<2x32xf32>
    %503 = arith.addf %502, %501 : vector<2x32xf32>
    %504 = arith.divf %502, %503 : vector<2x32xf32>
    %505 = arith.mulf %496, %478 : vector<2x32xf32>
    %506 = arith.mulf %490, %498 : vector<2x32xf32>
    %507 = arith.addf %505, %506 : vector<2x32xf32>
    %508 = math.tanh %507 : vector<2x32xf32>
    %509 = arith.mulf %504, %508 : vector<2x32xf32>
    %c0_106 = arith.constant 0 : index
    %c128 = arith.constant 128 : index
    %510 = vector.load %arg9[%c0_106, %c128] : memref<2x384xf32, #tpu.memory_space<vmem>>, vector<2x32xf32>
    tpu.vector_store %arg9[%c0_106, %c128], %509 {strides = array<i32>} : memref<2x384xf32, #tpu.memory_space<vmem>>, vector<2x32xf32>,
    %511 = vector.extract_strided_slice %363 {offsets = [10, 0], sizes = [2, 128], strides = [1, 1]} : vector<24x128xf32> to vector<2x128xf32>
    %cst_107 = arith.constant dense<0.000000e+00> : vector<2x128xf32>
    %512 = tpu.matmul %509, %359, %cst_107 {dimension_numbers = #tpu.dot_dimension_numbers<[1], [0], [0], [1], [0, 0, 1, 1], [], []>} : vector<2x32xf32>, vector<32x128xf32>, vector<2x128xf32> -> vector<2x128xf32>
    %513 = arith.addf %511, %512 : vector<2x128xf32>
    %514 = vector.extract_strided_slice %513 {offsets = [0, 0], sizes = [2, 32], strides = [1, 1]} : vector<2x128xf32> to vector<2x32xf32>
    %515 = arith.negf %514 : vector<2x32xf32>
    %516 = math.exp %515 : vector<2x32xf32>
    %cst_108 = arith.constant 1.000000e+00 : f32
    %517 = vector.broadcast %cst_108 : f32 to vector<2x32xf32>
    %518 = arith.addf %517, %516 : vector<2x32xf32>
    %519 = arith.divf %517, %518 : vector<2x32xf32>
    %520 = vector.extract_strided_slice %513 {offsets = [0, 32], sizes = [2, 32], strides = [1, 1]} : vector<2x128xf32> to vector<2x32xf32>
    %521 = arith.negf %520 : vector<2x32xf32>
    %522 = math.exp %521 : vector<2x32xf32>
    %cst_109 = arith.constant 1.000000e+00 : f32
    %523 = vector.broadcast %cst_109 : f32 to vector<2x32xf32>
    %524 = arith.addf %523, %522 : vector<2x32xf32>
    %525 = arith.divf %523, %524 : vector<2x32xf32>
    %526 = vector.extract_strided_slice %513 {offsets = [0, 64], sizes = [2, 32], strides = [1, 1]} : vector<2x128xf32> to vector<2x32xf32>
    %527 = math.tanh %526 : vector<2x32xf32>
    %528 = vector.extract_strided_slice %513 {offsets = [0, 96], sizes = [2, 32], strides = [1, 1]} : vector<2x128xf32> to vector<2x32xf32>
    %529 = arith.negf %528 : vector<2x32xf32>
    %530 = math.exp %529 : vector<2x32xf32>
    %cst_110 = arith.constant 1.000000e+00 : f32
    %531 = vector.broadcast %cst_110 : f32 to vector<2x32xf32>
    %532 = arith.addf %531, %530 : vector<2x32xf32>
    %533 = arith.divf %531, %532 : vector<2x32xf32>
    %534 = arith.mulf %525, %507 : vector<2x32xf32>
    %535 = arith.mulf %519, %527 : vector<2x32xf32>
    %536 = arith.addf %534, %535 : vector<2x32xf32>
    %537 = math.tanh %536 : vector<2x32xf32>
    %538 = arith.mulf %533, %537 : vector<2x32xf32>
    %c0_111 = arith.constant 0 : index
    %c160 = arith.constant 160 : index
    %539 = vector.load %arg9[%c0_111, %c160] : memref<2x384xf32, #tpu.memory_space<vmem>>, vector<2x32xf32>
    tpu.vector_store %arg9[%c0_111, %c160], %538 {strides = array<i32>} : memref<2x384xf32, #tpu.memory_space<vmem>>, vector<2x32xf32>,
    %540 = vector.extract_strided_slice %363 {offsets = [12, 0], sizes = [2, 128], strides = [1, 1]} : vector<24x128xf32> to vector<2x128xf32>
    %cst_112 = arith.constant dense<0.000000e+00> : vector<2x128xf32>
    %541 = tpu.matmul %538, %359, %cst_112 {dimension_numbers = #tpu.dot_dimension_numbers<[1], [0], [0], [1], [0, 0, 1, 1], [], []>} : vector<2x32xf32>, vector<32x128xf32>, vector<2x128xf32> -> vector<2x128xf32>
    %542 = arith.addf %540, %541 : vector<2x128xf32>
    %543 = vector.extract_strided_slice %542 {offsets = [0, 0], sizes = [2, 32], strides = [1, 1]} : vector<2x128xf32> to vector<2x32xf32>
    %544 = arith.negf %543 : vector<2x32xf32>
    %545 = math.exp %544 : vector<2x32xf32>
    %cst_113 = arith.constant 1.000000e+00 : f32
    %546 = vector.broadcast %cst_113 : f32 to vector<2x32xf32>
    %547 = arith.addf %546, %545 : vector<2x32xf32>
    %548 = arith.divf %546, %547 : vector<2x32xf32>
    %549 = vector.extract_strided_slice %542 {offsets = [0, 32], sizes = [2, 32], strides = [1, 1]} : vector<2x128xf32> to vector<2x32xf32>
    %550 = arith.negf %549 : vector<2x32xf32>
    %551 = math.exp %550 : vector<2x32xf32>
    %cst_114 = arith.constant 1.000000e+00 : f32
    %552 = vector.broadcast %cst_114 : f32 to vector<2x32xf32>
    %553 = arith.addf %552, %551 : vector<2x32xf32>
    %554 = arith.divf %552, %553 : vector<2x32xf32>
    %555 = vector.extract_strided_slice %542 {offsets = [0, 64], sizes = [2, 32], strides = [1, 1]} : vector<2x128xf32> to vector<2x32xf32>
    %556 = math.tanh %555 : vector<2x32xf32>
    %557 = vector.extract_strided_slice %542 {offsets = [0, 96], sizes = [2, 32], strides = [1, 1]} : vector<2x128xf32> to vector<2x32xf32>
    %558 = arith.negf %557 : vector<2x32xf32>
    %559 = math.exp %558 : vector<2x32xf32>
    %cst_115 = arith.constant 1.000000e+00 : f32
    %560 = vector.broadcast %cst_115 : f32 to vector<2x32xf32>
    %561 = arith.addf %560, %559 : vector<2x32xf32>
    %562 = arith.divf %560, %561 : vector<2x32xf32>
    %563 = arith.mulf %554, %536 : vector<2x32xf32>
    %564 = arith.mulf %548, %556 : vector<2x32xf32>
    %565 = arith.addf %563, %564 : vector<2x32xf32>
    %566 = math.tanh %565 : vector<2x32xf32>
    %567 = arith.mulf %562, %566 : vector<2x32xf32>
    %c0_116 = arith.constant 0 : index
    %c192 = arith.constant 192 : index
    %568 = vector.load %arg9[%c0_116, %c192] : memref<2x384xf32, #tpu.memory_space<vmem>>, vector<2x32xf32>
    tpu.vector_store %arg9[%c0_116, %c192], %567 {strides = array<i32>} : memref<2x384xf32, #tpu.memory_space<vmem>>, vector<2x32xf32>,
    %569 = vector.extract_strided_slice %363 {offsets = [14, 0], sizes = [2, 128], strides = [1, 1]} : vector<24x128xf32> to vector<2x128xf32>
    %cst_117 = arith.constant dense<0.000000e+00> : vector<2x128xf32>
    %570 = tpu.matmul %567, %359, %cst_117 {dimension_numbers = #tpu.dot_dimension_numbers<[1], [0], [0], [1], [0, 0, 1, 1], [], []>} : vector<2x32xf32>, vector<32x128xf32>, vector<2x128xf32> -> vector<2x128xf32>
    %571 = arith.addf %569, %570 : vector<2x128xf32>
    %572 = vector.extract_strided_slice %571 {offsets = [0, 0], sizes = [2, 32], strides = [1, 1]} : vector<2x128xf32> to vector<2x32xf32>
    %573 = arith.negf %572 : vector<2x32xf32>
    %574 = math.exp %573 : vector<2x32xf32>
    %cst_118 = arith.constant 1.000000e+00 : f32
    %575 = vector.broadcast %cst_118 : f32 to vector<2x32xf32>
    %576 = arith.addf %575, %574 : vector<2x32xf32>
    %577 = arith.divf %575, %576 : vector<2x32xf32>
    %578 = vector.extract_strided_slice %571 {offsets = [0, 32], sizes = [2, 32], strides = [1, 1]} : vector<2x128xf32> to vector<2x32xf32>
    %579 = arith.negf %578 : vector<2x32xf32>
    %580 = math.exp %579 : vector<2x32xf32>
    %cst_119 = arith.constant 1.000000e+00 : f32
    %581 = vector.broadcast %cst_119 : f32 to vector<2x32xf32>
    %582 = arith.addf %581, %580 : vector<2x32xf32>
    %583 = arith.divf %581, %582 : vector<2x32xf32>
    %584 = vector.extract_strided_slice %571 {offsets = [0, 64], sizes = [2, 32], strides = [1, 1]} : vector<2x128xf32> to vector<2x32xf32>
    %585 = math.tanh %584 : vector<2x32xf32>
    %586 = vector.extract_strided_slice %571 {offsets = [0, 96], sizes = [2, 32], strides = [1, 1]} : vector<2x128xf32> to vector<2x32xf32>
    %587 = arith.negf %586 : vector<2x32xf32>
    %588 = math.exp %587 : vector<2x32xf32>
    %cst_120 = arith.constant 1.000000e+00 : f32
    %589 = vector.broadcast %cst_120 : f32 to vector<2x32xf32>
    %590 = arith.addf %589, %588 : vector<2x32xf32>
    %591 = arith.divf %589, %590 : vector<2x32xf32>
    %592 = arith.mulf %583, %565 : vector<2x32xf32>
    %593 = arith.mulf %577, %585 : vector<2x32xf32>
    %594 = arith.addf %592, %593 : vector<2x32xf32>
    %595 = math.tanh %594 : vector<2x32xf32>
    %596 = arith.mulf %591, %595 : vector<2x32xf32>
    %c0_121 = arith.constant 0 : index
    %c224 = arith.constant 224 : index
    %597 = vector.load %arg9[%c0_121, %c224] : memref<2x384xf32, #tpu.memory_space<vmem>>, vector<2x32xf32>
    tpu.vector_store %arg9[%c0_121, %c224], %596 {strides = array<i32>} : memref<2x384xf32, #tpu.memory_space<vmem>>, vector<2x32xf32>,
    %598 = vector.extract_strided_slice %363 {offsets = [16, 0], sizes = [2, 128], strides = [1, 1]} : vector<24x128xf32> to vector<2x128xf32>
    %cst_122 = arith.constant dense<0.000000e+00> : vector<2x128xf32>
    %599 = tpu.matmul %596, %359, %cst_122 {dimension_numbers = #tpu.dot_dimension_numbers<[1], [0], [0], [1], [0, 0, 1, 1], [], []>} : vector<2x32xf32>, vector<32x128xf32>, vector<2x128xf32> -> vector<2x128xf32>
    %600 = arith.addf %598, %599 : vector<2x128xf32>
    %601 = vector.extract_strided_slice %600 {offsets = [0, 0], sizes = [2, 32], strides = [1, 1]} : vector<2x128xf32> to vector<2x32xf32>
    %602 = arith.negf %601 : vector<2x32xf32>
    %603 = math.exp %602 : vector<2x32xf32>
    %cst_123 = arith.constant 1.000000e+00 : f32
    %604 = vector.broadcast %cst_123 : f32 to vector<2x32xf32>
    %605 = arith.addf %604, %603 : vector<2x32xf32>
    %606 = arith.divf %604, %605 : vector<2x32xf32>
    %607 = vector.extract_strided_slice %600 {offsets = [0, 32], sizes = [2, 32], strides = [1, 1]} : vector<2x128xf32> to vector<2x32xf32>
    %608 = arith.negf %607 : vector<2x32xf32>
    %609 = math.exp %608 : vector<2x32xf32>
    %cst_124 = arith.constant 1.000000e+00 : f32
    %610 = vector.broadcast %cst_124 : f32 to vector<2x32xf32>
    %611 = arith.addf %610, %609 : vector<2x32xf32>
    %612 = arith.divf %610, %611 : vector<2x32xf32>
    %613 = vector.extract_strided_slice %600 {offsets = [0, 64], sizes = [2, 32], strides = [1, 1]} : vector<2x128xf32> to vector<2x32xf32>
    %614 = math.tanh %613 : vector<2x32xf32>
    %615 = vector.extract_strided_slice %600 {offsets = [0, 96], sizes = [2, 32], strides = [1, 1]} : vector<2x128xf32> to vector<2x32xf32>
    %616 = arith.negf %615 : vector<2x32xf32>
    %617 = math.exp %616 : vector<2x32xf32>
    %cst_125 = arith.constant 1.000000e+00 : f32
    %618 = vector.broadcast %cst_125 : f32 to vector<2x32xf32>
    %619 = arith.addf %618, %617 : vector<2x32xf32>
    %620 = arith.divf %618, %619 : vector<2x32xf32>
    %621 = arith.mulf %612, %594 : vector<2x32xf32>
    %622 = arith.mulf %606, %614 : vector<2x32xf32>
    %623 = arith.addf %621, %622 : vector<2x32xf32>
    %624 = math.tanh %623 : vector<2x32xf32>
    %625 = arith.mulf %620, %624 : vector<2x32xf32>
    %c0_126 = arith.constant 0 : index
    %c256 = arith.constant 256 : index
    %626 = vector.load %arg9[%c0_126, %c256] : memref<2x384xf32, #tpu.memory_space<vmem>>, vector<2x32xf32>
    tpu.vector_store %arg9[%c0_126, %c256], %625 {strides = array<i32>} : memref<2x384xf32, #tpu.memory_space<vmem>>, vector<2x32xf32>,
    %627 = vector.extract_strided_slice %363 {offsets = [18, 0], sizes = [2, 128], strides = [1, 1]} : vector<24x128xf32> to vector<2x128xf32>
    %cst_127 = arith.constant dense<0.000000e+00> : vector<2x128xf32>
    %628 = tpu.matmul %625, %359, %cst_127 {dimension_numbers = #tpu.dot_dimension_numbers<[1], [0], [0], [1], [0, 0, 1, 1], [], []>} : vector<2x32xf32>, vector<32x128xf32>, vector<2x128xf32> -> vector<2x128xf32>
    %629 = arith.addf %627, %628 : vector<2x128xf32>
    %630 = vector.extract_strided_slice %629 {offsets = [0, 0], sizes = [2, 32], strides = [1, 1]} : vector<2x128xf32> to vector<2x32xf32>
    %631 = arith.negf %630 : vector<2x32xf32>
    %632 = math.exp %631 : vector<2x32xf32>
    %cst_128 = arith.constant 1.000000e+00 : f32
    %633 = vector.broadcast %cst_128 : f32 to vector<2x32xf32>
    %634 = arith.addf %633, %632 : vector<2x32xf32>
    %635 = arith.divf %633, %634 : vector<2x32xf32>
    %636 = vector.extract_strided_slice %629 {offsets = [0, 32], sizes = [2, 32], strides = [1, 1]} : vector<2x128xf32> to vector<2x32xf32>
    %637 = arith.negf %636 : vector<2x32xf32>
    %638 = math.exp %637 : vector<2x32xf32>
    %cst_129 = arith.constant 1.000000e+00 : f32
    %639 = vector.broadcast %cst_129 : f32 to vector<2x32xf32>
    %640 = arith.addf %639, %638 : vector<2x32xf32>
    %641 = arith.divf %639, %640 : vector<2x32xf32>
    %642 = vector.extract_strided_slice %629 {offsets = [0, 64], sizes = [2, 32], strides = [1, 1]} : vector<2x128xf32> to vector<2x32xf32>
    %643 = math.tanh %642 : vector<2x32xf32>
    %644 = vector.extract_strided_slice %629 {offsets = [0, 96], sizes = [2, 32], strides = [1, 1]} : vector<2x128xf32> to vector<2x32xf32>
    %645 = arith.negf %644 : vector<2x32xf32>
    %646 = math.exp %645 : vector<2x32xf32>
    %cst_130 = arith.constant 1.000000e+00 : f32
    %647 = vector.broadcast %cst_130 : f32 to vector<2x32xf32>
    %648 = arith.addf %647, %646 : vector<2x32xf32>
    %649 = arith.divf %647, %648 : vector<2x32xf32>
    %650 = arith.mulf %641, %623 : vector<2x32xf32>
    %651 = arith.mulf %635, %643 : vector<2x32xf32>
    %652 = arith.addf %650, %651 : vector<2x32xf32>
    %653 = math.tanh %652 : vector<2x32xf32>
    %654 = arith.mulf %649, %653 : vector<2x32xf32>
    %c0_131 = arith.constant 0 : index
    %c288 = arith.constant 288 : index
    %655 = vector.load %arg9[%c0_131, %c288] : memref<2x384xf32, #tpu.memory_space<vmem>>, vector<2x32xf32>
    tpu.vector_store %arg9[%c0_131, %c288], %654 {strides = array<i32>} : memref<2x384xf32, #tpu.memory_space<vmem>>, vector<2x32xf32>,
    %656 = vector.extract_strided_slice %363 {offsets = [20, 0], sizes = [2, 128], strides = [1, 1]} : vector<24x128xf32> to vector<2x128xf32>
    %cst_132 = arith.constant dense<0.000000e+00> : vector<2x128xf32>
    %657 = tpu.matmul %654, %359, %cst_132 {dimension_numbers = #tpu.dot_dimension_numbers<[1], [0], [0], [1], [0, 0, 1, 1], [], []>} : vector<2x32xf32>, vector<32x128xf32>, vector<2x128xf32> -> vector<2x128xf32>
    %658 = arith.addf %656, %657 : vector<2x128xf32>
    %659 = vector.extract_strided_slice %658 {offsets = [0, 0], sizes = [2, 32], strides = [1, 1]} : vector<2x128xf32> to vector<2x32xf32>
    %660 = arith.negf %659 : vector<2x32xf32>
    %661 = math.exp %660 : vector<2x32xf32>
    %cst_133 = arith.constant 1.000000e+00 : f32
    %662 = vector.broadcast %cst_133 : f32 to vector<2x32xf32>
    %663 = arith.addf %662, %661 : vector<2x32xf32>
    %664 = arith.divf %662, %663 : vector<2x32xf32>
    %665 = vector.extract_strided_slice %658 {offsets = [0, 32], sizes = [2, 32], strides = [1, 1]} : vector<2x128xf32> to vector<2x32xf32>
    %666 = arith.negf %665 : vector<2x32xf32>
    %667 = math.exp %666 : vector<2x32xf32>
    %cst_134 = arith.constant 1.000000e+00 : f32
    %668 = vector.broadcast %cst_134 : f32 to vector<2x32xf32>
    %669 = arith.addf %668, %667 : vector<2x32xf32>
    %670 = arith.divf %668, %669 : vector<2x32xf32>
    %671 = vector.extract_strided_slice %658 {offsets = [0, 64], sizes = [2, 32], strides = [1, 1]} : vector<2x128xf32> to vector<2x32xf32>
    %672 = math.tanh %671 : vector<2x32xf32>
    %673 = vector.extract_strided_slice %658 {offsets = [0, 96], sizes = [2, 32], strides = [1, 1]} : vector<2x128xf32> to vector<2x32xf32>
    %674 = arith.negf %673 : vector<2x32xf32>
    %675 = math.exp %674 : vector<2x32xf32>
    %cst_135 = arith.constant 1.000000e+00 : f32
    %676 = vector.broadcast %cst_135 : f32 to vector<2x32xf32>
    %677 = arith.addf %676, %675 : vector<2x32xf32>
    %678 = arith.divf %676, %677 : vector<2x32xf32>
    %679 = arith.mulf %670, %652 : vector<2x32xf32>
    %680 = arith.mulf %664, %672 : vector<2x32xf32>
    %681 = arith.addf %679, %680 : vector<2x32xf32>
    %682 = math.tanh %681 : vector<2x32xf32>
    %683 = arith.mulf %678, %682 : vector<2x32xf32>
    %c0_136 = arith.constant 0 : index
    %c320 = arith.constant 320 : index
    %684 = vector.load %arg9[%c0_136, %c320] : memref<2x384xf32, #tpu.memory_space<vmem>>, vector<2x32xf32>
    tpu.vector_store %arg9[%c0_136, %c320], %683 {strides = array<i32>} : memref<2x384xf32, #tpu.memory_space<vmem>>, vector<2x32xf32>,
    %685 = vector.extract_strided_slice %363 {offsets = [22, 0], sizes = [2, 128], strides = [1, 1]} : vector<24x128xf32> to vector<2x128xf32>
    %cst_137 = arith.constant dense<0.000000e+00> : vector<2x128xf32>
    %686 = tpu.matmul %683, %359, %cst_137 {dimension_numbers = #tpu.dot_dimension_numbers<[1], [0], [0], [1], [0, 0, 1, 1], [], []>} : vector<2x32xf32>, vector<32x128xf32>, vector<2x128xf32> -> vector<2x128xf32>
    %687 = arith.addf %685, %686 : vector<2x128xf32>
    %688 = vector.extract_strided_slice %687 {offsets = [0, 0], sizes = [2, 32], strides = [1, 1]} : vector<2x128xf32> to vector<2x32xf32>
    %689 = arith.negf %688 : vector<2x32xf32>
    %690 = math.exp %689 : vector<2x32xf32>
    %cst_138 = arith.constant 1.000000e+00 : f32
    %691 = vector.broadcast %cst_138 : f32 to vector<2x32xf32>
    %692 = arith.addf %691, %690 : vector<2x32xf32>
    %693 = arith.divf %691, %692 : vector<2x32xf32>
    %694 = vector.extract_strided_slice %687 {offsets = [0, 32], sizes = [2, 32], strides = [1, 1]} : vector<2x128xf32> to vector<2x32xf32>
    %695 = arith.negf %694 : vector<2x32xf32>
    %696 = math.exp %695 : vector<2x32xf32>
    %cst_139 = arith.constant 1.000000e+00 : f32
    %697 = vector.broadcast %cst_139 : f32 to vector<2x32xf32>
    %698 = arith.addf %697, %696 : vector<2x32xf32>
    %699 = arith.divf %697, %698 : vector<2x32xf32>
    %700 = vector.extract_strided_slice %687 {offsets = [0, 64], sizes = [2, 32], strides = [1, 1]} : vector<2x128xf32> to vector<2x32xf32>
    %701 = math.tanh %700 : vector<2x32xf32>
    %702 = vector.extract_strided_slice %687 {offsets = [0, 96], sizes = [2, 32], strides = [1, 1]} : vector<2x128xf32> to vector<2x32xf32>
    %703 = arith.negf %702 : vector<2x32xf32>
    %704 = math.exp %703 : vector<2x32xf32>
    %cst_140 = arith.constant 1.000000e+00 : f32
    %705 = vector.broadcast %cst_140 : f32 to vector<2x32xf32>
    %706 = arith.addf %705, %704 : vector<2x32xf32>
    %707 = arith.divf %705, %706 : vector<2x32xf32>
    %708 = arith.mulf %699, %681 : vector<2x32xf32>
    %709 = arith.mulf %693, %701 : vector<2x32xf32>
    %710 = arith.addf %708, %709 : vector<2x32xf32>
    %711 = math.tanh %710 : vector<2x32xf32>
    %712 = arith.mulf %707, %711 : vector<2x32xf32>
    %c0_141 = arith.constant 0 : index
    %c352 = arith.constant 352 : index
    %713 = vector.load %arg9[%c0_141, %c352] : memref<2x384xf32, #tpu.memory_space<vmem>>, vector<2x32xf32>
    tpu.vector_store %arg9[%c0_141, %c352], %712 {strides = array<i32>} : memref<2x384xf32, #tpu.memory_space<vmem>>, vector<2x32xf32>,
    %c0_142 = arith.constant 0 : index
    %c0_143 = arith.constant 0 : index
    %714 = vector.load %arg7[%c0_142, %c0_143] : memref<32x6xf32, #tpu.memory_space<vmem>>, vector<32x6xf32>
    %cst_144 = arith.constant dense<0.000000e+00> : vector<2x6xf32>
    %715 = tpu.matmul %712, %714, %cst_144 {dimension_numbers = #tpu.dot_dimension_numbers<[1], [0], [0], [1], [0, 0, 1, 1], [], []>} : vector<2x32xf32>, vector<32x6xf32>, vector<2x6xf32> -> vector<2x6xf32>
    %c0_145 = arith.constant 0 : index
    %c0_146 = arith.constant 0 : index
    %716 = vector.load %arg8[%c0_145, %c0_146] : memref<1x6xf32, #tpu.memory_space<vmem>>, vector<1x6xf32>
    %717 = vector.broadcast %716 : vector<1x6xf32> to vector<2x6xf32>
    %718 = arith.addf %715, %717 : vector<2x6xf32>
    %c0_147 = arith.constant 0 : index
    %c0_148 = arith.constant 0 : index
    %719 = vector.load %arg10[%c0_147, %c0_148] : memref<2x6xf32, #tpu.memory_space<vmem>>, vector<2x6xf32>
    tpu.vector_store %arg10[%c0_147, %c0_148], %718 {strides = array<i32>} : memref<2x6xf32, #tpu.memory_space<vmem>>, vector<2x6xf32>,
    return
  }
}

</mosaic_0001>

<llo_original>
// kernel: lstm_model_forward.1
$region0: #{lstm_model_forward.1}
  #allocation0 [shape = 'u32[]', space=smem, size = 0x4, offset = 0x4, fixed_abs, tag = 'smem constant byte address 0x4 - core index']
  #allocation1 [shape = 'u32[144,128]{1,0:T(1,128)}', space=vmem, size = 0x12000, scoped, tag = 'internal scratch']
  #allocation2 [shape = 'f32[24,32]{1,0:T(8,128)}', space=vmem, size = 0x3000, scoped, tag = 'scratch operand']
  %s0 = inlined_call_operand.vmem [shape: f32[24,16], index: 0, kind: input, shape index: {}]
  %s1 = inlined_call_operand.hbm [shape: f32[16,128], index: 1, kind: input, shape index: {}]
  %s2 = inlined_call_operand.vmem [shape: f32[32,128], index: 2, kind: input, shape index: {}]
  %s3 = inlined_call_operand.hbm [shape: f32[1,128], index: 3, kind: input, shape index: {}]
  %s4 = inlined_call_operand.hbm [shape: f32[32,128], index: 4, kind: input, shape index: {}]
  %s5 = inlined_call_operand.hbm [shape: f32[32,128], index: 5, kind: input, shape index: {}]
  %s6 = inlined_call_operand.hbm [shape: f32[1,128], index: 6, kind: input, shape index: {}]
  %s7 = inlined_call_operand.vmem [shape: f32[32,6], index: 7, kind: input, shape index: {}]
  %s8 = inlined_call_operand.hbm [shape: f32[1,6], index: 8, kind: input, shape index: {}]
  %s9 = inlined_call_operand.vmem [shape: f32[2,384], index: 9, kind: output, shape index: {0}]
  %s10 = inlined_call_operand.hbm [shape: f32[2,6], index: 10, kind: output, shape index: {1}]
  %11 = xla_tuple %s9, %s10
  %s12 = sld [smem:[#allocation0]]
  $region78: #{lstm_model_forward.1} parent=0
    _
  %s14 = ssub.s32 1, %s12
  %s15 = scalar_select 0, %s14, %s12
  $region1: #{lstm_model_forward.1} parent=0
    #allocation3 [shape = 'u8[8192]{0}', space=vmem, size = 0x2000, scoped, tag = 'input window, operand 1, single buffered']
    #allocation4 [shape = 's32[1]{0}', space=sflag, size = 0x4, scoped, tag = 'scoped memory for lstm_model_forward.1']
    #allocation5 [shape = 's32[1]{0}', space=sflag, size = 0x4, scoped, tag = 'scoped memory for lstm_model_forward.1']
    #allocation6 [shape = 'u8[512]{0}', space=vmem, size = 0x400, scoped, tag = 'input window, operand 3, single buffered']
    #allocation7 [shape = 's32[1]{0}', space=sflag, size = 0x4, scoped, tag = 'scoped memory for lstm_model_forward.1']
    #allocation8 [shape = 'u8[16384]{0}', space=vmem, size = 0x4000, scoped, tag = 'input window, operand 4, single buffered']
    #allocation9 [shape = 'u8[16384]{0}', space=vmem, size = 0x4000, scoped, tag = 'input window, operand 5, single buffered']
    #allocation10 [shape = 's32[1]{0}', space=sflag, size = 0x4, scoped, tag = 'scoped memory for lstm_model_forward.1']
    #allocation11 [shape = 'u8[512]{0}', space=vmem, size = 0x400, scoped, tag = 'input window, operand 6, single buffered']
    #allocation12 [shape = 'u8[512]{0}', space=vmem, size = 0x400, scoped, tag = 'input window, operand 8, single buffered']
    #allocation13 [shape = 's32[1]{0}', space=sflag, size = 0x4, scoped, tag = 'scoped memory for lstm_model_forward.1']
    #allocation14 [shape = 'u8[1024]{0}', space=vmem, size = 0x400, scoped, tag = 'output window, operand 1, single buffered']
    %16 = vsyncpa [#allocation4], 0
    %17 = vsyncpa [#allocation7], 0
    %18 = vsyncpa [#allocation10], 0
    %19 = vsyncpa [#allocation13], 0
    %20 = vsyncpa [#allocation5], 0
    // Predicated region
    $region2: #{lstm_model_forward.1} parent=1 // pred_check
      _
    $region3: #{lstm_model_forward.1} parent=1 // pred_check_branch
      %22 = sbr.rel (0) target = $region5
    $region4: #{lstm_model_forward.1} parent=1 // pred_region
      _
    $region5: #{lstm_model_forward.1} parent=1 // pred_fallthru
      _
    // Predicated region
    $region6: #{lstm_model_forward.1} parent=1 // pred_check
      _
    $region7: #{lstm_model_forward.1} parent=1 // pred_check_branch
      %24 = sbr.rel (0) target = $region9
    $region8: #{lstm_model_forward.1} parent=1 // pred_region
      %s26 = ssub.s32 256, 256
      %27 = vsyncadd [#allocation4], %s26
      %s28 = sshll.u32 [#allocation3], 4
      %s29 = int_to_ptr.vmem [resolvable:$true] %s28
      %34 = dma.hbm_to_vmem [thread:$0]  %s1, 256, %s29, [#allocation4], 128, 128, 8
    $region9: #{lstm_model_forward.1} parent=1 // pred_fallthru
      _
    // Predicated region
    $region10: #{lstm_model_forward.1} parent=1 // pred_check
      _
    $region11: #{lstm_model_forward.1} parent=1 // pred_check_branch
      %36 = sbr.rel (0) target = $region13
    $region12: #{lstm_model_forward.1} parent=1 // pred_region
      _
    $region13: #{lstm_model_forward.1} parent=1 // pred_fallthru
      _
    // Predicated region
    $region14: #{lstm_model_forward.1} parent=1 // pred_check
      _
    $region15: #{lstm_model_forward.1} parent=1 // pred_check_branch
      %38 = sbr.rel (0) target = $region17
    $region16: #{lstm_model_forward.1} parent=1 // pred_region
      %s40 = ssub.s32 16, 16
      %41 = vsyncadd [#allocation7], %s40
      %s43 = sshll.u32 [#allocation6], 4
      %s44 = int_to_ptr.vmem [resolvable:$true] %s43
      %46 = dma.hbm_to_vmem [thread:$0]  %s3, 16, %s44, [#allocation7]
    $region17: #{lstm_model_forward.1} parent=1 // pred_fallthru
      _
    // Predicated region
    $region18: #{lstm_model_forward.1} parent=1 // pred_check
      _
    $region19: #{lstm_model_forward.1} parent=1 // pred_check_branch
      %48 = sbr.rel (0) target = $region21
    $region20: #{lstm_model_forward.1} parent=1 // pred_region
      %s50 = ssub.s32 512, 512
      %51 = vsyncadd [#allocation7], %s50
      %s52 = sshll.u32 [#allocation8], 4
      %s53 = int_to_ptr.vmem [resolvable:$true] %s52
      %58 = dma.hbm_to_vmem [thread:$0]  %s4, 512, %s53, [#allocation7], 128, 128, 8
    $region21: #{lstm_model_forward.1} parent=1 // pred_fallthru
      _
    // Predicated region
    $region22: #{lstm_model_forward.1} parent=1 // pred_check
      _
    $region23: #{lstm_model_forward.1} parent=1 // pred_check_branch
      %60 = sbr.rel (0) target = $region25
    $region24: #{lstm_model_forward.1} parent=1 // pred_region
      %s62 = ssub.s32 512, 512
      %63 = vsyncadd [#allocation10], %s62
      %s64 = sshll.u32 [#allocation9], 4
      %s65 = int_to_ptr.vmem [resolvable:$true] %s64
      %70 = dma.hbm_to_vmem [thread:$0]  %s5, 512, %s65, [#allocation10], 128, 128, 8
    $region25: #{lstm_model_forward.1} parent=1 // pred_fallthru
      _
    // Predicated region
    $region26: #{lstm_model_forward.1} parent=1 // pred_check
      _
    $region27: #{lstm_model_forward.1} parent=1 // pred_check_branch
      %72 = sbr.rel (0) target = $region29
    $region28: #{lstm_model_forward.1} parent=1 // pred_region
      %s74 = ssub.s32 16, 16
      %75 = vsyncadd [#allocation10], %s74
      %s77 = sshll.u32 [#allocation11], 4
      %s78 = int_to_ptr.vmem [resolvable:$true] %s77
      %80 = dma.hbm_to_vmem [thread:$0]  %s6, 16, %s78, [#allocation10]
    $region29: #{lstm_model_forward.1} parent=1 // pred_fallthru
      _
    // Predicated region
    $region30: #{lstm_model_forward.1} parent=1 // pred_check
      _
    $region31: #{lstm_model_forward.1} parent=1 // pred_check_branch
      %82 = sbr.rel (0) target = $region33
    $region32: #{lstm_model_forward.1} parent=1 // pred_region
      _
    $region33: #{lstm_model_forward.1} parent=1 // pred_fallthru
      _
    // Predicated region
    $region34: #{lstm_model_forward.1} parent=1 // pred_check
      _
    $region35: #{lstm_model_forward.1} parent=1 // pred_check_branch
      %84 = sbr.rel (0) target = $region37
    $region36: #{lstm_model_forward.1} parent=1 // pred_region
      %s86 = ssub.s32 16, 16
      %87 = vsyncadd [#allocation13], %s86
      %s89 = sshll.u32 [#allocation12], 4
      %s90 = int_to_ptr.vmem [resolvable:$true] %s89
      %92 = dma.hbm_to_vmem [thread:$0]  %s8, 16, %s90, [#allocation13]
    $region37: #{lstm_model_forward.1} parent=1 // pred_fallthru
      _
    // Predicated region
    $region38: #{lstm_model_forward.1} parent=1 // pred_check
      _
    $region39: #{lstm_model_forward.1} parent=1 // pred_check_branch
      %94 = sbr.rel (0) target = $region41
    $region40: #{lstm_model_forward.1} parent=1 // pred_region
      %95 = dma.done [#allocation4], 256
    $region41: #{lstm_model_forward.1} parent=1 // pred_fallthru
      _
    // Predicated region
    $region42: #{lstm_model_forward.1} parent=1 // pred_check
      _
    $region43: #{lstm_model_forward.1} parent=1 // pred_check_branch
      %97 = sbr.rel (0) target = $region45
    $region44: #{lstm_model_forward.1} parent=1 // pred_region
      %98 = dma.done [#allocation7], 16
    $region45: #{lstm_model_forward.1} parent=1 // pred_fallthru
      _
    // Predicated region
    $region46: #{lstm_model_forward.1} parent=1 // pred_check
      _
    $region47: #{lstm_model_forward.1} parent=1 // pred_check_branch
      %100 = sbr.rel (0) target = $region49
    $region48: #{lstm_model_forward.1} parent=1 // pred_region
      %101 = dma.done [#allocation7], 512
    $region49: #{lstm_model_forward.1} parent=1 // pred_fallthru
      _
    // Predicated region
    $region50: #{lstm_model_forward.1} parent=1 // pred_check
      _
    $region51: #{lstm_model_forward.1} parent=1 // pred_check_branch
      %103 = sbr.rel (0) target = $region53
    $region52: #{lstm_model_forward.1} parent=1 // pred_region
      %104 = dma.done [#allocation10], 512
    $region53: #{lstm_model_forward.1} parent=1 // pred_fallthru
      _
    // Predicated region
    $region54: #{lstm_model_forward.1} parent=1 // pred_check
      _
    $region55: #{lstm_model_forward.1} parent=1 // pred_check_branch
      %106 = sbr.rel (0) target = $region57
    $region56: #{lstm_model_forward.1} parent=1 // pred_region
      %107 = dma.done [#allocation10], 16
    $region57: #{lstm_model_forward.1} parent=1 // pred_fallthru
      _
    // Predicated region
    $region58: #{lstm_model_forward.1} parent=1 // pred_check
      _
    $region59: #{lstm_model_forward.1} parent=1 // pred_check_branch
      %109 = sbr.rel (0) target = $region61
    $region60: #{lstm_model_forward.1} parent=1 // pred_region
      %110 = dma.done [#allocation13], 16
    $region61: #{lstm_model_forward.1} parent=1 // pred_fallthru
      _
    %v111 = vld [vmem:[%s0] sm:$0xff]
    %v112 = vld [vmem:[%s0 + $0x8] sm:$0xff]
    %v113 = vld [vmem:[%s0 + $0x10] sm:$0xff]
    %v114 = vld [vmem:[#allocation3] sm:$0xff]
    %v115 = vld [vmem:[#allocation3 + $0x8] sm:$0xff]
    %v116 = vld [vmem:[%s2] sm:$0xff]
    %v117 = vld [vmem:[%s2 + $0x8] sm:$0xff]
    %v118 = vld [vmem:[%s2 + $0x10] sm:$0xff]
    %v119 = vld [vmem:[%s2 + $0x18] sm:$0xff]
    %v120 = vld [vmem:[#allocation6] sm:$0x1]
    %v122 = vlaneseq
    %v123 = vshrl.u32 %v122, 7
    %v124 = vsub.s32 0, %v123
    %v125 = vrot.slane %v120, %v124
    %vm127 = vcmask 130048
    %v129 = vsel %vm127, %v111, 0
    %v132 = vsel %vm127, %v112, 0
    %v135 = vsel %vm127, %v113, 0
    %137 = vmatprep.subr.mxu0 0.0
    %138 = vmatpush1.msra.mxu0 0.0
    %139 = vmatprep.subr.mxu0 0.0
    %140 = vmatpush1.msra.mxu0 0.0
    %141 = vmatprep.subr.mxu0 0.0
    %142 = vmatpush1.msra.mxu0 0.0
    %143 = vmatprep.subr.mxu0 0.0
    %144 = vmatpush1.msra.mxu0 0.0
    %145 = vmatprep.subr.mxu0 0.0
    %146 = vmatpush1.msra.mxu0 0.0
    %147 = vmatprep.subr.mxu0 0.0
    %148 = vmatpush1.msra.mxu0 0.0
    %149 = vmatprep.subr.mxu0 0.0
    %150 = vmatpush1.msra.mxu0 0.0
    %151 = vmatprep.subr.mxu0 0.0
    %152 = vmatpush1.msra.mxu0 0.0
    %153 = vmatprep.subr.mxu0 0.0
    %154 = vmatpush1.msra.mxu0 0.0
    %155 = vmatprep.subr.mxu0 0.0
    %156 = vmatpush1.msra.mxu0 0.0
    %157 = vmatprep.subr.mxu0 0.0
    %158 = vmatpush1.msra.mxu0 0.0
    %159 = vmatprep.subr.mxu0 0.0
    %160 = vmatpush1.msra.mxu0 0.0
    %161 = vmatprep.subr.mxu0 0.0
    %162 = vmatpush1.msra.mxu0 0.0
    %163 = vmatprep.subr.mxu0 0.0
    %164 = vmatpush1.msra.mxu0 0.0
    %165 = vmatprep.subr.mxu0 0.0
    %166 = vmatpush1.msra.mxu0 %v115
    %167 = vmatprep.subr.mxu0 0.0
    %168 = vmatpush1.msra.mxu0 %v114
    %169 = vmatprep.subr.mxu0 0.0
    %170 = vmatpush2.msra.mxu0 0.0
    %171 = vmatprep.subr.mxu0 0.0
    %172 = vmatpush2.msra.mxu0 0.0
    %173 = vmatprep.subr.mxu0 0.0
    %174 = vmatpush2.msra.mxu0 0.0
    %175 = vmatprep.subr.mxu0 0.0
    %176 = vmatpush2.msra.mxu0 0.0
    %177 = vmatprep.subr.mxu0 0.0
    %178 = vmatpush2.msra.mxu0 0.0
    %179 = vmatprep.subr.mxu0 0.0
    %180 = vmatpush2.msra.mxu0 0.0
    %181 = vmatprep.subr.mxu0 0.0
    %182 = vmatpush2.msra.mxu0 0.0
    %183 = vmatprep.subr.mxu0 0.0
    %184 = vmatpush2.msra.mxu0 0.0
    %185 = vmatprep.subr.mxu0 0.0
    %186 = vmatpush2.msra.mxu0 0.0
    %187 = vmatprep.subr.mxu0 0.0
    %188 = vmatpush2.msra.mxu0 0.0
    %189 = vmatprep.subr.mxu0 0.0
    %190 = vmatpush2.msra.mxu0 0.0
    %191 = vmatprep.subr.mxu0 0.0
    %192 = vmatpush2.msra.mxu0 0.0
    %193 = vmatprep.subr.mxu0 0.0
    %194 = vmatpush2.msra.mxu0 0.0
    %195 = vmatprep.subr.mxu0 0.0
    %196 = vmatpush2.msra.mxu0 0.0
    %197 = vmatprep.subr.mxu0 0.0
    %198 = vmatpush2.msra.mxu0 0.0
    %199 = vmatprep.subr.mxu0 0.0
    %200 = vmatpush2.msra.mxu0 0.0
    %201 = vmatprep.mubr.f32.mxu0 0.0
    %202 = vmatmul.mubr.f32.gmra.mxu0 %v129
    %v203 = vpop.f32.mrf.mxu0
    %v204 = vadd.f32 %v125, %v203
    %v205 = vpop.f32.mrf.mxu0
    %206 = vmatprep.mubr.f32.mxu0 0.0
    %207 = vmatmul.mubr.f32.gmra.mxu0 %v132
    %v208 = vpop.f32.mrf.mxu0
    %v209 = vadd.f32 %v125, %v208
    %v210 = vpop.f32.mrf.mxu0
    %211 = vmatprep.mubr.f32.mxu0 0.0
    %212 = vmatmul.mubr.f32.gmra.mxu0 %v135
    %v213 = vpop.f32.mrf.mxu0
    %v214 = vadd.f32 %v125, %v213
    %v215 = vpop.f32.mrf.mxu0
    %216 = vdwg.mxu0
    %vm217 = vcmask 261120
    %v219 = vsel %vm217, 0.0, 0
    %221 = vmatprep.subr.mxu0 0.0
    %222 = vmatpush1.msra.mxu0 0.0
    %223 = vmatprep.subr.mxu0 0.0
    %224 = vmatpush1.msra.mxu0 0.0
    %225 = vmatprep.subr.mxu0 0.0
    %226 = vmatpush1.msra.mxu0 0.0
    %227 = vmatprep.subr.mxu0 0.0
    %228 = vmatpush1.msra.mxu0 0.0
    %229 = vmatprep.subr.mxu0 0.0
    %230 = vmatpush1.msra.mxu0 0.0
    %231 = vmatprep.subr.mxu0 0.0
    %232 = vmatpush1.msra.mxu0 0.0
    %233 = vmatprep.subr.mxu0 0.0
    %234 = vmatpush1.msra.mxu0 0.0
    %235 = vmatprep.subr.mxu0 0.0
    %236 = vmatpush1.msra.mxu0 0.0
    %237 = vmatprep.subr.mxu0 0.0
    %238 = vmatpush1.msra.mxu0 0.0
    %239 = vmatprep.subr.mxu0 0.0
    %240 = vmatpush1.msra.mxu0 0.0
    %241 = vmatprep.subr.mxu0 0.0
    %242 = vmatpush1.msra.mxu0 0.0
    %243 = vmatprep.subr.mxu0 0.0
    %244 = vmatpush1.msra.mxu0 0.0
    %245 = vmatprep.subr.mxu0 0.0
    %246 = vmatpush1.msra.mxu0 %v119
    %247 = vmatprep.subr.mxu0 0.0
    %248 = vmatpush1.msra.mxu0 %v118
    %249 = vmatprep.subr.mxu0 0.0
    %250 = vmatpush1.msra.mxu0 %v117
    %251 = vmatprep.subr.mxu0 0.0
    %252 = vmatpush1.msra.mxu0 %v116
    %253 = vmatprep.subr.mxu0 0.0
    %254 = vmatpush2.msra.mxu0 0.0
    %255 = vmatprep.subr.mxu0 0.0
    %256 = vmatpush2.msra.mxu0 0.0
    %257 = vmatprep.subr.mxu0 0.0
    %258 = vmatpush2.msra.mxu0 0.0
    %259 = vmatprep.subr.mxu0 0.0
    %260 = vmatpush2.msra.mxu0 0.0
    %261 = vmatprep.subr.mxu0 0.0
    %262 = vmatpush2.msra.mxu0 0.0
    %263 = vmatprep.subr.mxu0 0.0
    %264 = vmatpush2.msra.mxu0 0.0
    %265 = vmatprep.subr.mxu0 0.0
    %266 = vmatpush2.msra.mxu0 0.0
    %267 = vmatprep.subr.mxu0 0.0
    %268 = vmatpush2.msra.mxu0 0.0
    %269 = vmatprep.subr.mxu0 0.0
    %270 = vmatpush2.msra.mxu0 0.0
    %271 = vmatprep.subr.mxu0 0.0
    %272 = vmatpush2.msra.mxu0 0.0
    %273 = vmatprep.subr.mxu0 0.0
    %274 = vmatpush2.msra.mxu0 0.0
    %275 = vmatprep.subr.mxu0 0.0
    %276 = vmatpush2.msra.mxu0 0.0
    %277 = vmatprep.subr.mxu0 0.0
    %278 = vmatpush2.msra.mxu0 0.0
    %279 = vmatprep.subr.mxu0 0.0
    %280 = vmatpush2.msra.mxu0 0.0
    %281 = vmatprep.subr.mxu0 0.0
    %282 = vmatpush2.msra.mxu0 0.0
    %283 = vmatprep.subr.mxu0 0.0
    %284 = vmatpush2.msra.mxu0 0.0
    %285 = vmatprep.mubr.f32.mxu0 0.0
    %286 = vmatmul.mubr.f32.gmra.mxu0 %v219
    %v287 = vpop.f32.mrf.mxu0
    %v288 = vadd.f32 0.0, %v287
    %v289 = vpop.f32.mrf.mxu0
    %290 = vdwg.mxu0
    %v291 = vadd.f32 %v204, %v288
    %v292 = vxor.u32 %v291, 2147483648
    %v293 = vmul.f32 %v292, 1.442695
    %v294 = vpow.pop %v293
    %v295 = vadd.f32 %v294, 1.0
    %v296 = vrcp.pop %v295
    %v297 = vmul.f32 1.0, %v296
    %v298 = vtanh.pop %v291
    %v299 = vmul.f32 %v297, 0.0
    %301 = vrot.lane.b32.xlu0 %v298, 64
    %v302 = vpop.permute.xlu0 %301
    %v304 = vmul.f32 %v297, %v302
    %306 = vrot.lane.b32.xlu0 %v304, 32
    %v307 = vpop.permute.xlu0 %306
    %v309 = vadd.f32 %v299, %v307
    %v310 = vtanh.pop %v309
    %312 = vrot.lane.b32.xlu0 %v310, 64
    %v313 = vpop.permute.xlu0 %312
    %v315 = vmul.f32 %v297, %v313
    %317 = vrot.lane.b32.xlu0 %v315, 32
    %v318 = vpop.permute.xlu0 %317
    %vm320 = vcmask 254976
    %321 = vst.msk [vmem:[#allocation2] sm:$0x3] %vm320, %v318
    %v322 = vsel %vm217, %v318, 0
    %324 = vmatprep.subr.mxu0 0.0
    %325 = vmatpush1.msra.mxu0 0.0
    %326 = vmatprep.subr.mxu0 0.0
    %327 = vmatpush1.msra.mxu0 0.0
    %328 = vmatprep.subr.mxu0 0.0
    %329 = vmatpush1.msra.mxu0 0.0
    %330 = vmatprep.subr.mxu0 0.0
    %331 = vmatpush1.msra.mxu0 0.0
    %332 = vmatprep.subr.mxu0 0.0
    %333 = vmatpush1.msra.mxu0 0.0
    %334 = vmatprep.subr.mxu0 0.0
    %335 = vmatpush1.msra.mxu0 0.0
    %336 = vmatprep.subr.mxu0 0.0
    %337 = vmatpush1.msra.mxu0 0.0
    %338 = vmatprep.subr.mxu0 0.0
    %339 = vmatpush1.msra.mxu0 0.0
    %340 = vmatprep.subr.mxu0 0.0
    %341 = vmatpush1.msra.mxu0 0.0
    %342 = vmatprep.subr.mxu0 0.0
    %343 = vmatpush1.msra.mxu0 0.0
    %344 = vmatprep.subr.mxu0 0.0
    %345 = vmatpush1.msra.mxu0 0.0
    %346 = vmatprep.subr.mxu0 0.0
    %347 = vmatpush1.msra.mxu0 0.0
    %348 = vmatprep.subr.mxu0 0.0
    %349 = vmatpush1.msra.mxu0 %v119
    %350 = vmatprep.subr.mxu0 0.0
    %351 = vmatpush1.msra.mxu0 %v118
    %352 = vmatprep.subr.mxu0 0.0
    %353 = vmatpush1.msra.mxu0 %v117
    %354 = vmatprep.subr.mxu0 0.0
    %355 = vmatpush1.msra.mxu0 %v116
    %356 = vmatprep.subr.mxu0 0.0
    %357 = vmatpush2.msra.mxu0 0.0
    %358 = vmatprep.subr.mxu0 0.0
    %359 = vmatpush2.msra.mxu0 0.0
    %360 = vmatprep.subr.mxu0 0.0
    %361 = vmatpush2.msra.mxu0 0.0
    %362 = vmatprep.subr.mxu0 0.0
    %363 = vmatpush2.msra.mxu0 0.0
    %364 = vmatprep.subr.mxu0 0.0
    %365 = vmatpush2.msra.mxu0 0.0
    %366 = vmatprep.subr.mxu0 0.0
    %367 = vmatpush2.msra.mxu0 0.0
    %368 = vmatprep.subr.mxu0 0.0
    %369 = vmatpush2.msra.mxu0 0.0
    %370 = vmatprep.subr.mxu0 0.0
    %371 = vmatpush2.msra.mxu0 0.0
    %372 = vmatprep.subr.mxu0 0.0
    %373 = vmatpush2.msra.mxu0 0.0
    %374 = vmatprep.subr.mxu0 0.0
    %375 = vmatpush2.msra.mxu0 0.0
    %376 = vmatprep.subr.mxu0 0.0
    %377 = vmatpush2.msra.mxu0 0.0
    %378 = vmatprep.subr.mxu0 0.0
    %379 = vmatpush2.msra.mxu0 0.0
    %380 = vmatprep.subr.mxu0 0.0
    %381 = vmatpush2.msra.mxu0 0.0
    %382 = vmatprep.subr.mxu0 0.0
    %383 = vmatpush2.msra.mxu0 0.0
    %384 = vmatprep.subr.mxu0 0.0
    %385 = vmatpush2.msra.mxu0 0.0
    %386 = vmatprep.subr.mxu0 0.0
    %387 = vmatpush2.msra.mxu0 0.0
    %388 = vmatprep.mubr.f32.mxu0 0.0
    %389 = vmatmul.mubr.f32.gmra.mxu0 %v322
    %v390 = vpop.f32.mrf.mxu0
    %v391 = vadd.f32 0.0, %v390
    %v392 = vpop.f32.mrf.mxu0
    %393 = vdwg.mxu0
    %v395 = vrot.slane %v391, 6
    %v397 = vadd.f32 %v204, %v395
    %v398 = vxor.u32 %v397, 2147483648
    %v399 = vmul.f32 %v398, 1.442695
    %v400 = vpow.pop %v399
    %v401 = vadd.f32 %v400, 1.0
    %v402 = vrcp.pop %v401
    %v403 = vmul.f32 1.0, %v402
    %v404 = vtanh.pop %v397
    %v406 = vrot.slane %v309, 6
    %v408 = vmul.f32 %v403, %v406
    %410 = vrot.lane.b32.xlu0 %v404, 64
    %v411 = vpop.permute.xlu0 %410
    %v413 = vmul.f32 %v403, %v411
    %415 = vrot.lane.b32.xlu0 %v413, 32
    %v416 = vpop.permute.xlu0 %415
    %v418 = vadd.f32 %v408, %v416
    %v419 = vtanh.pop %v418
    %421 = vrot.lane.b32.xlu0 %v419, 64
    %v422 = vpop.permute.xlu0 %421
    %v424 = vmul.f32 %v403, %v422
    %426 = vrot.lane.b32.xlu0 %v424, 32
    %v427 = vpop.permute.xlu0 %426
    %vm429 = vcmask 257026
    %430 = vst.msk [vmem:[#allocation2] sm:$0xc] %vm429, %v427
    %v431 = vrot.slane %v424, 2
    %432 = vrot.lane.b32.xlu0 %v431, 32
    %v433 = vpop.permute.xlu0 %432
    %v434 = vsel %vm217, %v433, 0
    %436 = vmatprep.subr.mxu0 0.0
    %437 = vmatpush1.msra.mxu0 0.0
    %438 = vmatprep.subr.mxu0 0.0
    %439 = vmatpush1.msra.mxu0 0.0
    %440 = vmatprep.subr.mxu0 0.0
    %441 = vmatpush1.msra.mxu0 0.0
    %442 = vmatprep.subr.mxu0 0.0
    %443 = vmatpush1.msra.mxu0 0.0
    %444 = vmatprep.subr.mxu0 0.0
    %445 = vmatpush1.msra.mxu0 0.0
    %446 = vmatprep.subr.mxu0 0.0
    %447 = vmatpush1.msra.mxu0 0.0
    %448 = vmatprep.subr.mxu0 0.0
    %449 = vmatpush1.msra.mxu0 0.0
    %450 = vmatprep.subr.mxu0 0.0
    %451 = vmatpush1.msra.mxu0 0.0
    %452 = vmatprep.subr.mxu0 0.0
    %453 = vmatpush1.msra.mxu0 0.0
    %454 = vmatprep.subr.mxu0 0.0
    %455 = vmatpush1.msra.mxu0 0.0
    %456 = vmatprep.subr.mxu0 0.0
    %457 = vmatpush1.msra.mxu0 0.0
    %458 = vmatprep.subr.mxu0 0.0
    %459 = vmatpush1.msra.mxu0 0.0
    %460 = vmatprep.subr.mxu0 0.0
    %461 = vmatpush1.msra.mxu0 %v119
    %462 = vmatprep.subr.mxu0 0.0
    %463 = vmatpush1.msra.mxu0 %v118
    %464 = vmatprep.subr.mxu0 0.0
    %465 = vmatpush1.msra.mxu0 %v117
    %466 = vmatprep.subr.mxu0 0.0
    %467 = vmatpush1.msra.mxu0 %v116
    %468 = vmatprep.subr.mxu0 0.0
    %469 = vmatpush2.msra.mxu0 0.0
    %470 = vmatprep.subr.mxu0 0.0
    %471 = vmatpush2.msra.mxu0 0.0
    %472 = vmatprep.subr.mxu0 0.0
    %473 = vmatpush2.msra.mxu0 0.0
    %474 = vmatprep.subr.mxu0 0.0
    %475 = vmatpush2.msra.mxu0 0.0
    %476 = vmatprep.subr.mxu0 0.0
    %477 = vmatpush2.msra.mxu0 0.0
    %478 = vmatprep.subr.mxu0 0.0
    %479 = vmatpush2.msra.mxu0 0.0
    %480 = vmatprep.subr.mxu0 0.0
    %481 = vmatpush2.msra.mxu0 0.0
    %482 = vmatprep.subr.mxu0 0.0
    %483 = vmatpush2.msra.mxu0 0.0
    %484 = vmatprep.subr.mxu0 0.0
    %485 = vmatpush2.msra.mxu0 0.0
    %486 = vmatprep.subr.mxu0 0.0
    %487 = vmatpush2.msra.mxu0 0.0
    %488 = vmatprep.subr.mxu0 0.0
    %489 = vmatpush2.msra.mxu0 0.0
    %490 = vmatprep.subr.mxu0 0.0
    %491 = vmatpush2.msra.mxu0 0.0
    %492 = vmatprep.subr.mxu0 0.0
    %493 = vmatpush2.msra.mxu0 0.0
    %494 = vmatprep.subr.mxu0 0.0
    %495 = vmatpush2.msra.mxu0 0.0
    %496 = vmatprep.subr.mxu0 0.0
    %497 = vmatpush2.msra.mxu0 0.0
    %498 = vmatprep.subr.mxu0 0.0
    %499 = vmatpush2.msra.mxu0 0.0
    %500 = vmatprep.mubr.f32.mxu0 0.0
    %501 = vmatmul.mubr.f32.gmra.mxu0 %v434
    %v502 = vpop.f32.mrf.mxu0
    %v503 = vadd.f32 0.0, %v502
    %v504 = vpop.f32.mrf.mxu0
    %505 = vdwg.mxu0
    %v507 = vrot.slane %v503, 4
    %v509 = vadd.f32 %v204, %v507
    %v510 = vxor.u32 %v509, 2147483648
    %v511 = vmul.f32 %v510, 1.442695
    %v512 = vpow.pop %v511
    %v513 = vadd.f32 %v512, 1.0
    %v514 = vrcp.pop %v513
    %v515 = vmul.f32 1.0, %v514
    %v516 = vtanh.pop %v509
    %v518 = vrot.slane %v418, 6
    %v520 = vmul.f32 %v515, %v518
    %522 = vrot.lane.b32.xlu0 %v516, 64
    %v523 = vpop.permute.xlu0 %522
    %v525 = vmul.f32 %v515, %v523
    %527 = vrot.lane.b32.xlu0 %v525, 32
    %v528 = vpop.permute.xlu0 %527
    %v530 = vadd.f32 %v520, %v528
    %v531 = vtanh.pop %v530
    %533 = vrot.lane.b32.xlu0 %v531, 64
    %v534 = vpop.permute.xlu0 %533
    %v536 = vmul.f32 %v515, %v534
    %538 = vrot.lane.b32.xlu0 %v536, 32
    %v539 = vpop.permute.xlu0 %538
    %vm541 = vcmask 259076
    %542 = vst.msk [vmem:[#allocation2] sm:$0x30] %vm541, %v539
    %v543 = vrot.slane %v536, 4
    %544 = vrot.lane.b32.xlu0 %v543, 32
    %v545 = vpop.permute.xlu0 %544
    %v546 = vsel %vm217, %v545, 0
    %548 = vmatprep.subr.mxu0 0.0
    %549 = vmatpush1.msra.mxu0 0.0
    %550 = vmatprep.subr.mxu0 0.0
    %551 = vmatpush1.msra.mxu0 0.0
    %552 = vmatprep.subr.mxu0 0.0
    %553 = vmatpush1.msra.mxu0 0.0
    %554 = vmatprep.subr.mxu0 0.0
    %555 = vmatpush1.msra.mxu0 0.0
    %556 = vmatprep.subr.mxu0 0.0
    %557 = vmatpush1.msra.mxu0 0.0
    %558 = vmatprep.subr.mxu0 0.0
    %559 = vmatpush1.msra.mxu0 0.0
    %560 = vmatprep.subr.mxu0 0.0
    %561 = vmatpush1.msra.mxu0 0.0
    %562 = vmatprep.subr.mxu0 0.0
    %563 = vmatpush1.msra.mxu0 0.0
    %564 = vmatprep.subr.mxu0 0.0
    %565 = vmatpush1.msra.mxu0 0.0
    %566 = vmatprep.subr.mxu0 0.0
    %567 = vmatpush1.msra.mxu0 0.0
    %568 = vmatprep.subr.mxu0 0.0
    %569 = vmatpush1.msra.mxu0 0.0
    %570 = vmatprep.subr.mxu0 0.0
    %571 = vmatpush1.msra.mxu0 0.0
    %572 = vmatprep.subr.mxu0 0.0
    %573 = vmatpush1.msra.mxu0 %v119
    %574 = vmatprep.subr.mxu0 0.0
    %575 = vmatpush1.msra.mxu0 %v118
    %576 = vmatprep.subr.mxu0 0.0
    %577 = vmatpush1.msra.mxu0 %v117
    %578 = vmatprep.subr.mxu0 0.0
    %579 = vmatpush1.msra.mxu0 %v116
    %580 = vmatprep.subr.mxu0 0.0
    %581 = vmatpush2.msra.mxu0 0.0
    %582 = vmatprep.subr.mxu0 0.0
    %583 = vmatpush2.msra.mxu0 0.0
    %584 = vmatprep.subr.mxu0 0.0
    %585 = vmatpush2.msra.mxu0 0.0
    %586 = vmatprep.subr.mxu0 0.0
    %587 = vmatpush2.msra.mxu0 0.0
    %588 = vmatprep.subr.mxu0 0.0
    %589 = vmatpush2.msra.mxu0 0.0
    %590 = vmatprep.subr.mxu0 0.0
    %591 = vmatpush2.msra.mxu0 0.0
    %592 = vmatprep.subr.mxu0 0.0
    %593 = vmatpush2.msra.mxu0 0.0
    %594 = vmatprep.subr.mxu0 0.0
    %595 = vmatpush2.msra.mxu0 0.0
    %596 = vmatprep.subr.mxu0 0.0
    %597 = vmatpush2.msra.mxu0 0.0
    %598 = vmatprep.subr.mxu0 0.0
    %599 = vmatpush2.msra.mxu0 0.0
    %600 = vmatprep.subr.mxu0 0.0
    %601 = vmatpush2.msra.mxu0 0.0
    %602 = vmatprep.subr.mxu0 0.0
    %603 = vmatpush2.msra.mxu0 0.0
    %604 = vmatprep.subr.mxu0 0.0
    %605 = vmatpush2.msra.mxu0 0.0
    %606 = vmatprep.subr.mxu0 0.0
    %607 = vmatpush2.msra.mxu0 0.0
    %608 = vmatprep.subr.mxu0 0.0
    %609 = vmatpush2.msra.mxu0 0.0
    %610 = vmatprep.subr.mxu0 0.0
    %611 = vmatpush2.msra.mxu0 0.0
    %612 = vmatprep.mubr.f32.mxu0 0.0
    %613 = vmatmul.mubr.f32.gmra.mxu0 %v546
    %v614 = vpop.f32.mrf.mxu0
    %v615 = vadd.f32 0.0, %v614
    %v616 = vpop.f32.mrf.mxu0
    %617 = vdwg.mxu0
    %v619 = vrot.slane %v615, 2
    %v621 = vadd.f32 %v204, %v619
    %v622 = vxor.u32 %v621, 2147483648
    %v623 = vmul.f32 %v622, 1.442695
    %v624 = vpow.pop %v623
    %v625 = vadd.f32 %v624, 1.0
    %v626 = vrcp.pop %v625
    %v627 = vmul.f32 1.0, %v626
    %v628 = vtanh.pop %v621
    %v630 = vrot.slane %v530, 6
    %v632 = vmul.f32 %v627, %v630
    %634 = vrot.lane.b32.xlu0 %v628, 64
    %v635 = vpop.permute.xlu0 %634
    %v637 = vmul.f32 %v627, %v635
    %639 = vrot.lane.b32.xlu0 %v637, 32
    %v640 = vpop.permute.xlu0 %639
    %v642 = vadd.f32 %v632, %v640
    %v643 = vtanh.pop %v642
    %645 = vrot.lane.b32.xlu0 %v643, 64
    %v646 = vpop.permute.xlu0 %645
    %v648 = vmul.f32 %v627, %v646
    %650 = vrot.lane.b32.xlu0 %v648, 32
    %v651 = vpop.permute.xlu0 %650
    %vm653 = vcmask 261126
    %654 = vst.msk [vmem:[#allocation2] sm:$0xc0] %vm653, %v651
    %v655 = vrot.slane %v648, 6
    %656 = vrot.lane.b32.xlu0 %v655, 32
    %v657 = vpop.permute.xlu0 %656
    %v658 = vsel %vm217, %v657, 0
    %660 = vmatprep.subr.mxu0 0.0
    %661 = vmatpush1.msra.mxu0 0.0
    %662 = vmatprep.subr.mxu0 0.0
    %663 = vmatpush1.msra.mxu0 0.0
    %664 = vmatprep.subr.mxu0 0.0
    %665 = vmatpush1.msra.mxu0 0.0
    %666 = vmatprep.subr.mxu0 0.0
    %667 = vmatpush1.msra.mxu0 0.0
    %668 = vmatprep.subr.mxu0 0.0
    %669 = vmatpush1.msra.mxu0 0.0
    %670 = vmatprep.subr.mxu0 0.0
    %671 = vmatpush1.msra.mxu0 0.0
    %672 = vmatprep.subr.mxu0 0.0
    %673 = vmatpush1.msra.mxu0 0.0
    %674 = vmatprep.subr.mxu0 0.0
    %675 = vmatpush1.msra.mxu0 0.0
    %676 = vmatprep.subr.mxu0 0.0
    %677 = vmatpush1.msra.mxu0 0.0
    %678 = vmatprep.subr.mxu0 0.0
    %679 = vmatpush1.msra.mxu0 0.0
    %680 = vmatprep.subr.mxu0 0.0
    %681 = vmatpush1.msra.mxu0 0.0
    %682 = vmatprep.subr.mxu0 0.0
    %683 = vmatpush1.msra.mxu0 0.0
    %684 = vmatprep.subr.mxu0 0.0
    %685 = vmatpush1.msra.mxu0 %v119
    %686 = vmatprep.subr.mxu0 0.0
    %687 = vmatpush1.msra.mxu0 %v118
    %688 = vmatprep.subr.mxu0 0.0
    %689 = vmatpush1.msra.mxu0 %v117
    %690 = vmatprep.subr.mxu0 0.0
    %691 = vmatpush1.msra.mxu0 %v116
    %692 = vmatprep.subr.mxu0 0.0
    %693 = vmatpush2.msra.mxu0 0.0
    %694 = vmatprep.subr.mxu0 0.0
    %695 = vmatpush2.msra.mxu0 0.0
    %696 = vmatprep.subr.mxu0 0.0
    %697 = vmatpush2.msra.mxu0 0.0
    %698 = vmatprep.subr.mxu0 0.0
    %699 = vmatpush2.msra.mxu0 0.0
    %700 = vmatprep.subr.mxu0 0.0
    %701 = vmatpush2.msra.mxu0 0.0
    %702 = vmatprep.subr.mxu0 0.0
    %703 = vmatpush2.msra.mxu0 0.0
    %704 = vmatprep.subr.mxu0 0.0
    %705 = vmatpush2.msra.mxu0 0.0
    %706 = vmatprep.subr.mxu0 0.0
    %707 = vmatpush2.msra.mxu0 0.0
    %708 = vmatprep.subr.mxu0 0.0
    %709 = vmatpush2.msra.mxu0 0.0
    %710 = vmatprep.subr.mxu0 0.0
    %711 = vmatpush2.msra.mxu0 0.0
    %712 = vmatprep.subr.mxu0 0.0
    %713 = vmatpush2.msra.mxu0 0.0
    %714 = vmatprep.subr.mxu0 0.0
    %715 = vmatpush2.msra.mxu0 0.0
    %716 = vmatprep.subr.mxu0 0.0
    %717 = vmatpush2.msra.mxu0 0.0
    %718 = vmatprep.subr.mxu0 0.0
    %719 = vmatpush2.msra.mxu0 0.0
    %720 = vmatprep.subr.mxu0 0.0
    %721 = vmatpush2.msra.mxu0 0.0
    %722 = vmatprep.subr.mxu0 0.0
    %723 = vmatpush2.msra.mxu0 0.0
    %724 = vmatprep.mubr.f32.mxu0 0.0
    %725 = vmatmul.mubr.f32.gmra.mxu0 %v658
    %v726 = vpop.f32.mrf.mxu0
    %v727 = vadd.f32 0.0, %v726
    %v728 = vpop.f32.mrf.mxu0
    %729 = vdwg.mxu0
    %v730 = vadd.f32 %v209, %v727
    %v731 = vxor.u32 %v730, 2147483648
    %v732 = vmul.f32 %v731, 1.442695
    %v733 = vpow.pop %v732
    %v734 = vadd.f32 %v733, 1.0
    %v735 = vrcp.pop %v734
    %v736 = vmul.f32 1.0, %v735
    %v737 = vtanh.pop %v730
    %v739 = vrot.slane %v642, 6
    %v741 = vmul.f32 %v736, %v739
    %743 = vrot.lane.b32.xlu0 %v737, 64
    %v744 = vpop.permute.xlu0 %743
    %v746 = vmul.f32 %v736, %v744
    %748 = vrot.lane.b32.xlu0 %v746, 32
    %v749 = vpop.permute.xlu0 %748
    %v751 = vadd.f32 %v741, %v749
    %v752 = vtanh.pop %v751
    %754 = vrot.lane.b32.xlu0 %v752, 64
    %v755 = vpop.permute.xlu0 %754
    %v757 = vmul.f32 %v736, %v755
    %759 = vrot.lane.b32.xlu0 %v757, 32
    %v760 = vpop.permute.xlu0 %759
    %762 = vst.msk [vmem:[#allocation2 + $0x8] sm:$0x3] %vm320, %v760
    %v763 = vsel %vm217, %v760, 0
    %765 = vmatprep.subr.mxu0 0.0
    %766 = vmatpush1.msra.mxu0 0.0
    %767 = vmatprep.subr.mxu0 0.0
    %768 = vmatpush1.msra.mxu0 0.0
    %769 = vmatprep.subr.mxu0 0.0
    %770 = vmatpush1.msra.mxu0 0.0
    %771 = vmatprep.subr.mxu0 0.0
    %772 = vmatpush1.msra.mxu0 0.0
    %773 = vmatprep.subr.mxu0 0.0
    %774 = vmatpush1.msra.mxu0 0.0
    %775 = vmatprep.subr.mxu0 0.0
    %776 = vmatpush1.msra.mxu0 0.0
    %777 = vmatprep.subr.mxu0 0.0
    %778 = vmatpush1.msra.mxu0 0.0
    %779 = vmatprep.subr.mxu0 0.0
    %780 = vmatpush1.msra.mxu0 0.0
    %781 = vmatprep.subr.mxu0 0.0
    %782 = vmatpush1.msra.mxu0 0.0
    %783 = vmatprep.subr.mxu0 0.0
    %784 = vmatpush1.msra.mxu0 0.0
    %785 = vmatprep.subr.mxu0 0.0
    %786 = vmatpush1.msra.mxu0 0.0
    %787 = vmatprep.subr.mxu0 0.0
    %788 = vmatpush1.msra.mxu0 0.0
    %789 = vmatprep.subr.mxu0 0.0
    %790 = vmatpush1.msra.mxu0 %v119
    %791 = vmatprep.subr.mxu0 0.0
    %792 = vmatpush1.msra.mxu0 %v118
    %793 = vmatprep.subr.mxu0 0.0
    %794 = vmatpush1.msra.mxu0 %v117
    %795 = vmatprep.subr.mxu0 0.0
    %796 = vmatpush1.msra.mxu0 %v116
    %797 = vmatprep.subr.mxu0 0.0
    %798 = vmatpush2.msra.mxu0 0.0
    %799 = vmatprep.subr.mxu0 0.0
    %800 = vmatpush2.msra.mxu0 0.0
    %801 = vmatprep.subr.mxu0 0.0
    %802 = vmatpush2.msra.mxu0 0.0
    %803 = vmatprep.subr.mxu0 0.0
    %804 = vmatpush2.msra.mxu0 0.0
    %805 = vmatprep.subr.mxu0 0.0
    %806 = vmatpush2.msra.mxu0 0.0
    %807 = vmatprep.subr.mxu0 0.0
    %808 = vmatpush2.msra.mxu0 0.0
    %809 = vmatprep.subr.mxu0 0.0
    %810 = vmatpush2.msra.mxu0 0.0
    %811 = vmatprep.subr.mxu0 0.0
    %812 = vmatpush2.msra.mxu0 0.0
    %813 = vmatprep.subr.mxu0 0.0
    %814 = vmatpush2.msra.mxu0 0.0
    %815 = vmatprep.subr.mxu0 0.0
    %816 = vmatpush2.msra.mxu0 0.0
    %817 = vmatprep.subr.mxu0 0.0
    %818 = vmatpush2.msra.mxu0 0.0
    %819 = vmatprep.subr.mxu0 0.0
    %820 = vmatpush2.msra.mxu0 0.0
    %821 = vmatprep.subr.mxu0 0.0
    %822 = vmatpush2.msra.mxu0 0.0
    %823 = vmatprep.subr.mxu0 0.0
    %824 = vmatpush2.msra.mxu0 0.0
    %825 = vmatprep.subr.mxu0 0.0
    %826 = vmatpush2.msra.mxu0 0.0
    %827 = vmatprep.subr.mxu0 0.0
    %828 = vmatpush2.msra.mxu0 0.0
    %829 = vmatprep.mubr.f32.mxu0 0.0
    %830 = vmatmul.mubr.f32.gmra.mxu0 %v763
    %v831 = vpop.f32.mrf.mxu0
    %v832 = vadd.f32 0.0, %v831
    %v833 = vpop.f32.mrf.mxu0
    %834 = vdwg.mxu0
    %v836 = vrot.slane %v832, 6
    %v838 = vadd.f32 %v209, %v836
    %v839 = vxor.u32 %v838, 2147483648
    %v840 = vmul.f32 %v839, 1.442695
    %v841 = vpow.pop %v840
    %v842 = vadd.f32 %v841, 1.0
    %v843 = vrcp.pop %v842
    %v844 = vmul.f32 1.0, %v843
    %v845 = vtanh.pop %v838
    %v847 = vrot.slane %v751, 6
    %v849 = vmul.f32 %v844, %v847
    %851 = vrot.lane.b32.xlu0 %v845, 64
    %v852 = vpop.permute.xlu0 %851
    %v854 = vmul.f32 %v844, %v852
    %856 = vrot.lane.b32.xlu0 %v854, 32
    %v857 = vpop.permute.xlu0 %856
    %v859 = vadd.f32 %v849, %v857
    %v860 = vtanh.pop %v859
    %862 = vrot.lane.b32.xlu0 %v860, 64
    %v863 = vpop.permute.xlu0 %862
    %v865 = vmul.f32 %v844, %v863
    %867 = vrot.lane.b32.xlu0 %v865, 32
    %v868 = vpop.permute.xlu0 %867
    %870 = vst.msk [vmem:[#allocation2 + $0x8] sm:$0xc] %vm429, %v868
    %v871 = vrot.slane %v865, 2
    %872 = vrot.lane.b32.xlu0 %v871, 32
    %v873 = vpop.permute.xlu0 %872
    %v874 = vsel %vm217, %v873, 0
    %876 = vmatprep.subr.mxu0 0.0
    %877 = vmatpush1.msra.mxu0 0.0
    %878 = vmatprep.subr.mxu0 0.0
    %879 = vmatpush1.msra.mxu0 0.0
    %880 = vmatprep.subr.mxu0 0.0
    %881 = vmatpush1.msra.mxu0 0.0
    %882 = vmatprep.subr.mxu0 0.0
    %883 = vmatpush1.msra.mxu0 0.0
    %884 = vmatprep.subr.mxu0 0.0
    %885 = vmatpush1.msra.mxu0 0.0
    %886 = vmatprep.subr.mxu0 0.0
    %887 = vmatpush1.msra.mxu0 0.0
    %888 = vmatprep.subr.mxu0 0.0
    %889 = vmatpush1.msra.mxu0 0.0
    %890 = vmatprep.subr.mxu0 0.0
    %891 = vmatpush1.msra.mxu0 0.0
    %892 = vmatprep.subr.mxu0 0.0
    %893 = vmatpush1.msra.mxu0 0.0
    %894 = vmatprep.subr.mxu0 0.0
    %895 = vmatpush1.msra.mxu0 0.0
    %896 = vmatprep.subr.mxu0 0.0
    %897 = vmatpush1.msra.mxu0 0.0
    %898 = vmatprep.subr.mxu0 0.0
    %899 = vmatpush1.msra.mxu0 0.0
    %900 = vmatprep.subr.mxu0 0.0
    %901 = vmatpush1.msra.mxu0 %v119
    %902 = vmatprep.subr.mxu0 0.0
    %903 = vmatpush1.msra.mxu0 %v118
    %904 = vmatprep.subr.mxu0 0.0
    %905 = vmatpush1.msra.mxu0 %v117
    %906 = vmatprep.subr.mxu0 0.0
    %907 = vmatpush1.msra.mxu0 %v116
    %908 = vmatprep.subr.mxu0 0.0
    %909 = vmatpush2.msra.mxu0 0.0
    %910 = vmatprep.subr.mxu0 0.0
    %911 = vmatpush2.msra.mxu0 0.0
    %912 = vmatprep.subr.mxu0 0.0
    %913 = vmatpush2.msra.mxu0 0.0
    %914 = vmatprep.subr.mxu0 0.0
    %915 = vmatpush2.msra.mxu0 0.0
    %916 = vmatprep.subr.mxu0 0.0
    %917 = vmatpush2.msra.mxu0 0.0
    %918 = vmatprep.subr.mxu0 0.0
    %919 = vmatpush2.msra.mxu0 0.0
    %920 = vmatprep.subr.mxu0 0.0
    %921 = vmatpush2.msra.mxu0 0.0
    %922 = vmatprep.subr.mxu0 0.0
    %923 = vmatpush2.msra.mxu0 0.0
    %924 = vmatprep.subr.mxu0 0.0
    %925 = vmatpush2.msra.mxu0 0.0
    %926 = vmatprep.subr.mxu0 0.0
    %927 = vmatpush2.msra.mxu0 0.0
    %928 = vmatprep.subr.mxu0 0.0
    %929 = vmatpush2.msra.mxu0 0.0
    %930 = vmatprep.subr.mxu0 0.0
    %931 = vmatpush2.msra.mxu0 0.0
    %932 = vmatprep.subr.mxu0 0.0
    %933 = vmatpush2.msra.mxu0 0.0
    %934 = vmatprep.subr.mxu0 0.0
    %935 = vmatpush2.msra.mxu0 0.0
    %936 = vmatprep.subr.mxu0 0.0
    %937 = vmatpush2.msra.mxu0 0.0
    %938 = vmatprep.subr.mxu0 0.0
    %939 = vmatpush2.msra.mxu0 0.0
    %940 = vmatprep.mubr.f32.mxu0 0.0
    %941 = vmatmul.mubr.f32.gmra.mxu0 %v874
    %v942 = vpop.f32.mrf.mxu0
    %v943 = vadd.f32 0.0, %v942
    %v944 = vpop.f32.mrf.mxu0
    %945 = vdwg.mxu0
    %v947 = vrot.slane %v943, 4
    %v949 = vadd.f32 %v209, %v947
    %v950 = vxor.u32 %v949, 2147483648
    %v951 = vmul.f32 %v950, 1.442695
    %v952 = vpow.pop %v951
    %v953 = vadd.f32 %v952, 1.0
    %v954 = vrcp.pop %v953
    %v955 = vmul.f32 1.0, %v954
    %v956 = vtanh.pop %v949
    %v958 = vrot.slane %v859, 6
    %v960 = vmul.f32 %v955, %v958
    %962 = vrot.lane.b32.xlu0 %v956, 64
    %v963 = vpop.permute.xlu0 %962
    %v965 = vmul.f32 %v955, %v963
    %967 = vrot.lane.b32.xlu0 %v965, 32
    %v968 = vpop.permute.xlu0 %967
    %v970 = vadd.f32 %v960, %v968
    %v971 = vtanh.pop %v970
    %973 = vrot.lane.b32.xlu0 %v971, 64
    %v974 = vpop.permute.xlu0 %973
    %v976 = vmul.f32 %v955, %v974
    %978 = vrot.lane.b32.xlu0 %v976, 32
    %v979 = vpop.permute.xlu0 %978
    %981 = vst.msk [vmem:[#allocation2 + $0x8] sm:$0x30] %vm541, %v979
    %v982 = vrot.slane %v976, 4
    %983 = vrot.lane.b32.xlu0 %v982, 32
    %v984 = vpop.permute.xlu0 %983
    %v985 = vsel %vm217, %v984, 0
    %987 = vmatprep.subr.mxu0 0.0
    %988 = vmatpush1.msra.mxu0 0.0
    %989 = vmatprep.subr.mxu0 0.0
    %990 = vmatpush1.msra.mxu0 0.0
    %991 = vmatprep.subr.mxu0 0.0
    %992 = vmatpush1.msra.mxu0 0.0
    %993 = vmatprep.subr.mxu0 0.0
    %994 = vmatpush1.msra.mxu0 0.0
    %995 = vmatprep.subr.mxu0 0.0
    %996 = vmatpush1.msra.mxu0 0.0
    %997 = vmatprep.subr.mxu0 0.0
    %998 = vmatpush1.msra.mxu0 0.0
    %999 = vmatprep.subr.mxu0 0.0
    %1000 = vmatpush1.msra.mxu0 0.0
    %1001 = vmatprep.subr.mxu0 0.0
    %1002 = vmatpush1.msra.mxu0 0.0
    %1003 = vmatprep.subr.mxu0 0.0
    %1004 = vmatpush1.msra.mxu0 0.0
    %1005 = vmatprep.subr.mxu0 0.0
    %1006 = vmatpush1.msra.mxu0 0.0
    %1007 = vmatprep.subr.mxu0 0.0
    %1008 = vmatpush1.msra.mxu0 0.0
    %1009 = vmatprep.subr.mxu0 0.0
    %1010 = vmatpush1.msra.mxu0 0.0
    %1011 = vmatprep.subr.mxu0 0.0
    %1012 = vmatpush1.msra.mxu0 %v119
    %1013 = vmatprep.subr.mxu0 0.0
    %1014 = vmatpush1.msra.mxu0 %v118
    %1015 = vmatprep.subr.mxu0 0.0
    %1016 = vmatpush1.msra.mxu0 %v117
    %1017 = vmatprep.subr.mxu0 0.0
    %1018 = vmatpush1.msra.mxu0 %v116
    %1019 = vmatprep.subr.mxu0 0.0
    %1020 = vmatpush2.msra.mxu0 0.0
    %1021 = vmatprep.subr.mxu0 0.0
    %1022 = vmatpush2.msra.mxu0 0.0
    %1023 = vmatprep.subr.mxu0 0.0
    %1024 = vmatpush2.msra.mxu0 0.0
    %1025 = vmatprep.subr.mxu0 0.0
    %1026 = vmatpush2.msra.mxu0 0.0
    %1027 = vmatprep.subr.mxu0 0.0
    %1028 = vmatpush2.msra.mxu0 0.0
    %1029 = vmatprep.subr.mxu0 0.0
    %1030 = vmatpush2.msra.mxu0 0.0
    %1031 = vmatprep.subr.mxu0 0.0
    %1032 = vmatpush2.msra.mxu0 0.0
    %1033 = vmatprep.subr.mxu0 0.0
    %1034 = vmatpush2.msra.mxu0 0.0
    %1035 = vmatprep.subr.mxu0 0.0
    %1036 = vmatpush2.msra.mxu0 0.0
    %1037 = vmatprep.subr.mxu0 0.0
    %1038 = vmatpush2.msra.mxu0 0.0
    %1039 = vmatprep.subr.mxu0 0.0
    %1040 = vmatpush2.msra.mxu0 0.0
    %1041 = vmatprep.subr.mxu0 0.0
    %1042 = vmatpush2.msra.mxu0 0.0
    %1043 = vmatprep.subr.mxu0 0.0
    %1044 = vmatpush2.msra.mxu0 0.0
    %1045 = vmatprep.subr.mxu0 0.0
    %1046 = vmatpush2.msra.mxu0 0.0
    %1047 = vmatprep.subr.mxu0 0.0
    %1048 = vmatpush2.msra.mxu0 0.0
    %1049 = vmatprep.subr.mxu0 0.0
    %1050 = vmatpush2.msra.mxu0 0.0
    %1051 = vmatprep.mubr.f32.mxu0 0.0
    %1052 = vmatmul.mubr.f32.gmra.mxu0 %v985
    %v1053 = vpop.f32.mrf.mxu0
    %v1054 = vadd.f32 0.0, %v1053
    %v1055 = vpop.f32.mrf.mxu0
    %1056 = vdwg.mxu0
    %v1058 = vrot.slane %v1054, 2
    %v1060 = vadd.f32 %v209, %v1058
    %v1061 = vxor.u32 %v1060, 2147483648
    %v1062 = vmul.f32 %v1061, 1.442695
    %v1063 = vpow.pop %v1062
    %v1064 = vadd.f32 %v1063, 1.0
    %v1065 = vrcp.pop %v1064
    %v1066 = vmul.f32 1.0, %v1065
    %v1067 = vtanh.pop %v1060
    %v1069 = vrot.slane %v970, 6
    %v1071 = vmul.f32 %v1066, %v1069
    %1073 = vrot.lane.b32.xlu0 %v1067, 64
    %v1074 = vpop.permute.xlu0 %1073
    %v1076 = vmul.f32 %v1066, %v1074
    %1078 = vrot.lane.b32.xlu0 %v1076, 32
    %v1079 = vpop.permute.xlu0 %1078
    %v1081 = vadd.f32 %v1071, %v1079
    %v1082 = vtanh.pop %v1081
    %1084 = vrot.lane.b32.xlu0 %v1082, 64
    %v1085 = vpop.permute.xlu0 %1084
    %v1087 = vmul.f32 %v1066, %v1085
    %1089 = vrot.lane.b32.xlu0 %v1087, 32
    %v1090 = vpop.permute.xlu0 %1089
    %1092 = vst.msk [vmem:[#allocation2 + $0x8] sm:$0xc0] %vm653, %v1090
    %v1093 = vrot.slane %v1087, 6
    %1094 = vrot.lane.b32.xlu0 %v1093, 32
    %v1095 = vpop.permute.xlu0 %1094
    %v1096 = vsel %vm217, %v1095, 0
    %1098 = vmatprep.subr.mxu0 0.0
    %1099 = vmatpush1.msra.mxu0 0.0
    %1100 = vmatprep.subr.mxu0 0.0
    %1101 = vmatpush1.msra.mxu0 0.0
    %1102 = vmatprep.subr.mxu0 0.0
    %1103 = vmatpush1.msra.mxu0 0.0
    %1104 = vmatprep.subr.mxu0 0.0
    %1105 = vmatpush1.msra.mxu0 0.0
    %1106 = vmatprep.subr.mxu0 0.0
    %1107 = vmatpush1.msra.mxu0 0.0
    %1108 = vmatprep.subr.mxu0 0.0
    %1109 = vmatpush1.msra.mxu0 0.0
    %1110 = vmatprep.subr.mxu0 0.0
    %1111 = vmatpush1.msra.mxu0 0.0
    %1112 = vmatprep.subr.mxu0 0.0
    %1113 = vmatpush1.msra.mxu0 0.0
    %1114 = vmatprep.subr.mxu0 0.0
    %1115 = vmatpush1.msra.mxu0 0.0
    %1116 = vmatprep.subr.mxu0 0.0
    %1117 = vmatpush1.msra.mxu0 0.0
    %1118 = vmatprep.subr.mxu0 0.0
    %1119 = vmatpush1.msra.mxu0 0.0
    %1120 = vmatprep.subr.mxu0 0.0
    %1121 = vmatpush1.msra.mxu0 0.0
    %1122 = vmatprep.subr.mxu0 0.0
    %1123 = vmatpush1.msra.mxu0 %v119
    %1124 = vmatprep.subr.mxu0 0.0
    %1125 = vmatpush1.msra.mxu0 %v118
    %1126 = vmatprep.subr.mxu0 0.0
    %1127 = vmatpush1.msra.mxu0 %v117
    %1128 = vmatprep.subr.mxu0 0.0
    %1129 = vmatpush1.msra.mxu0 %v116
    %1130 = vmatprep.subr.mxu0 0.0
    %1131 = vmatpush2.msra.mxu0 0.0
    %1132 = vmatprep.subr.mxu0 0.0
    %1133 = vmatpush2.msra.mxu0 0.0
    %1134 = vmatprep.subr.mxu0 0.0
    %1135 = vmatpush2.msra.mxu0 0.0
    %1136 = vmatprep.subr.mxu0 0.0
    %1137 = vmatpush2.msra.mxu0 0.0
    %1138 = vmatprep.subr.mxu0 0.0
    %1139 = vmatpush2.msra.mxu0 0.0
    %1140 = vmatprep.subr.mxu0 0.0
    %1141 = vmatpush2.msra.mxu0 0.0
    %1142 = vmatprep.subr.mxu0 0.0
    %1143 = vmatpush2.msra.mxu0 0.0
    %1144 = vmatprep.subr.mxu0 0.0
    %1145 = vmatpush2.msra.mxu0 0.0
    %1146 = vmatprep.subr.mxu0 0.0
    %1147 = vmatpush2.msra.mxu0 0.0
    %1148 = vmatprep.subr.mxu0 0.0
    %1149 = vmatpush2.msra.mxu0 0.0
    %1150 = vmatprep.subr.mxu0 0.0
    %1151 = vmatpush2.msra.mxu0 0.0
    %1152 = vmatprep.subr.mxu0 0.0
    %1153 = vmatpush2.msra.mxu0 0.0
    %1154 = vmatprep.subr.mxu0 0.0
    %1155 = vmatpush2.msra.mxu0 0.0
    %1156 = vmatprep.subr.mxu0 0.0
    %1157 = vmatpush2.msra.mxu0 0.0
    %1158 = vmatprep.subr.mxu0 0.0
    %1159 = vmatpush2.msra.mxu0 0.0
    %1160 = vmatprep.subr.mxu0 0.0
    %1161 = vmatpush2.msra.mxu0 0.0
    %1162 = vmatprep.mubr.f32.mxu0 0.0
    %1163 = vmatmul.mubr.f32.gmra.mxu0 %v1096
    %v1164 = vpop.f32.mrf.mxu0
    %v1165 = vadd.f32 0.0, %v1164
    %v1166 = vpop.f32.mrf.mxu0
    %1167 = vdwg.mxu0
    %v1168 = vadd.f32 %v214, %v1165
    %v1169 = vxor.u32 %v1168, 2147483648
    %v1170 = vmul.f32 %v1169, 1.442695
    %v1171 = vpow.pop %v1170
    %v1172 = vadd.f32 %v1171, 1.0
    %v1173 = vrcp.pop %v1172
    %v1174 = vmul.f32 1.0, %v1173
    %v1175 = vtanh.pop %v1168
    %v1177 = vrot.slane %v1081, 6
    %v1179 = vmul.f32 %v1174, %v1177
    %1181 = vrot.lane.b32.xlu0 %v1175, 64
    %v1182 = vpop.permute.xlu0 %1181
    %v1184 = vmul.f32 %v1174, %v1182
    %1186 = vrot.lane.b32.xlu0 %v1184, 32
    %v1187 = vpop.permute.xlu0 %1186
    %v1189 = vadd.f32 %v1179, %v1187
    %v1190 = vtanh.pop %v1189
    %1192 = vrot.lane.b32.xlu0 %v1190, 64
    %v1193 = vpop.permute.xlu0 %1192
    %v1195 = vmul.f32 %v1174, %v1193
    %1197 = vrot.lane.b32.xlu0 %v1195, 32
    %v1198 = vpop.permute.xlu0 %1197
    %1200 = vst.msk [vmem:[#allocation2 + $0x10] sm:$0x3] %vm320, %v1198
    %v1201 = vsel %vm217, %v1198, 0
    %1203 = vmatprep.subr.mxu0 0.0
    %1204 = vmatpush1.msra.mxu0 0.0
    %1205 = vmatprep.subr.mxu0 0.0
    %1206 = vmatpush1.msra.mxu0 0.0
    %1207 = vmatprep.subr.mxu0 0.0
    %1208 = vmatpush1.msra.mxu0 0.0
    %1209 = vmatprep.subr.mxu0 0.0
    %1210 = vmatpush1.msra.mxu0 0.0
    %1211 = vmatprep.subr.mxu0 0.0
    %1212 = vmatpush1.msra.mxu0 0.0
    %1213 = vmatprep.subr.mxu0 0.0
    %1214 = vmatpush1.msra.mxu0 0.0
    %1215 = vmatprep.subr.mxu0 0.0
    %1216 = vmatpush1.msra.mxu0 0.0
    %1217 = vmatprep.subr.mxu0 0.0
    %1218 = vmatpush1.msra.mxu0 0.0
    %1219 = vmatprep.subr.mxu0 0.0
    %1220 = vmatpush1.msra.mxu0 0.0
    %1221 = vmatprep.subr.mxu0 0.0
    %1222 = vmatpush1.msra.mxu0 0.0
    %1223 = vmatprep.subr.mxu0 0.0
    %1224 = vmatpush1.msra.mxu0 0.0
    %1225 = vmatprep.subr.mxu0 0.0
    %1226 = vmatpush1.msra.mxu0 0.0
    %1227 = vmatprep.subr.mxu0 0.0
    %1228 = vmatpush1.msra.mxu0 %v119
    %1229 = vmatprep.subr.mxu0 0.0
    %1230 = vmatpush1.msra.mxu0 %v118
    %1231 = vmatprep.subr.mxu0 0.0
    %1232 = vmatpush1.msra.mxu0 %v117
    %1233 = vmatprep.subr.mxu0 0.0
    %1234 = vmatpush1.msra.mxu0 %v116
    %1235 = vmatprep.subr.mxu0 0.0
    %1236 = vmatpush2.msra.mxu0 0.0
    %1237 = vmatprep.subr.mxu0 0.0
    %1238 = vmatpush2.msra.mxu0 0.0
    %1239 = vmatprep.subr.mxu0 0.0
    %1240 = vmatpush2.msra.mxu0 0.0
    %1241 = vmatprep.subr.mxu0 0.0
    %1242 = vmatpush2.msra.mxu0 0.0
    %1243 = vmatprep.subr.mxu0 0.0
    %1244 = vmatpush2.msra.mxu0 0.0
    %1245 = vmatprep.subr.mxu0 0.0
    %1246 = vmatpush2.msra.mxu0 0.0
    %1247 = vmatprep.subr.mxu0 0.0
    %1248 = vmatpush2.msra.mxu0 0.0
    %1249 = vmatprep.subr.mxu0 0.0
    %1250 = vmatpush2.msra.mxu0 0.0
    %1251 = vmatprep.subr.mxu0 0.0
    %1252 = vmatpush2.msra.mxu0 0.0
    %1253 = vmatprep.subr.mxu0 0.0
    %1254 = vmatpush2.msra.mxu0 0.0
    %1255 = vmatprep.subr.mxu0 0.0
    %1256 = vmatpush2.msra.mxu0 0.0
    %1257 = vmatprep.subr.mxu0 0.0
    %1258 = vmatpush2.msra.mxu0 0.0
    %1259 = vmatprep.subr.mxu0 0.0
    %1260 = vmatpush2.msra.mxu0 0.0
    %1261 = vmatprep.subr.mxu0 0.0
    %1262 = vmatpush2.msra.mxu0 0.0
    %1263 = vmatprep.subr.mxu0 0.0
    %1264 = vmatpush2.msra.mxu0 0.0
    %1265 = vmatprep.subr.mxu0 0.0
    %1266 = vmatpush2.msra.mxu0 0.0
    %1267 = vmatprep.mubr.f32.mxu0 0.0
    %1268 = vmatmul.mubr.f32.gmra.mxu0 %v1201
    %v1269 = vpop.f32.mrf.mxu0
    %v1270 = vadd.f32 0.0, %v1269
    %v1271 = vpop.f32.mrf.mxu0
    %1272 = vdwg.mxu0
    %v1274 = vrot.slane %v1270, 6
    %v1276 = vadd.f32 %v214, %v1274
    %v1277 = vxor.u32 %v1276, 2147483648
    %v1278 = vmul.f32 %v1277, 1.442695
    %v1279 = vpow.pop %v1278
    %v1280 = vadd.f32 %v1279, 1.0
    %v1281 = vrcp.pop %v1280
    %v1282 = vmul.f32 1.0, %v1281
    %v1283 = vtanh.pop %v1276
    %v1285 = vrot.slane %v1189, 6
    %v1287 = vmul.f32 %v1282, %v1285
    %1289 = vrot.lane.b32.xlu0 %v1283, 64
    %v1290 = vpop.permute.xlu0 %1289
    %v1292 = vmul.f32 %v1282, %v1290
    %1294 = vrot.lane.b32.xlu0 %v1292, 32
    %v1295 = vpop.permute.xlu0 %1294
    %v1297 = vadd.f32 %v1287, %v1295
    %v1298 = vtanh.pop %v1297
    %1300 = vrot.lane.b32.xlu0 %v1298, 64
    %v1301 = vpop.permute.xlu0 %1300
    %v1303 = vmul.f32 %v1282, %v1301
    %1305 = vrot.lane.b32.xlu0 %v1303, 32
    %v1306 = vpop.permute.xlu0 %1305
    %1308 = vst.msk [vmem:[#allocation2 + $0x10] sm:$0xc] %vm429, %v1306
    %v1309 = vrot.slane %v1303, 2
    %1310 = vrot.lane.b32.xlu0 %v1309, 32
    %v1311 = vpop.permute.xlu0 %1310
    %v1312 = vsel %vm217, %v1311, 0
    %1314 = vmatprep.subr.mxu0 0.0
    %1315 = vmatpush1.msra.mxu0 0.0
    %1316 = vmatprep.subr.mxu0 0.0
    %1317 = vmatpush1.msra.mxu0 0.0
    %1318 = vmatprep.subr.mxu0 0.0
    %1319 = vmatpush1.msra.mxu0 0.0
    %1320 = vmatprep.subr.mxu0 0.0
    %1321 = vmatpush1.msra.mxu0 0.0
    %1322 = vmatprep.subr.mxu0 0.0
    %1323 = vmatpush1.msra.mxu0 0.0
    %1324 = vmatprep.subr.mxu0 0.0
    %1325 = vmatpush1.msra.mxu0 0.0
    %1326 = vmatprep.subr.mxu0 0.0
    %1327 = vmatpush1.msra.mxu0 0.0
    %1328 = vmatprep.subr.mxu0 0.0
    %1329 = vmatpush1.msra.mxu0 0.0
    %1330 = vmatprep.subr.mxu0 0.0
    %1331 = vmatpush1.msra.mxu0 0.0
    %1332 = vmatprep.subr.mxu0 0.0
    %1333 = vmatpush1.msra.mxu0 0.0
    %1334 = vmatprep.subr.mxu0 0.0
    %1335 = vmatpush1.msra.mxu0 0.0
    %1336 = vmatprep.subr.mxu0 0.0
    %1337 = vmatpush1.msra.mxu0 0.0
    %1338 = vmatprep.subr.mxu0 0.0
    %1339 = vmatpush1.msra.mxu0 %v119
    %1340 = vmatprep.subr.mxu0 0.0
    %1341 = vmatpush1.msra.mxu0 %v118
    %1342 = vmatprep.subr.mxu0 0.0
    %1343 = vmatpush1.msra.mxu0 %v117
    %1344 = vmatprep.subr.mxu0 0.0
    %1345 = vmatpush1.msra.mxu0 %v116
    %1346 = vmatprep.subr.mxu0 0.0
    %1347 = vmatpush2.msra.mxu0 0.0
    %1348 = vmatprep.subr.mxu0 0.0
    %1349 = vmatpush2.msra.mxu0 0.0
    %1350 = vmatprep.subr.mxu0 0.0
    %1351 = vmatpush2.msra.mxu0 0.0
    %1352 = vmatprep.subr.mxu0 0.0
    %1353 = vmatpush2.msra.mxu0 0.0
    %1354 = vmatprep.subr.mxu0 0.0
    %1355 = vmatpush2.msra.mxu0 0.0
    %1356 = vmatprep.subr.mxu0 0.0
    %1357 = vmatpush2.msra.mxu0 0.0
    %1358 = vmatprep.subr.mxu0 0.0
    %1359 = vmatpush2.msra.mxu0 0.0
    %1360 = vmatprep.subr.mxu0 0.0
    %1361 = vmatpush2.msra.mxu0 0.0
    %1362 = vmatprep.subr.mxu0 0.0
    %1363 = vmatpush2.msra.mxu0 0.0
    %1364 = vmatprep.subr.mxu0 0.0
    %1365 = vmatpush2.msra.mxu0 0.0
    %1366 = vmatprep.subr.mxu0 0.0
    %1367 = vmatpush2.msra.mxu0 0.0
    %1368 = vmatprep.subr.mxu0 0.0
    %1369 = vmatpush2.msra.mxu0 0.0
    %1370 = vmatprep.subr.mxu0 0.0
    %1371 = vmatpush2.msra.mxu0 0.0
    %1372 = vmatprep.subr.mxu0 0.0
    %1373 = vmatpush2.msra.mxu0 0.0
    %1374 = vmatprep.subr.mxu0 0.0
    %1375 = vmatpush2.msra.mxu0 0.0
    %1376 = vmatprep.subr.mxu0 0.0
    %1377 = vmatpush2.msra.mxu0 0.0
    %1378 = vmatprep.mubr.f32.mxu0 0.0
    %1379 = vmatmul.mubr.f32.gmra.mxu0 %v1312
    %v1380 = vpop.f32.mrf.mxu0
    %v1381 = vadd.f32 0.0, %v1380
    %v1382 = vpop.f32.mrf.mxu0
    %1383 = vdwg.mxu0
    %v1385 = vrot.slane %v1381, 4
    %v1387 = vadd.f32 %v214, %v1385
    %v1388 = vxor.u32 %v1387, 2147483648
    %v1389 = vmul.f32 %v1388, 1.442695
    %v1390 = vpow.pop %v1389
    %v1391 = vadd.f32 %v1390, 1.0
    %v1392 = vrcp.pop %v1391
    %v1393 = vmul.f32 1.0, %v1392
    %v1394 = vtanh.pop %v1387
    %v1396 = vrot.slane %v1297, 6
    %v1398 = vmul.f32 %v1393, %v1396
    %1400 = vrot.lane.b32.xlu0 %v1394, 64
    %v1401 = vpop.permute.xlu0 %1400
    %v1403 = vmul.f32 %v1393, %v1401
    %1405 = vrot.lane.b32.xlu0 %v1403, 32
    %v1406 = vpop.permute.xlu0 %1405
    %v1408 = vadd.f32 %v1398, %v1406
    %v1409 = vtanh.pop %v1408
    %1411 = vrot.lane.b32.xlu0 %v1409, 64
    %v1412 = vpop.permute.xlu0 %1411
    %v1414 = vmul.f32 %v1393, %v1412
    %1416 = vrot.lane.b32.xlu0 %v1414, 32
    %v1417 = vpop.permute.xlu0 %1416
    %1419 = vst.msk [vmem:[#allocation2 + $0x10] sm:$0x30] %vm541, %v1417
    %v1420 = vrot.slane %v1414, 4
    %1421 = vrot.lane.b32.xlu0 %v1420, 32
    %v1422 = vpop.permute.xlu0 %1421
    %v1423 = vsel %vm217, %v1422, 0
    %1425 = vmatprep.subr.mxu0 0.0
    %1426 = vmatpush1.msra.mxu0 0.0
    %1427 = vmatprep.subr.mxu0 0.0
    %1428 = vmatpush1.msra.mxu0 0.0
    %1429 = vmatprep.subr.mxu0 0.0
    %1430 = vmatpush1.msra.mxu0 0.0
    %1431 = vmatprep.subr.mxu0 0.0
    %1432 = vmatpush1.msra.mxu0 0.0
    %1433 = vmatprep.subr.mxu0 0.0
    %1434 = vmatpush1.msra.mxu0 0.0
    %1435 = vmatprep.subr.mxu0 0.0
    %1436 = vmatpush1.msra.mxu0 0.0
    %1437 = vmatprep.subr.mxu0 0.0
    %1438 = vmatpush1.msra.mxu0 0.0
    %1439 = vmatprep.subr.mxu0 0.0
    %1440 = vmatpush1.msra.mxu0 0.0
    %1441 = vmatprep.subr.mxu0 0.0
    %1442 = vmatpush1.msra.mxu0 0.0
    %1443 = vmatprep.subr.mxu0 0.0
    %1444 = vmatpush1.msra.mxu0 0.0
    %1445 = vmatprep.subr.mxu0 0.0
    %1446 = vmatpush1.msra.mxu0 0.0
    %1447 = vmatprep.subr.mxu0 0.0
    %1448 = vmatpush1.msra.mxu0 0.0
    %1449 = vmatprep.subr.mxu0 0.0
    %1450 = vmatpush1.msra.mxu0 %v119
    %1451 = vmatprep.subr.mxu0 0.0
    %1452 = vmatpush1.msra.mxu0 %v118
    %1453 = vmatprep.subr.mxu0 0.0
    %1454 = vmatpush1.msra.mxu0 %v117
    %1455 = vmatprep.subr.mxu0 0.0
    %1456 = vmatpush1.msra.mxu0 %v116
    %1457 = vmatprep.subr.mxu0 0.0
    %1458 = vmatpush2.msra.mxu0 0.0
    %1459 = vmatprep.subr.mxu0 0.0
    %1460 = vmatpush2.msra.mxu0 0.0
    %1461 = vmatprep.subr.mxu0 0.0
    %1462 = vmatpush2.msra.mxu0 0.0
    %1463 = vmatprep.subr.mxu0 0.0
    %1464 = vmatpush2.msra.mxu0 0.0
    %1465 = vmatprep.subr.mxu0 0.0
    %1466 = vmatpush2.msra.mxu0 0.0
    %1467 = vmatprep.subr.mxu0 0.0
    %1468 = vmatpush2.msra.mxu0 0.0
    %1469 = vmatprep.subr.mxu0 0.0
    %1470 = vmatpush2.msra.mxu0 0.0
    %1471 = vmatprep.subr.mxu0 0.0
    %1472 = vmatpush2.msra.mxu0 0.0
    %1473 = vmatprep.subr.mxu0 0.0
    %1474 = vmatpush2.msra.mxu0 0.0
    %1475 = vmatprep.subr.mxu0 0.0
    %1476 = vmatpush2.msra.mxu0 0.0
    %1477 = vmatprep.subr.mxu0 0.0
    %1478 = vmatpush2.msra.mxu0 0.0
    %1479 = vmatprep.subr.mxu0 0.0
    %1480 = vmatpush2.msra.mxu0 0.0
    %1481 = vmatprep.subr.mxu0 0.0
    %1482 = vmatpush2.msra.mxu0 0.0
    %1483 = vmatprep.subr.mxu0 0.0
    %1484 = vmatpush2.msra.mxu0 0.0
    %1485 = vmatprep.subr.mxu0 0.0
    %1486 = vmatpush2.msra.mxu0 0.0
    %1487 = vmatprep.subr.mxu0 0.0
    %1488 = vmatpush2.msra.mxu0 0.0
    %1489 = vmatprep.mubr.f32.mxu0 0.0
    %1490 = vmatmul.mubr.f32.gmra.mxu0 %v1423
    %v1491 = vpop.f32.mrf.mxu0
    %v1492 = vadd.f32 0.0, %v1491
    %v1493 = vpop.f32.mrf.mxu0
    %1494 = vdwg.mxu0
    %v1496 = vrot.slane %v1492, 2
    %v1498 = vadd.f32 %v214, %v1496
    %v1499 = vxor.u32 %v1498, 2147483648
    %v1500 = vmul.f32 %v1499, 1.442695
    %v1501 = vpow.pop %v1500
    %v1502 = vadd.f32 %v1501, 1.0
    %v1503 = vrcp.pop %v1502
    %v1504 = vmul.f32 1.0, %v1503
    %v1505 = vtanh.pop %v1498
    %v1507 = vrot.slane %v1408, 6
    %v1509 = vmul.f32 %v1504, %v1507
    %1511 = vrot.lane.b32.xlu0 %v1505, 64
    %v1512 = vpop.permute.xlu0 %1511
    %v1514 = vmul.f32 %v1504, %v1512
    %1516 = vrot.lane.b32.xlu0 %v1514, 32
    %v1517 = vpop.permute.xlu0 %1516
    %v1519 = vadd.f32 %v1509, %v1517
    %v1520 = vtanh.pop %v1519
    %1522 = vrot.lane.b32.xlu0 %v1520, 64
    %v1523 = vpop.permute.xlu0 %1522
    %v1525 = vmul.f32 %v1504, %v1523
    %1527 = vrot.lane.b32.xlu0 %v1525, 32
    %v1528 = vpop.permute.xlu0 %1527
    %1530 = vst.msk [vmem:[#allocation2 + $0x10] sm:$0xc0] %vm653, %v1528
    %v1531 = vld [vmem:[#allocation2] sm:$0xff]
    %v1532 = vld [vmem:[#allocation2 + $0x8] sm:$0xff]
    %v1533 = vld [vmem:[#allocation2 + $0x10] sm:$0xff]
    %v1534 = vld [vmem:[#allocation8] sm:$0xff]
    %v1535 = vld [vmem:[#allocation8 + $0x8] sm:$0xff]
    %v1536 = vld [vmem:[#allocation8 + $0x10] sm:$0xff]
    %v1537 = vld [vmem:[#allocation8 + $0x18] sm:$0xff]
    %v1538 = vld [vmem:[#allocation9] sm:$0xff]
    %v1539 = vld [vmem:[#allocation9 + $0x8] sm:$0xff]
    %v1540 = vld [vmem:[#allocation9 + $0x10] sm:$0xff]
    %v1541 = vld [vmem:[#allocation9 + $0x18] sm:$0xff]
    %v1542 = vld [vmem:[#allocation11] sm:$0x1]
    %v1544 = vlaneseq
    %v1545 = vshrl.u32 %v1544, 7
    %v1546 = vsub.s32 0, %v1545
    %v1547 = vrot.slane %v1542, %v1546
    %v1550 = vsel %vm217, %v1531, 0
    %v1553 = vsel %vm217, %v1532, 0
    %v1556 = vsel %vm217, %v1533, 0
    %1558 = vmatprep.subr.mxu0 0.0
    %1559 = vmatpush1.msra.mxu0 0.0
    %1560 = vmatprep.subr.mxu0 0.0
    %1561 = vmatpush1.msra.mxu0 0.0
    %1562 = vmatprep.subr.mxu0 0.0
    %1563 = vmatpush1.msra.mxu0 0.0
    %1564 = vmatprep.subr.mxu0 0.0
    %1565 = vmatpush1.msra.mxu0 0.0
    %1566 = vmatprep.subr.mxu0 0.0
    %1567 = vmatpush1.msra.mxu0 0.0
    %1568 = vmatprep.subr.mxu0 0.0
    %1569 = vmatpush1.msra.mxu0 0.0
    %1570 = vmatprep.subr.mxu0 0.0
    %1571 = vmatpush1.msra.mxu0 0.0
    %1572 = vmatprep.subr.mxu0 0.0
    %1573 = vmatpush1.msra.mxu0 0.0
    %1574 = vmatprep.subr.mxu0 0.0
    %1575 = vmatpush1.msra.mxu0 0.0
    %1576 = vmatprep.subr.mxu0 0.0
    %1577 = vmatpush1.msra.mxu0 0.0
    %1578 = vmatprep.subr.mxu0 0.0
    %1579 = vmatpush1.msra.mxu0 0.0
    %1580 = vmatprep.subr.mxu0 0.0
    %1581 = vmatpush1.msra.mxu0 0.0
    %1582 = vmatprep.subr.mxu0 0.0
    %1583 = vmatpush1.msra.mxu0 %v1537
    %1584 = vmatprep.subr.mxu0 0.0
    %1585 = vmatpush1.msra.mxu0 %v1536
    %1586 = vmatprep.subr.mxu0 0.0
    %1587 = vmatpush1.msra.mxu0 %v1535
    %1588 = vmatprep.subr.mxu0 0.0
    %1589 = vmatpush1.msra.mxu0 %v1534
    %1590 = vmatprep.subr.mxu0 0.0
    %1591 = vmatpush2.msra.mxu0 0.0
    %1592 = vmatprep.subr.mxu0 0.0
    %1593 = vmatpush2.msra.mxu0 0.0
    %1594 = vmatprep.subr.mxu0 0.0
    %1595 = vmatpush2.msra.mxu0 0.0
    %1596 = vmatprep.subr.mxu0 0.0
    %1597 = vmatpush2.msra.mxu0 0.0
    %1598 = vmatprep.subr.mxu0 0.0
    %1599 = vmatpush2.msra.mxu0 0.0
    %1600 = vmatprep.subr.mxu0 0.0
    %1601 = vmatpush2.msra.mxu0 0.0
    %1602 = vmatprep.subr.mxu0 0.0
    %1603 = vmatpush2.msra.mxu0 0.0
    %1604 = vmatprep.subr.mxu0 0.0
    %1605 = vmatpush2.msra.mxu0 0.0
    %1606 = vmatprep.subr.mxu0 0.0
    %1607 = vmatpush2.msra.mxu0 0.0
    %1608 = vmatprep.subr.mxu0 0.0
    %1609 = vmatpush2.msra.mxu0 0.0
    %1610 = vmatprep.subr.mxu0 0.0
    %1611 = vmatpush2.msra.mxu0 0.0
    %1612 = vmatprep.subr.mxu0 0.0
    %1613 = vmatpush2.msra.mxu0 0.0
    %1614 = vmatprep.subr.mxu0 0.0
    %1615 = vmatpush2.msra.mxu0 0.0
    %1616 = vmatprep.subr.mxu0 0.0
    %1617 = vmatpush2.msra.mxu0 0.0
    %1618 = vmatprep.subr.mxu0 0.0
    %1619 = vmatpush2.msra.mxu0 0.0
    %1620 = vmatprep.subr.mxu0 0.0
    %1621 = vmatpush2.msra.mxu0 0.0
    %1622 = vmatprep.mubr.f32.mxu0 0.0
    %1623 = vmatmul.mubr.f32.gmra.mxu0 %v1550
    %v1624 = vpop.f32.mrf.mxu0
    %v1625 = vadd.f32 %v1547, %v1624
    %v1626 = vpop.f32.mrf.mxu0
    %1627 = vmatprep.mubr.f32.mxu0 0.0
    %1628 = vmatmul.mubr.f32.gmra.mxu0 %v1553
    %v1629 = vpop.f32.mrf.mxu0
    %v1630 = vadd.f32 %v1547, %v1629
    %v1631 = vpop.f32.mrf.mxu0
    %1632 = vmatprep.mubr.f32.mxu0 0.0
    %1633 = vmatmul.mubr.f32.gmra.mxu0 %v1556
    %v1634 = vpop.f32.mrf.mxu0
    %v1635 = vadd.f32 %v1547, %v1634
    %v1636 = vpop.f32.mrf.mxu0
    %1637 = vdwg.mxu0
    %1638 = vmatprep.subr.mxu0 0.0
    %1639 = vmatpush1.msra.mxu0 0.0
    %1640 = vmatprep.subr.mxu0 0.0
    %1641 = vmatpush1.msra.mxu0 0.0
    %1642 = vmatprep.subr.mxu0 0.0
    %1643 = vmatpush1.msra.mxu0 0.0
    %1644 = vmatprep.subr.mxu0 0.0
    %1645 = vmatpush1.msra.mxu0 0.0
    %1646 = vmatprep.subr.mxu0 0.0
    %1647 = vmatpush1.msra.mxu0 0.0
    %1648 = vmatprep.subr.mxu0 0.0
    %1649 = vmatpush1.msra.mxu0 0.0
    %1650 = vmatprep.subr.mxu0 0.0
    %1651 = vmatpush1.msra.mxu0 0.0
    %1652 = vmatprep.subr.mxu0 0.0
    %1653 = vmatpush1.msra.mxu0 0.0
    %1654 = vmatprep.subr.mxu0 0.0
    %1655 = vmatpush1.msra.mxu0 0.0
    %1656 = vmatprep.subr.mxu0 0.0
    %1657 = vmatpush1.msra.mxu0 0.0
    %1658 = vmatprep.subr.mxu0 0.0
    %1659 = vmatpush1.msra.mxu0 0.0
    %1660 = vmatprep.subr.mxu0 0.0
    %1661 = vmatpush1.msra.mxu0 0.0
    %1662 = vmatprep.subr.mxu0 0.0
    %1663 = vmatpush1.msra.mxu0 %v1541
    %1664 = vmatprep.subr.mxu0 0.0
    %1665 = vmatpush1.msra.mxu0 %v1540
    %1666 = vmatprep.subr.mxu0 0.0
    %1667 = vmatpush1.msra.mxu0 %v1539
    %1668 = vmatprep.subr.mxu0 0.0
    %1669 = vmatpush1.msra.mxu0 %v1538
    %1670 = vmatprep.subr.mxu0 0.0
    %1671 = vmatpush2.msra.mxu0 0.0
    %1672 = vmatprep.subr.mxu0 0.0
    %1673 = vmatpush2.msra.mxu0 0.0
    %1674 = vmatprep.subr.mxu0 0.0
    %1675 = vmatpush2.msra.mxu0 0.0
    %1676 = vmatprep.subr.mxu0 0.0
    %1677 = vmatpush2.msra.mxu0 0.0
    %1678 = vmatprep.subr.mxu0 0.0
    %1679 = vmatpush2.msra.mxu0 0.0
    %1680 = vmatprep.subr.mxu0 0.0
    %1681 = vmatpush2.msra.mxu0 0.0
    %1682 = vmatprep.subr.mxu0 0.0
    %1683 = vmatpush2.msra.mxu0 0.0
    %1684 = vmatprep.subr.mxu0 0.0
    %1685 = vmatpush2.msra.mxu0 0.0
    %1686 = vmatprep.subr.mxu0 0.0
    %1687 = vmatpush2.msra.mxu0 0.0
    %1688 = vmatprep.subr.mxu0 0.0
    %1689 = vmatpush2.msra.mxu0 0.0
    %1690 = vmatprep.subr.mxu0 0.0
    %1691 = vmatpush2.msra.mxu0 0.0
    %1692 = vmatprep.subr.mxu0 0.0
    %1693 = vmatpush2.msra.mxu0 0.0
    %1694 = vmatprep.subr.mxu0 0.0
    %1695 = vmatpush2.msra.mxu0 0.0
    %1696 = vmatprep.subr.mxu0 0.0
    %1697 = vmatpush2.msra.mxu0 0.0
    %1698 = vmatprep.subr.mxu0 0.0
    %1699 = vmatpush2.msra.mxu0 0.0
    %1700 = vmatprep.subr.mxu0 0.0
    %1701 = vmatpush2.msra.mxu0 0.0
    %1702 = vmatprep.mubr.f32.mxu0 0.0
    %1703 = vmatmul.mubr.f32.gmra.mxu0 %v219
    %v1704 = vpop.f32.mrf.mxu0
    %v1705 = vadd.f32 0.0, %v1704
    %v1706 = vpop.f32.mrf.mxu0
    %1707 = vdwg.mxu0
    %v1708 = vadd.f32 %v1625, %v1705
    %v1709 = vxor.u32 %v1708, 2147483648
    %v1710 = vmul.f32 %v1709, 1.442695
    %v1711 = vpow.pop %v1710
    %v1712 = vadd.f32 %v1711, 1.0
    %v1713 = vrcp.pop %v1712
    %v1714 = vmul.f32 1.0, %v1713
    %v1715 = vtanh.pop %v1708
    %v1716 = vmul.f32 %v1714, 0.0
    %1718 = vrot.lane.b32.xlu0 %v1715, 64
    %v1719 = vpop.permute.xlu0 %1718
    %v1721 = vmul.f32 %v1714, %v1719
    %1723 = vrot.lane.b32.xlu0 %v1721, 32
    %v1724 = vpop.permute.xlu0 %1723
    %v1726 = vadd.f32 %v1716, %v1724
    %v1727 = vtanh.pop %v1726
    %1729 = vrot.lane.b32.xlu0 %v1727, 64
    %v1730 = vpop.permute.xlu0 %1729
    %v1732 = vmul.f32 %v1714, %v1730
    %v1735 = vunpack.c.l.s4 1983009808
    %v1736 = vunpack.c.0.s8 %v1735
    %v1737 = vlaneseq
    %v1738 = vshrl.u32 %v1737, 7
    %v1739 = vsub.s32 %v1736, %v1738
    %v1740 = vrot.slane %v1732, %v1739
    %1741 = vrot.lane.b32.xlu0 %v1740, 32
    %v1742 = vpop.permute.xlu0 %1741
    %1744 = vst.msk [vmem:[%s9] sm:$0x3] %vm320, %v1742
    %1745 = vrot.lane.b32.xlu0 %v1732, 32
    %v1746 = vpop.permute.xlu0 %1745
    %v1747 = vsel %vm217, %v1746, 0
    %1749 = vmatprep.subr.mxu0 0.0
    %1750 = vmatpush1.msra.mxu0 0.0
    %1751 = vmatprep.subr.mxu0 0.0
    %1752 = vmatpush1.msra.mxu0 0.0
    %1753 = vmatprep.subr.mxu0 0.0
    %1754 = vmatpush1.msra.mxu0 0.0
    %1755 = vmatprep.subr.mxu0 0.0
    %1756 = vmatpush1.msra.mxu0 0.0
    %1757 = vmatprep.subr.mxu0 0.0
    %1758 = vmatpush1.msra.mxu0 0.0
    %1759 = vmatprep.subr.mxu0 0.0
    %1760 = vmatpush1.msra.mxu0 0.0
    %1761 = vmatprep.subr.mxu0 0.0
    %1762 = vmatpush1.msra.mxu0 0.0
    %1763 = vmatprep.subr.mxu0 0.0
    %1764 = vmatpush1.msra.mxu0 0.0
    %1765 = vmatprep.subr.mxu0 0.0
    %1766 = vmatpush1.msra.mxu0 0.0
    %1767 = vmatprep.subr.mxu0 0.0
    %1768 = vmatpush1.msra.mxu0 0.0
    %1769 = vmatprep.subr.mxu0 0.0
    %1770 = vmatpush1.msra.mxu0 0.0
    %1771 = vmatprep.subr.mxu0 0.0
    %1772 = vmatpush1.msra.mxu0 0.0
    %1773 = vmatprep.subr.mxu0 0.0
    %1774 = vmatpush1.msra.mxu0 %v1541
    %1775 = vmatprep.subr.mxu0 0.0
    %1776 = vmatpush1.msra.mxu0 %v1540
    %1777 = vmatprep.subr.mxu0 0.0
    %1778 = vmatpush1.msra.mxu0 %v1539
    %1779 = vmatprep.subr.mxu0 0.0
    %1780 = vmatpush1.msra.mxu0 %v1538
    %1781 = vmatprep.subr.mxu0 0.0
    %1782 = vmatpush2.msra.mxu0 0.0
    %1783 = vmatprep.subr.mxu0 0.0
    %1784 = vmatpush2.msra.mxu0 0.0
    %1785 = vmatprep.subr.mxu0 0.0
    %1786 = vmatpush2.msra.mxu0 0.0
    %1787 = vmatprep.subr.mxu0 0.0
    %1788 = vmatpush2.msra.mxu0 0.0
    %1789 = vmatprep.subr.mxu0 0.0
    %1790 = vmatpush2.msra.mxu0 0.0
    %1791 = vmatprep.subr.mxu0 0.0
    %1792 = vmatpush2.msra.mxu0 0.0
    %1793 = vmatprep.subr.mxu0 0.0
    %1794 = vmatpush2.msra.mxu0 0.0
    %1795 = vmatprep.subr.mxu0 0.0
    %1796 = vmatpush2.msra.mxu0 0.0
    %1797 = vmatprep.subr.mxu0 0.0
    %1798 = vmatpush2.msra.mxu0 0.0
    %1799 = vmatprep.subr.mxu0 0.0
    %1800 = vmatpush2.msra.mxu0 0.0
    %1801 = vmatprep.subr.mxu0 0.0
    %1802 = vmatpush2.msra.mxu0 0.0
    %1803 = vmatprep.subr.mxu0 0.0
    %1804 = vmatpush2.msra.mxu0 0.0
    %1805 = vmatprep.subr.mxu0 0.0
    %1806 = vmatpush2.msra.mxu0 0.0
    %1807 = vmatprep.subr.mxu0 0.0
    %1808 = vmatpush2.msra.mxu0 0.0
    %1809 = vmatprep.subr.mxu0 0.0
    %1810 = vmatpush2.msra.mxu0 0.0
    %1811 = vmatprep.subr.mxu0 0.0
    %1812 = vmatpush2.msra.mxu0 0.0
    %1813 = vmatprep.mubr.f32.mxu0 0.0
    %1814 = vmatmul.mubr.f32.gmra.mxu0 %v1747
    %v1815 = vpop.f32.mrf.mxu0
    %v1816 = vadd.f32 0.0, %v1815
    %v1817 = vpop.f32.mrf.mxu0
    %1818 = vdwg.mxu0
    %v1820 = vrot.slane %v1816, 6
    %v1822 = vadd.f32 %v1625, %v1820
    %v1823 = vxor.u32 %v1822, 2147483648
    %v1824 = vmul.f32 %v1823, 1.442695
    %v1825 = vpow.pop %v1824
    %v1826 = vadd.f32 %v1825, 1.0
    %v1827 = vrcp.pop %v1826
    %v1828 = vmul.f32 1.0, %v1827
    %v1829 = vtanh.pop %v1822
    %v1831 = vrot.slane %v1726, 6
    %v1833 = vmul.f32 %v1828, %v1831
    %1835 = vrot.lane.b32.xlu0 %v1829, 64
    %v1836 = vpop.permute.xlu0 %1835
    %v1838 = vmul.f32 %v1828, %v1836
    %1840 = vrot.lane.b32.xlu0 %v1838, 32
    %v1841 = vpop.permute.xlu0 %1840
    %v1843 = vadd.f32 %v1833, %v1841
    %v1844 = vtanh.pop %v1843
    %1846 = vrot.lane.b32.xlu0 %v1844, 64
    %v1847 = vpop.permute.xlu0 %1846
    %v1849 = vmul.f32 %v1828, %v1847
    %v1852 = vunpack.c.l.s4 1983009808
    %v1853 = vunpack.c.0.s8 %v1852
    %v1854 = vlaneseq
    %v1855 = vshrl.u32 %v1854, 7
    %v1856 = vsub.s32 %v1853, %v1855
    %v1857 = vrot.slane %v1849, %v1856
    %v1858 = vcombine.high %v1857, %v1857
    %1859 = vrot.lane.b32.xlu0 %v1858, 64
    %v1860 = vpop.permute.xlu0 %1859
    %vm1862 = vcmask 517376
    %1863 = vst.msk [vmem:[%s9] sm:$0x3] %vm1862, %v1860
    %v1864 = vrot.slane %v1849, 2
    %1865 = vrot.lane.b32.xlu0 %v1864, 32
    %v1866 = vpop.permute.xlu0 %1865
    %v1867 = vsel %vm217, %v1866, 0
    %1869 = vmatprep.subr.mxu0 0.0
    %1870 = vmatpush1.msra.mxu0 0.0
    %1871 = vmatprep.subr.mxu0 0.0
    %1872 = vmatpush1.msra.mxu0 0.0
    %1873 = vmatprep.subr.mxu0 0.0
    %1874 = vmatpush1.msra.mxu0 0.0
    %1875 = vmatprep.subr.mxu0 0.0
    %1876 = vmatpush1.msra.mxu0 0.0
    %1877 = vmatprep.subr.mxu0 0.0
    %1878 = vmatpush1.msra.mxu0 0.0
    %1879 = vmatprep.subr.mxu0 0.0
    %1880 = vmatpush1.msra.mxu0 0.0
    %1881 = vmatprep.subr.mxu0 0.0
    %1882 = vmatpush1.msra.mxu0 0.0
    %1883 = vmatprep.subr.mxu0 0.0
    %1884 = vmatpush1.msra.mxu0 0.0
    %1885 = vmatprep.subr.mxu0 0.0
    %1886 = vmatpush1.msra.mxu0 0.0
    %1887 = vmatprep.subr.mxu0 0.0
    %1888 = vmatpush1.msra.mxu0 0.0
    %1889 = vmatprep.subr.mxu0 0.0
    %1890 = vmatpush1.msra.mxu0 0.0
    %1891 = vmatprep.subr.mxu0 0.0
    %1892 = vmatpush1.msra.mxu0 0.0
    %1893 = vmatprep.subr.mxu0 0.0
    %1894 = vmatpush1.msra.mxu0 %v1541
    %1895 = vmatprep.subr.mxu0 0.0
    %1896 = vmatpush1.msra.mxu0 %v1540
    %1897 = vmatprep.subr.mxu0 0.0
    %1898 = vmatpush1.msra.mxu0 %v1539
    %1899 = vmatprep.subr.mxu0 0.0
    %1900 = vmatpush1.msra.mxu0 %v1538
    %1901 = vmatprep.subr.mxu0 0.0
    %1902 = vmatpush2.msra.mxu0 0.0
    %1903 = vmatprep.subr.mxu0 0.0
    %1904 = vmatpush2.msra.mxu0 0.0
    %1905 = vmatprep.subr.mxu0 0.0
    %1906 = vmatpush2.msra.mxu0 0.0
    %1907 = vmatprep.subr.mxu0 0.0
    %1908 = vmatpush2.msra.mxu0 0.0
    %1909 = vmatprep.subr.mxu0 0.0
    %1910 = vmatpush2.msra.mxu0 0.0
    %1911 = vmatprep.subr.mxu0 0.0
    %1912 = vmatpush2.msra.mxu0 0.0
    %1913 = vmatprep.subr.mxu0 0.0
    %1914 = vmatpush2.msra.mxu0 0.0
    %1915 = vmatprep.subr.mxu0 0.0
    %1916 = vmatpush2.msra.mxu0 0.0
    %1917 = vmatprep.subr.mxu0 0.0
    %1918 = vmatpush2.msra.mxu0 0.0
    %1919 = vmatprep.subr.mxu0 0.0
    %1920 = vmatpush2.msra.mxu0 0.0
    %1921 = vmatprep.subr.mxu0 0.0
    %1922 = vmatpush2.msra.mxu0 0.0
    %1923 = vmatprep.subr.mxu0 0.0
    %1924 = vmatpush2.msra.mxu0 0.0
    %1925 = vmatprep.subr.mxu0 0.0
    %1926 = vmatpush2.msra.mxu0 0.0
    %1927 = vmatprep.subr.mxu0 0.0
    %1928 = vmatpush2.msra.mxu0 0.0
    %1929 = vmatprep.subr.mxu0 0.0
    %1930 = vmatpush2.msra.mxu0 0.0
    %1931 = vmatprep.subr.mxu0 0.0
    %1932 = vmatpush2.msra.mxu0 0.0
    %1933 = vmatprep.mubr.f32.mxu0 0.0
    %1934 = vmatmul.mubr.f32.gmra.mxu0 %v1867
    %v1935 = vpop.f32.mrf.mxu0
    %v1936 = vadd.f32 0.0, %v1935
    %v1937 = vpop.f32.mrf.mxu0
    %1938 = vdwg.mxu0
    %v1940 = vrot.slane %v1936, 4
    %v1942 = vadd.f32 %v1625, %v1940
    %v1943 = vxor.u32 %v1942, 2147483648
    %v1944 = vmul.f32 %v1943, 1.442695
    %v1945 = vpow.pop %v1944
    %v1946 = vadd.f32 %v1945, 1.0
    %v1947 = vrcp.pop %v1946
    %v1948 = vmul.f32 1.0, %v1947
    %v1949 = vtanh.pop %v1942
    %v1951 = vrot.slane %v1843, 6
    %v1953 = vmul.f32 %v1948, %v1951
    %1955 = vrot.lane.b32.xlu0 %v1949, 64
    %v1956 = vpop.permute.xlu0 %1955
    %v1958 = vmul.f32 %v1948, %v1956
    %1960 = vrot.lane.b32.xlu0 %v1958, 32
    %v1961 = vpop.permute.xlu0 %1960
    %v1963 = vadd.f32 %v1953, %v1961
    %v1964 = vtanh.pop %v1963
    %1966 = vrot.lane.b32.xlu0 %v1964, 64
    %v1967 = vpop.permute.xlu0 %1966
    %v1969 = vmul.f32 %v1948, %v1967
    %v1971 = vcombine.high %v1969, %v1969
    %v1973 = vunpack.c.l.s4 1983009808
    %v1974 = vunpack.c.0.s8 %v1973
    %v1975 = vlaneseq
    %v1976 = vshrl.u32 %v1975, 7
    %v1977 = vsub.s32 %v1974, %v1976
    %v1978 = vrot.slane %v1971, %v1977
    %1979 = vrot.lane.b32.xlu0 %v1978, 96
    %v1980 = vpop.permute.xlu0 %1979
    %vm1982 = vcmask 779776
    %1983 = vst.msk [vmem:[%s9] sm:$0x3] %vm1982, %v1980
    %v1984 = vrot.slane %v1969, 4
    %1985 = vrot.lane.b32.xlu0 %v1984, 32
    %v1986 = vpop.permute.xlu0 %1985
    %v1987 = vsel %vm217, %v1986, 0
    %1989 = vmatprep.subr.mxu0 0.0
    %1990 = vmatpush1.msra.mxu0 0.0
    %1991 = vmatprep.subr.mxu0 0.0
    %1992 = vmatpush1.msra.mxu0 0.0
    %1993 = vmatprep.subr.mxu0 0.0
    %1994 = vmatpush1.msra.mxu0 0.0
    %1995 = vmatprep.subr.mxu0 0.0
    %1996 = vmatpush1.msra.mxu0 0.0
    %1997 = vmatprep.subr.mxu0 0.0
    %1998 = vmatpush1.msra.mxu0 0.0
    %1999 = vmatprep.subr.mxu0 0.0
    %2000 = vmatpush1.msra.mxu0 0.0
    %2001 = vmatprep.subr.mxu0 0.0
    %2002 = vmatpush1.msra.mxu0 0.0
    %2003 = vmatprep.subr.mxu0 0.0
    %2004 = vmatpush1.msra.mxu0 0.0
    %2005 = vmatprep.subr.mxu0 0.0
    %2006 = vmatpush1.msra.mxu0 0.0
    %2007 = vmatprep.subr.mxu0 0.0
    %2008 = vmatpush1.msra.mxu0 0.0
    %2009 = vmatprep.subr.mxu0 0.0
    %2010 = vmatpush1.msra.mxu0 0.0
    %2011 = vmatprep.subr.mxu0 0.0
    %2012 = vmatpush1.msra.mxu0 0.0
    %2013 = vmatprep.subr.mxu0 0.0
    %2014 = vmatpush1.msra.mxu0 %v1541
    %2015 = vmatprep.subr.mxu0 0.0
    %2016 = vmatpush1.msra.mxu0 %v1540
    %2017 = vmatprep.subr.mxu0 0.0
    %2018 = vmatpush1.msra.mxu0 %v1539
    %2019 = vmatprep.subr.mxu0 0.0
    %2020 = vmatpush1.msra.mxu0 %v1538
    %2021 = vmatprep.subr.mxu0 0.0
    %2022 = vmatpush2.msra.mxu0 0.0
    %2023 = vmatprep.subr.mxu0 0.0
    %2024 = vmatpush2.msra.mxu0 0.0
    %2025 = vmatprep.subr.mxu0 0.0
    %2026 = vmatpush2.msra.mxu0 0.0
    %2027 = vmatprep.subr.mxu0 0.0
    %2028 = vmatpush2.msra.mxu0 0.0
    %2029 = vmatprep.subr.mxu0 0.0
    %2030 = vmatpush2.msra.mxu0 0.0
    %2031 = vmatprep.subr.mxu0 0.0
    %2032 = vmatpush2.msra.mxu0 0.0
    %2033 = vmatprep.subr.mxu0 0.0
    %2034 = vmatpush2.msra.mxu0 0.0
    %2035 = vmatprep.subr.mxu0 0.0
    %2036 = vmatpush2.msra.mxu0 0.0
    %2037 = vmatprep.subr.mxu0 0.0
    %2038 = vmatpush2.msra.mxu0 0.0
    %2039 = vmatprep.subr.mxu0 0.0
    %2040 = vmatpush2.msra.mxu0 0.0
    %2041 = vmatprep.subr.mxu0 0.0
    %2042 = vmatpush2.msra.mxu0 0.0
    %2043 = vmatprep.subr.mxu0 0.0
    %2044 = vmatpush2.msra.mxu0 0.0
    %2045 = vmatprep.subr.mxu0 0.0
    %2046 = vmatpush2.msra.mxu0 0.0
    %2047 = vmatprep.subr.mxu0 0.0
    %2048 = vmatpush2.msra.mxu0 0.0
    %2049 = vmatprep.subr.mxu0 0.0
    %2050 = vmatpush2.msra.mxu0 0.0
    %2051 = vmatprep.subr.mxu0 0.0
    %2052 = vmatpush2.msra.mxu0 0.0
    %2053 = vmatprep.mubr.f32.mxu0 0.0
    %2054 = vmatmul.mubr.f32.gmra.mxu0 %v1987
    %v2055 = vpop.f32.mrf.mxu0
    %v2056 = vadd.f32 0.0, %v2055
    %v2057 = vpop.f32.mrf.mxu0
    %2058 = vdwg.mxu0
    %v2060 = vrot.slane %v2056, 2
    %v2062 = vadd.f32 %v1625, %v2060
    %v2063 = vxor.u32 %v2062, 2147483648
    %v2064 = vmul.f32 %v2063, 1.442695
    %v2065 = vpow.pop %v2064
    %v2066 = vadd.f32 %v2065, 1.0
    %v2067 = vrcp.pop %v2066
    %v2068 = vmul.f32 1.0, %v2067
    %v2069 = vtanh.pop %v2062
    %v2071 = vrot.slane %v1963, 6
    %v2073 = vmul.f32 %v2068, %v2071
    %2075 = vrot.lane.b32.xlu0 %v2069, 64
    %v2076 = vpop.permute.xlu0 %2075
    %v2078 = vmul.f32 %v2068, %v2076
    %2080 = vrot.lane.b32.xlu0 %v2078, 32
    %v2081 = vpop.permute.xlu0 %2080
    %v2083 = vadd.f32 %v2073, %v2081
    %v2084 = vtanh.pop %v2083
    %2086 = vrot.lane.b32.xlu0 %v2084, 64
    %v2087 = vpop.permute.xlu0 %2086
    %v2089 = vmul.f32 %v2068, %v2087
    %v2091 = vcombine.high %v2089, %v2089
    %v2093 = vunpack.c.l.s4 1983009808
    %v2094 = vunpack.c.0.s8 %v2093
    %v2095 = vlaneseq
    %v2096 = vshrl.u32 %v2095, 7
    %v2097 = vsub.s32 %v2094, %v2096
    %v2098 = vrot.slane %v2091, %v2097
    %v2099 = vcombine.high %v2098, %v2098
    %vm2101 = vcmask 1042176
    %2102 = vst.msk [vmem:[%s9] sm:$0x3] %vm2101, %v2099
    %v2103 = vrot.slane %v2089, 6
    %2104 = vrot.lane.b32.xlu0 %v2103, 32
    %v2105 = vpop.permute.xlu0 %2104
    %v2106 = vsel %vm217, %v2105, 0
    %2108 = vmatprep.subr.mxu0 0.0
    %2109 = vmatpush1.msra.mxu0 0.0
    %2110 = vmatprep.subr.mxu0 0.0
    %2111 = vmatpush1.msra.mxu0 0.0
    %2112 = vmatprep.subr.mxu0 0.0
    %2113 = vmatpush1.msra.mxu0 0.0
    %2114 = vmatprep.subr.mxu0 0.0
    %2115 = vmatpush1.msra.mxu0 0.0
    %2116 = vmatprep.subr.mxu0 0.0
    %2117 = vmatpush1.msra.mxu0 0.0
    %2118 = vmatprep.subr.mxu0 0.0
    %2119 = vmatpush1.msra.mxu0 0.0
    %2120 = vmatprep.subr.mxu0 0.0
    %2121 = vmatpush1.msra.mxu0 0.0
    %2122 = vmatprep.subr.mxu0 0.0
    %2123 = vmatpush1.msra.mxu0 0.0
    %2124 = vmatprep.subr.mxu0 0.0
    %2125 = vmatpush1.msra.mxu0 0.0
    %2126 = vmatprep.subr.mxu0 0.0
    %2127 = vmatpush1.msra.mxu0 0.0
    %2128 = vmatprep.subr.mxu0 0.0
    %2129 = vmatpush1.msra.mxu0 0.0
    %2130 = vmatprep.subr.mxu0 0.0
    %2131 = vmatpush1.msra.mxu0 0.0
    %2132 = vmatprep.subr.mxu0 0.0
    %2133 = vmatpush1.msra.mxu0 %v1541
    %2134 = vmatprep.subr.mxu0 0.0
    %2135 = vmatpush1.msra.mxu0 %v1540
    %2136 = vmatprep.subr.mxu0 0.0
    %2137 = vmatpush1.msra.mxu0 %v1539
    %2138 = vmatprep.subr.mxu0 0.0
    %2139 = vmatpush1.msra.mxu0 %v1538
    %2140 = vmatprep.subr.mxu0 0.0
    %2141 = vmatpush2.msra.mxu0 0.0
    %2142 = vmatprep.subr.mxu0 0.0
    %2143 = vmatpush2.msra.mxu0 0.0
    %2144 = vmatprep.subr.mxu0 0.0
    %2145 = vmatpush2.msra.mxu0 0.0
    %2146 = vmatprep.subr.mxu0 0.0
    %2147 = vmatpush2.msra.mxu0 0.0
    %2148 = vmatprep.subr.mxu0 0.0
    %2149 = vmatpush2.msra.mxu0 0.0
    %2150 = vmatprep.subr.mxu0 0.0
    %2151 = vmatpush2.msra.mxu0 0.0
    %2152 = vmatprep.subr.mxu0 0.0
    %2153 = vmatpush2.msra.mxu0 0.0
    %2154 = vmatprep.subr.mxu0 0.0
    %2155 = vmatpush2.msra.mxu0 0.0
    %2156 = vmatprep.subr.mxu0 0.0
    %2157 = vmatpush2.msra.mxu0 0.0
    %2158 = vmatprep.subr.mxu0 0.0
    %2159 = vmatpush2.msra.mxu0 0.0
    %2160 = vmatprep.subr.mxu0 0.0
    %2161 = vmatpush2.msra.mxu0 0.0
    %2162 = vmatprep.subr.mxu0 0.0
    %2163 = vmatpush2.msra.mxu0 0.0
    %2164 = vmatprep.subr.mxu0 0.0
    %2165 = vmatpush2.msra.mxu0 0.0
    %2166 = vmatprep.subr.mxu0 0.0
    %2167 = vmatpush2.msra.mxu0 0.0
    %2168 = vmatprep.subr.mxu0 0.0
    %2169 = vmatpush2.msra.mxu0 0.0
    %2170 = vmatprep.subr.mxu0 0.0
    %2171 = vmatpush2.msra.mxu0 0.0
    %2172 = vmatprep.mubr.f32.mxu0 0.0
    %2173 = vmatmul.mubr.f32.gmra.mxu0 %v2106
    %v2174 = vpop.f32.mrf.mxu0
    %v2175 = vadd.f32 0.0, %v2174
    %v2176 = vpop.f32.mrf.mxu0
    %2177 = vdwg.mxu0
    %v2178 = vadd.f32 %v1630, %v2175
    %v2179 = vxor.u32 %v2178, 2147483648
    %v2180 = vmul.f32 %v2179, 1.442695
    %v2181 = vpow.pop %v2180
    %v2182 = vadd.f32 %v2181, 1.0
    %v2183 = vrcp.pop %v2182
    %v2184 = vmul.f32 1.0, %v2183
    %v2185 = vtanh.pop %v2178
    %v2187 = vrot.slane %v2083, 6
    %v2189 = vmul.f32 %v2184, %v2187
    %2191 = vrot.lane.b32.xlu0 %v2185, 64
    %v2192 = vpop.permute.xlu0 %2191
    %v2194 = vmul.f32 %v2184, %v2192
    %2196 = vrot.lane.b32.xlu0 %v2194, 32
    %v2197 = vpop.permute.xlu0 %2196
    %v2199 = vadd.f32 %v2189, %v2197
    %v2200 = vtanh.pop %v2199
    %2202 = vrot.lane.b32.xlu0 %v2200, 64
    %v2203 = vpop.permute.xlu0 %2202
    %v2205 = vmul.f32 %v2184, %v2203
    %v2208 = vunpack.c.l.s4 1983009808
    %v2209 = vunpack.c.0.s8 %v2208
    %v2210 = vlaneseq
    %v2211 = vshrl.u32 %v2210, 7
    %v2212 = vsub.s32 %v2209, %v2211
    %v2213 = vrot.slane %v2205, %v2212
    %2214 = vrot.lane.b32.xlu0 %v2213, 32
    %v2215 = vpop.permute.xlu0 %2214
    %2217 = vst.msk [vmem:[%s9 + $0x2] sm:$0x3] %vm320, %v2215
    %2218 = vrot.lane.b32.xlu0 %v2205, 32
    %v2219 = vpop.permute.xlu0 %2218
    %v2220 = vsel %vm217, %v2219, 0
    %2222 = vmatprep.subr.mxu0 0.0
    %2223 = vmatpush1.msra.mxu0 0.0
    %2224 = vmatprep.subr.mxu0 0.0
    %2225 = vmatpush1.msra.mxu0 0.0
    %2226 = vmatprep.subr.mxu0 0.0
    %2227 = vmatpush1.msra.mxu0 0.0
    %2228 = vmatprep.subr.mxu0 0.0
    %2229 = vmatpush1.msra.mxu0 0.0
    %2230 = vmatprep.subr.mxu0 0.0
    %2231 = vmatpush1.msra.mxu0 0.0
    %2232 = vmatprep.subr.mxu0 0.0
    %2233 = vmatpush1.msra.mxu0 0.0
    %2234 = vmatprep.subr.mxu0 0.0
    %2235 = vmatpush1.msra.mxu0 0.0
    %2236 = vmatprep.subr.mxu0 0.0
    %2237 = vmatpush1.msra.mxu0 0.0
    %2238 = vmatprep.subr.mxu0 0.0
    %2239 = vmatpush1.msra.mxu0 0.0
    %2240 = vmatprep.subr.mxu0 0.0
    %2241 = vmatpush1.msra.mxu0 0.0
    %2242 = vmatprep.subr.mxu0 0.0
    %2243 = vmatpush1.msra.mxu0 0.0
    %2244 = vmatprep.subr.mxu0 0.0
    %2245 = vmatpush1.msra.mxu0 0.0
    %2246 = vmatprep.subr.mxu0 0.0
    %2247 = vmatpush1.msra.mxu0 %v1541
    %2248 = vmatprep.subr.mxu0 0.0
    %2249 = vmatpush1.msra.mxu0 %v1540
    %2250 = vmatprep.subr.mxu0 0.0
    %2251 = vmatpush1.msra.mxu0 %v1539
    %2252 = vmatprep.subr.mxu0 0.0
    %2253 = vmatpush1.msra.mxu0 %v1538
    %2254 = vmatprep.subr.mxu0 0.0
    %2255 = vmatpush2.msra.mxu0 0.0
    %2256 = vmatprep.subr.mxu0 0.0
    %2257 = vmatpush2.msra.mxu0 0.0
    %2258 = vmatprep.subr.mxu0 0.0
    %2259 = vmatpush2.msra.mxu0 0.0
    %2260 = vmatprep.subr.mxu0 0.0
    %2261 = vmatpush2.msra.mxu0 0.0
    %2262 = vmatprep.subr.mxu0 0.0
    %2263 = vmatpush2.msra.mxu0 0.0
    %2264 = vmatprep.subr.mxu0 0.0
    %2265 = vmatpush2.msra.mxu0 0.0
    %2266 = vmatprep.subr.mxu0 0.0
    %2267 = vmatpush2.msra.mxu0 0.0
    %2268 = vmatprep.subr.mxu0 0.0
    %2269 = vmatpush2.msra.mxu0 0.0
    %2270 = vmatprep.subr.mxu0 0.0
    %2271 = vmatpush2.msra.mxu0 0.0
    %2272 = vmatprep.subr.mxu0 0.0
    %2273 = vmatpush2.msra.mxu0 0.0
    %2274 = vmatprep.subr.mxu0 0.0
    %2275 = vmatpush2.msra.mxu0 0.0
    %2276 = vmatprep.subr.mxu0 0.0
    %2277 = vmatpush2.msra.mxu0 0.0
    %2278 = vmatprep.subr.mxu0 0.0
    %2279 = vmatpush2.msra.mxu0 0.0
    %2280 = vmatprep.subr.mxu0 0.0
    %2281 = vmatpush2.msra.mxu0 0.0
    %2282 = vmatprep.subr.mxu0 0.0
    %2283 = vmatpush2.msra.mxu0 0.0
    %2284 = vmatprep.subr.mxu0 0.0
    %2285 = vmatpush2.msra.mxu0 0.0
    %2286 = vmatprep.mubr.f32.mxu0 0.0
    %2287 = vmatmul.mubr.f32.gmra.mxu0 %v2220
    %v2288 = vpop.f32.mrf.mxu0
    %v2289 = vadd.f32 0.0, %v2288
    %v2290 = vpop.f32.mrf.mxu0
    %2291 = vdwg.mxu0
    %v2293 = vrot.slane %v2289, 6
    %v2295 = vadd.f32 %v1630, %v2293
    %v2296 = vxor.u32 %v2295, 2147483648
    %v2297 = vmul.f32 %v2296, 1.442695
    %v2298 = vpow.pop %v2297
    %v2299 = vadd.f32 %v2298, 1.0
    %v2300 = vrcp.pop %v2299
    %v2301 = vmul.f32 1.0, %v2300
    %v2302 = vtanh.pop %v2295
    %v2304 = vrot.slane %v2199, 6
    %v2306 = vmul.f32 %v2301, %v2304
    %2308 = vrot.lane.b32.xlu0 %v2302, 64
    %v2309 = vpop.permute.xlu0 %2308
    %v2311 = vmul.f32 %v2301, %v2309
    %2313 = vrot.lane.b32.xlu0 %v2311, 32
    %v2314 = vpop.permute.xlu0 %2313
    %v2316 = vadd.f32 %v2306, %v2314
    %v2317 = vtanh.pop %v2316
    %2319 = vrot.lane.b32.xlu0 %v2317, 64
    %v2320 = vpop.permute.xlu0 %2319
    %v2322 = vmul.f32 %v2301, %v2320
    %v2325 = vunpack.c.l.s4 1983009808
    %v2326 = vunpack.c.0.s8 %v2325
    %v2327 = vlaneseq
    %v2328 = vshrl.u32 %v2327, 7
    %v2329 = vsub.s32 %v2326, %v2328
    %v2330 = vrot.slane %v2322, %v2329
    %v2331 = vcombine.high %v2330, %v2330
    %2332 = vrot.lane.b32.xlu0 %v2331, 64
    %v2333 = vpop.permute.xlu0 %2332
    %2335 = vst.msk [vmem:[%s9 + $0x2] sm:$0x3] %vm1862, %v2333
    %v2336 = vrot.slane %v2322, 2
    %2337 = vrot.lane.b32.xlu0 %v2336, 32
    %v2338 = vpop.permute.xlu0 %2337
    %v2339 = vsel %vm217, %v2338, 0
    %2341 = vmatprep.subr.mxu0 0.0
    %2342 = vmatpush1.msra.mxu0 0.0
    %2343 = vmatprep.subr.mxu0 0.0
    %2344 = vmatpush1.msra.mxu0 0.0
    %2345 = vmatprep.subr.mxu0 0.0
    %2346 = vmatpush1.msra.mxu0 0.0
    %2347 = vmatprep.subr.mxu0 0.0
    %2348 = vmatpush1.msra.mxu0 0.0
    %2349 = vmatprep.subr.mxu0 0.0
    %2350 = vmatpush1.msra.mxu0 0.0
    %2351 = vmatprep.subr.mxu0 0.0
    %2352 = vmatpush1.msra.mxu0 0.0
    %2353 = vmatprep.subr.mxu0 0.0
    %2354 = vmatpush1.msra.mxu0 0.0
    %2355 = vmatprep.subr.mxu0 0.0
    %2356 = vmatpush1.msra.mxu0 0.0
    %2357 = vmatprep.subr.mxu0 0.0
    %2358 = vmatpush1.msra.mxu0 0.0
    %2359 = vmatprep.subr.mxu0 0.0
    %2360 = vmatpush1.msra.mxu0 0.0
    %2361 = vmatprep.subr.mxu0 0.0
    %2362 = vmatpush1.msra.mxu0 0.0
    %2363 = vmatprep.subr.mxu0 0.0
    %2364 = vmatpush1.msra.mxu0 0.0
    %2365 = vmatprep.subr.mxu0 0.0
    %2366 = vmatpush1.msra.mxu0 %v1541
    %2367 = vmatprep.subr.mxu0 0.0
    %2368 = vmatpush1.msra.mxu0 %v1540
    %2369 = vmatprep.subr.mxu0 0.0
    %2370 = vmatpush1.msra.mxu0 %v1539
    %2371 = vmatprep.subr.mxu0 0.0
    %2372 = vmatpush1.msra.mxu0 %v1538
    %2373 = vmatprep.subr.mxu0 0.0
    %2374 = vmatpush2.msra.mxu0 0.0
    %2375 = vmatprep.subr.mxu0 0.0
    %2376 = vmatpush2.msra.mxu0 0.0
    %2377 = vmatprep.subr.mxu0 0.0
    %2378 = vmatpush2.msra.mxu0 0.0
    %2379 = vmatprep.subr.mxu0 0.0
    %2380 = vmatpush2.msra.mxu0 0.0
    %2381 = vmatprep.subr.mxu0 0.0
    %2382 = vmatpush2.msra.mxu0 0.0
    %2383 = vmatprep.subr.mxu0 0.0
    %2384 = vmatpush2.msra.mxu0 0.0
    %2385 = vmatprep.subr.mxu0 0.0
    %2386 = vmatpush2.msra.mxu0 0.0
    %2387 = vmatprep.subr.mxu0 0.0
    %2388 = vmatpush2.msra.mxu0 0.0
    %2389 = vmatprep.subr.mxu0 0.0
    %2390 = vmatpush2.msra.mxu0 0.0
    %2391 = vmatprep.subr.mxu0 0.0
    %2392 = vmatpush2.msra.mxu0 0.0
    %2393 = vmatprep.subr.mxu0 0.0
    %2394 = vmatpush2.msra.mxu0 0.0
    %2395 = vmatprep.subr.mxu0 0.0
    %2396 = vmatpush2.msra.mxu0 0.0
    %2397 = vmatprep.subr.mxu0 0.0
    %2398 = vmatpush2.msra.mxu0 0.0
    %2399 = vmatprep.subr.mxu0 0.0
    %2400 = vmatpush2.msra.mxu0 0.0
    %2401 = vmatprep.subr.mxu0 0.0
    %2402 = vmatpush2.msra.mxu0 0.0
    %2403 = vmatprep.subr.mxu0 0.0
    %2404 = vmatpush2.msra.mxu0 0.0
    %2405 = vmatprep.mubr.f32.mxu0 0.0
    %2406 = vmatmul.mubr.f32.gmra.mxu0 %v2339
    %v2407 = vpop.f32.mrf.mxu0
    %v2408 = vadd.f32 0.0, %v2407
    %v2409 = vpop.f32.mrf.mxu0
    %2410 = vdwg.mxu0
    %v2412 = vrot.slane %v2408, 4
    %v2414 = vadd.f32 %v1630, %v2412
    %v2415 = vxor.u32 %v2414, 2147483648
    %v2416 = vmul.f32 %v2415, 1.442695
    %v2417 = vpow.pop %v2416
    %v2418 = vadd.f32 %v2417, 1.0
    %v2419 = vrcp.pop %v2418
    %v2420 = vmul.f32 1.0, %v2419
    %v2421 = vtanh.pop %v2414
    %v2423 = vrot.slane %v2316, 6
    %v2425 = vmul.f32 %v2420, %v2423
    %2427 = vrot.lane.b32.xlu0 %v2421, 64
    %v2428 = vpop.permute.xlu0 %2427
    %v2430 = vmul.f32 %v2420, %v2428
    %2432 = vrot.lane.b32.xlu0 %v2430, 32
    %v2433 = vpop.permute.xlu0 %2432
    %v2435 = vadd.f32 %v2425, %v2433
    %v2436 = vtanh.pop %v2435
    %2438 = vrot.lane.b32.xlu0 %v2436, 64
    %v2439 = vpop.permute.xlu0 %2438
    %v2441 = vmul.f32 %v2420, %v2439
    %v2443 = vcombine.high %v2441, %v2441
    %v2445 = vunpack.c.l.s4 1983009808
    %v2446 = vunpack.c.0.s8 %v2445
    %v2447 = vlaneseq
    %v2448 = vshrl.u32 %v2447, 7
    %v2449 = vsub.s32 %v2446, %v2448
    %v2450 = vrot.slane %v2443, %v2449
    %2451 = vrot.lane.b32.xlu0 %v2450, 96
    %v2452 = vpop.permute.xlu0 %2451
    %2454 = vst.msk [vmem:[%s9 + $0x2] sm:$0x3] %vm1982, %v2452
    %v2455 = vrot.slane %v2441, 4
    %2456 = vrot.lane.b32.xlu0 %v2455, 32
    %v2457 = vpop.permute.xlu0 %2456
    %v2458 = vsel %vm217, %v2457, 0
    %2460 = vmatprep.subr.mxu0 0.0
    %2461 = vmatpush1.msra.mxu0 0.0
    %2462 = vmatprep.subr.mxu0 0.0
    %2463 = vmatpush1.msra.mxu0 0.0
    %2464 = vmatprep.subr.mxu0 0.0
    %2465 = vmatpush1.msra.mxu0 0.0
    %2466 = vmatprep.subr.mxu0 0.0
    %2467 = vmatpush1.msra.mxu0 0.0
    %2468 = vmatprep.subr.mxu0 0.0
    %2469 = vmatpush1.msra.mxu0 0.0
    %2470 = vmatprep.subr.mxu0 0.0
    %2471 = vmatpush1.msra.mxu0 0.0
    %2472 = vmatprep.subr.mxu0 0.0
    %2473 = vmatpush1.msra.mxu0 0.0
    %2474 = vmatprep.subr.mxu0 0.0
    %2475 = vmatpush1.msra.mxu0 0.0
    %2476 = vmatprep.subr.mxu0 0.0
    %2477 = vmatpush1.msra.mxu0 0.0
    %2478 = vmatprep.subr.mxu0 0.0
    %2479 = vmatpush1.msra.mxu0 0.0
    %2480 = vmatprep.subr.mxu0 0.0
    %2481 = vmatpush1.msra.mxu0 0.0
    %2482 = vmatprep.subr.mxu0 0.0
    %2483 = vmatpush1.msra.mxu0 0.0
    %2484 = vmatprep.subr.mxu0 0.0
    %2485 = vmatpush1.msra.mxu0 %v1541
    %2486 = vmatprep.subr.mxu0 0.0
    %2487 = vmatpush1.msra.mxu0 %v1540
    %2488 = vmatprep.subr.mxu0 0.0
    %2489 = vmatpush1.msra.mxu0 %v1539
    %2490 = vmatprep.subr.mxu0 0.0
    %2491 = vmatpush1.msra.mxu0 %v1538
    %2492 = vmatprep.subr.mxu0 0.0
    %2493 = vmatpush2.msra.mxu0 0.0
    %2494 = vmatprep.subr.mxu0 0.0
    %2495 = vmatpush2.msra.mxu0 0.0
    %2496 = vmatprep.subr.mxu0 0.0
    %2497 = vmatpush2.msra.mxu0 0.0
    %2498 = vmatprep.subr.mxu0 0.0
    %2499 = vmatpush2.msra.mxu0 0.0
    %2500 = vmatprep.subr.mxu0 0.0
    %2501 = vmatpush2.msra.mxu0 0.0
    %2502 = vmatprep.subr.mxu0 0.0
    %2503 = vmatpush2.msra.mxu0 0.0
    %2504 = vmatprep.subr.mxu0 0.0
    %2505 = vmatpush2.msra.mxu0 0.0
    %2506 = vmatprep.subr.mxu0 0.0
    %2507 = vmatpush2.msra.mxu0 0.0
    %2508 = vmatprep.subr.mxu0 0.0
    %2509 = vmatpush2.msra.mxu0 0.0
    %2510 = vmatprep.subr.mxu0 0.0
    %2511 = vmatpush2.msra.mxu0 0.0
    %2512 = vmatprep.subr.mxu0 0.0
    %2513 = vmatpush2.msra.mxu0 0.0
    %2514 = vmatprep.subr.mxu0 0.0
    %2515 = vmatpush2.msra.mxu0 0.0
    %2516 = vmatprep.subr.mxu0 0.0
    %2517 = vmatpush2.msra.mxu0 0.0
    %2518 = vmatprep.subr.mxu0 0.0
    %2519 = vmatpush2.msra.mxu0 0.0
    %2520 = vmatprep.subr.mxu0 0.0
    %2521 = vmatpush2.msra.mxu0 0.0
    %2522 = vmatprep.subr.mxu0 0.0
    %2523 = vmatpush2.msra.mxu0 0.0
    %2524 = vmatprep.mubr.f32.mxu0 0.0
    %2525 = vmatmul.mubr.f32.gmra.mxu0 %v2458
    %v2526 = vpop.f32.mrf.mxu0
    %v2527 = vadd.f32 0.0, %v2526
    %v2528 = vpop.f32.mrf.mxu0
    %2529 = vdwg.mxu0
    %v2531 = vrot.slane %v2527, 2
    %v2533 = vadd.f32 %v1630, %v2531
    %v2534 = vxor.u32 %v2533, 2147483648
    %v2535 = vmul.f32 %v2534, 1.442695
    %v2536 = vpow.pop %v2535
    %v2537 = vadd.f32 %v2536, 1.0
    %v2538 = vrcp.pop %v2537
    %v2539 = vmul.f32 1.0, %v2538
    %v2540 = vtanh.pop %v2533
    %v2542 = vrot.slane %v2435, 6
    %v2544 = vmul.f32 %v2539, %v2542
    %2546 = vrot.lane.b32.xlu0 %v2540, 64
    %v2547 = vpop.permute.xlu0 %2546
    %v2549 = vmul.f32 %v2539, %v2547
    %2551 = vrot.lane.b32.xlu0 %v2549, 32
    %v2552 = vpop.permute.xlu0 %2551
    %v2554 = vadd.f32 %v2544, %v2552
    %v2555 = vtanh.pop %v2554
    %2557 = vrot.lane.b32.xlu0 %v2555, 64
    %v2558 = vpop.permute.xlu0 %2557
    %v2560 = vmul.f32 %v2539, %v2558
    %v2562 = vcombine.high %v2560, %v2560
    %v2564 = vunpack.c.l.s4 1983009808
    %v2565 = vunpack.c.0.s8 %v2564
    %v2566 = vlaneseq
    %v2567 = vshrl.u32 %v2566, 7
    %v2568 = vsub.s32 %v2565, %v2567
    %v2569 = vrot.slane %v2562, %v2568
    %v2570 = vcombine.high %v2569, %v2569
    %2572 = vst.msk [vmem:[%s9 + $0x2] sm:$0x3] %vm2101, %v2570
    %v2573 = vrot.slane %v2560, 6
    %2574 = vrot.lane.b32.xlu0 %v2573, 32
    %v2575 = vpop.permute.xlu0 %2574
    %v2576 = vsel %vm217, %v2575, 0
    %2578 = vmatprep.subr.mxu0 0.0
    %2579 = vmatpush1.msra.mxu0 0.0
    %2580 = vmatprep.subr.mxu0 0.0
    %2581 = vmatpush1.msra.mxu0 0.0
    %2582 = vmatprep.subr.mxu0 0.0
    %2583 = vmatpush1.msra.mxu0 0.0
    %2584 = vmatprep.subr.mxu0 0.0
    %2585 = vmatpush1.msra.mxu0 0.0
    %2586 = vmatprep.subr.mxu0 0.0
    %2587 = vmatpush1.msra.mxu0 0.0
    %2588 = vmatprep.subr.mxu0 0.0
    %2589 = vmatpush1.msra.mxu0 0.0
    %2590 = vmatprep.subr.mxu0 0.0
    %2591 = vmatpush1.msra.mxu0 0.0
    %2592 = vmatprep.subr.mxu0 0.0
    %2593 = vmatpush1.msra.mxu0 0.0
    %2594 = vmatprep.subr.mxu0 0.0
    %2595 = vmatpush1.msra.mxu0 0.0
    %2596 = vmatprep.subr.mxu0 0.0
    %2597 = vmatpush1.msra.mxu0 0.0
    %2598 = vmatprep.subr.mxu0 0.0
    %2599 = vmatpush1.msra.mxu0 0.0
    %2600 = vmatprep.subr.mxu0 0.0
    %2601 = vmatpush1.msra.mxu0 0.0
    %2602 = vmatprep.subr.mxu0 0.0
    %2603 = vmatpush1.msra.mxu0 %v1541
    %2604 = vmatprep.subr.mxu0 0.0
    %2605 = vmatpush1.msra.mxu0 %v1540
    %2606 = vmatprep.subr.mxu0 0.0
    %2607 = vmatpush1.msra.mxu0 %v1539
    %2608 = vmatprep.subr.mxu0 0.0
    %2609 = vmatpush1.msra.mxu0 %v1538
    %2610 = vmatprep.subr.mxu0 0.0
    %2611 = vmatpush2.msra.mxu0 0.0
    %2612 = vmatprep.subr.mxu0 0.0
    %2613 = vmatpush2.msra.mxu0 0.0
    %2614 = vmatprep.subr.mxu0 0.0
    %2615 = vmatpush2.msra.mxu0 0.0
    %2616 = vmatprep.subr.mxu0 0.0
    %2617 = vmatpush2.msra.mxu0 0.0
    %2618 = vmatprep.subr.mxu0 0.0
    %2619 = vmatpush2.msra.mxu0 0.0
    %2620 = vmatprep.subr.mxu0 0.0
    %2621 = vmatpush2.msra.mxu0 0.0
    %2622 = vmatprep.subr.mxu0 0.0
    %2623 = vmatpush2.msra.mxu0 0.0
    %2624 = vmatprep.subr.mxu0 0.0
    %2625 = vmatpush2.msra.mxu0 0.0
    %2626 = vmatprep.subr.mxu0 0.0
    %2627 = vmatpush2.msra.mxu0 0.0
    %2628 = vmatprep.subr.mxu0 0.0
    %2629 = vmatpush2.msra.mxu0 0.0
    %2630 = vmatprep.subr.mxu0 0.0
    %2631 = vmatpush2.msra.mxu0 0.0
    %2632 = vmatprep.subr.mxu0 0.0
    %2633 = vmatpush2.msra.mxu0 0.0
    %2634 = vmatprep.subr.mxu0 0.0
    %2635 = vmatpush2.msra.mxu0 0.0
    %2636 = vmatprep.subr.mxu0 0.0
    %2637 = vmatpush2.msra.mxu0 0.0
    %2638 = vmatprep.subr.mxu0 0.0
    %2639 = vmatpush2.msra.mxu0 0.0
    %2640 = vmatprep.subr.mxu0 0.0
    %2641 = vmatpush2.msra.mxu0 0.0
    %2642 = vmatprep.mubr.f32.mxu0 0.0
    %2643 = vmatmul.mubr.f32.gmra.mxu0 %v2576
    %v2644 = vpop.f32.mrf.mxu0
    %v2645 = vadd.f32 0.0, %v2644
    %v2646 = vpop.f32.mrf.mxu0
    %2647 = vdwg.mxu0
    %v2648 = vadd.f32 %v1635, %v2645
    %v2649 = vxor.u32 %v2648, 2147483648
    %v2650 = vmul.f32 %v2649, 1.442695
    %v2651 = vpow.pop %v2650
    %v2652 = vadd.f32 %v2651, 1.0
    %v2653 = vrcp.pop %v2652
    %v2654 = vmul.f32 1.0, %v2653
    %v2655 = vtanh.pop %v2648
    %v2657 = vrot.slane %v2554, 6
    %v2659 = vmul.f32 %v2654, %v2657
    %2661 = vrot.lane.b32.xlu0 %v2655, 64
    %v2662 = vpop.permute.xlu0 %2661
    %v2664 = vmul.f32 %v2654, %v2662
    %2666 = vrot.lane.b32.xlu0 %v2664, 32
    %v2667 = vpop.permute.xlu0 %2666
    %v2669 = vadd.f32 %v2659, %v2667
    %v2670 = vtanh.pop %v2669
    %2672 = vrot.lane.b32.xlu0 %v2670, 64
    %v2673 = vpop.permute.xlu0 %2672
    %v2675 = vmul.f32 %v2654, %v2673
    %v2678 = vunpack.c.l.s4 1983009808
    %v2679 = vunpack.c.0.s8 %v2678
    %v2680 = vlaneseq
    %v2681 = vshrl.u32 %v2680, 7
    %v2682 = vsub.s32 %v2679, %v2681
    %v2683 = vrot.slane %v2675, %v2682
    %2684 = vrot.lane.b32.xlu0 %v2683, 32
    %v2685 = vpop.permute.xlu0 %2684
    %2687 = vst.msk [vmem:[%s9 + $0x4] sm:$0x3] %vm320, %v2685
    %2688 = vrot.lane.b32.xlu0 %v2675, 32
    %v2689 = vpop.permute.xlu0 %2688
    %v2690 = vsel %vm217, %v2689, 0
    %2692 = vmatprep.subr.mxu0 0.0
    %2693 = vmatpush1.msra.mxu0 0.0
    %2694 = vmatprep.subr.mxu0 0.0
    %2695 = vmatpush1.msra.mxu0 0.0
    %2696 = vmatprep.subr.mxu0 0.0
    %2697 = vmatpush1.msra.mxu0 0.0
    %2698 = vmatprep.subr.mxu0 0.0
    %2699 = vmatpush1.msra.mxu0 0.0
    %2700 = vmatprep.subr.mxu0 0.0
    %2701 = vmatpush1.msra.mxu0 0.0
    %2702 = vmatprep.subr.mxu0 0.0
    %2703 = vmatpush1.msra.mxu0 0.0
    %2704 = vmatprep.subr.mxu0 0.0
    %2705 = vmatpush1.msra.mxu0 0.0
    %2706 = vmatprep.subr.mxu0 0.0
    %2707 = vmatpush1.msra.mxu0 0.0
    %2708 = vmatprep.subr.mxu0 0.0
    %2709 = vmatpush1.msra.mxu0 0.0
    %2710 = vmatprep.subr.mxu0 0.0
    %2711 = vmatpush1.msra.mxu0 0.0
    %2712 = vmatprep.subr.mxu0 0.0
    %2713 = vmatpush1.msra.mxu0 0.0
    %2714 = vmatprep.subr.mxu0 0.0
    %2715 = vmatpush1.msra.mxu0 0.0
    %2716 = vmatprep.subr.mxu0 0.0
    %2717 = vmatpush1.msra.mxu0 %v1541
    %2718 = vmatprep.subr.mxu0 0.0
    %2719 = vmatpush1.msra.mxu0 %v1540
    %2720 = vmatprep.subr.mxu0 0.0
    %2721 = vmatpush1.msra.mxu0 %v1539
    %2722 = vmatprep.subr.mxu0 0.0
    %2723 = vmatpush1.msra.mxu0 %v1538
    %2724 = vmatprep.subr.mxu0 0.0
    %2725 = vmatpush2.msra.mxu0 0.0
    %2726 = vmatprep.subr.mxu0 0.0
    %2727 = vmatpush2.msra.mxu0 0.0
    %2728 = vmatprep.subr.mxu0 0.0
    %2729 = vmatpush2.msra.mxu0 0.0
    %2730 = vmatprep.subr.mxu0 0.0
    %2731 = vmatpush2.msra.mxu0 0.0
    %2732 = vmatprep.subr.mxu0 0.0
    %2733 = vmatpush2.msra.mxu0 0.0
    %2734 = vmatprep.subr.mxu0 0.0
    %2735 = vmatpush2.msra.mxu0 0.0
    %2736 = vmatprep.subr.mxu0 0.0
    %2737 = vmatpush2.msra.mxu0 0.0
    %2738 = vmatprep.subr.mxu0 0.0
    %2739 = vmatpush2.msra.mxu0 0.0
    %2740 = vmatprep.subr.mxu0 0.0
    %2741 = vmatpush2.msra.mxu0 0.0
    %2742 = vmatprep.subr.mxu0 0.0
    %2743 = vmatpush2.msra.mxu0 0.0
    %2744 = vmatprep.subr.mxu0 0.0
    %2745 = vmatpush2.msra.mxu0 0.0
    %2746 = vmatprep.subr.mxu0 0.0
    %2747 = vmatpush2.msra.mxu0 0.0
    %2748 = vmatprep.subr.mxu0 0.0
    %2749 = vmatpush2.msra.mxu0 0.0
    %2750 = vmatprep.subr.mxu0 0.0
    %2751 = vmatpush2.msra.mxu0 0.0
    %2752 = vmatprep.subr.mxu0 0.0
    %2753 = vmatpush2.msra.mxu0 0.0
    %2754 = vmatprep.subr.mxu0 0.0
    %2755 = vmatpush2.msra.mxu0 0.0
    %2756 = vmatprep.mubr.f32.mxu0 0.0
    %2757 = vmatmul.mubr.f32.gmra.mxu0 %v2690
    %v2758 = vpop.f32.mrf.mxu0
    %v2759 = vadd.f32 0.0, %v2758
    %v2760 = vpop.f32.mrf.mxu0
    %2761 = vdwg.mxu0
    %v2763 = vrot.slane %v2759, 6
    %v2765 = vadd.f32 %v1635, %v2763
    %v2766 = vxor.u32 %v2765, 2147483648
    %v2767 = vmul.f32 %v2766, 1.442695
    %v2768 = vpow.pop %v2767
    %v2769 = vadd.f32 %v2768, 1.0
    %v2770 = vrcp.pop %v2769
    %v2771 = vmul.f32 1.0, %v2770
    %v2772 = vtanh.pop %v2765
    %v2774 = vrot.slane %v2669, 6
    %v2776 = vmul.f32 %v2771, %v2774
    %2778 = vrot.lane.b32.xlu0 %v2772, 64
    %v2779 = vpop.permute.xlu0 %2778
    %v2781 = vmul.f32 %v2771, %v2779
    %2783 = vrot.lane.b32.xlu0 %v2781, 32
    %v2784 = vpop.permute.xlu0 %2783
    %v2786 = vadd.f32 %v2776, %v2784
    %v2787 = vtanh.pop %v2786
    %2789 = vrot.lane.b32.xlu0 %v2787, 64
    %v2790 = vpop.permute.xlu0 %2789
    %v2792 = vmul.f32 %v2771, %v2790
    %v2795 = vunpack.c.l.s4 1983009808
    %v2796 = vunpack.c.0.s8 %v2795
    %v2797 = vlaneseq
    %v2798 = vshrl.u32 %v2797, 7
    %v2799 = vsub.s32 %v2796, %v2798
    %v2800 = vrot.slane %v2792, %v2799
    %v2801 = vcombine.high %v2800, %v2800
    %2802 = vrot.lane.b32.xlu0 %v2801, 64
    %v2803 = vpop.permute.xlu0 %2802
    %2805 = vst.msk [vmem:[%s9 + $0x4] sm:$0x3] %vm1862, %v2803
    %v2806 = vrot.slane %v2792, 2
    %2807 = vrot.lane.b32.xlu0 %v2806, 32
    %v2808 = vpop.permute.xlu0 %2807
    %v2809 = vsel %vm217, %v2808, 0
    %2811 = vmatprep.subr.mxu0 0.0
    %2812 = vmatpush1.msra.mxu0 0.0
    %2813 = vmatprep.subr.mxu0 0.0
    %2814 = vmatpush1.msra.mxu0 0.0
    %2815 = vmatprep.subr.mxu0 0.0
    %2816 = vmatpush1.msra.mxu0 0.0
    %2817 = vmatprep.subr.mxu0 0.0
    %2818 = vmatpush1.msra.mxu0 0.0
    %2819 = vmatprep.subr.mxu0 0.0
    %2820 = vmatpush1.msra.mxu0 0.0
    %2821 = vmatprep.subr.mxu0 0.0
    %2822 = vmatpush1.msra.mxu0 0.0
    %2823 = vmatprep.subr.mxu0 0.0
    %2824 = vmatpush1.msra.mxu0 0.0
    %2825 = vmatprep.subr.mxu0 0.0
    %2826 = vmatpush1.msra.mxu0 0.0
    %2827 = vmatprep.subr.mxu0 0.0
    %2828 = vmatpush1.msra.mxu0 0.0
    %2829 = vmatprep.subr.mxu0 0.0
    %2830 = vmatpush1.msra.mxu0 0.0
    %2831 = vmatprep.subr.mxu0 0.0
    %2832 = vmatpush1.msra.mxu0 0.0
    %2833 = vmatprep.subr.mxu0 0.0
    %2834 = vmatpush1.msra.mxu0 0.0
    %2835 = vmatprep.subr.mxu0 0.0
    %2836 = vmatpush1.msra.mxu0 %v1541
    %2837 = vmatprep.subr.mxu0 0.0
    %2838 = vmatpush1.msra.mxu0 %v1540
    %2839 = vmatprep.subr.mxu0 0.0
    %2840 = vmatpush1.msra.mxu0 %v1539
    %2841 = vmatprep.subr.mxu0 0.0
    %2842 = vmatpush1.msra.mxu0 %v1538
    %2843 = vmatprep.subr.mxu0 0.0
    %2844 = vmatpush2.msra.mxu0 0.0
    %2845 = vmatprep.subr.mxu0 0.0
    %2846 = vmatpush2.msra.mxu0 0.0
    %2847 = vmatprep.subr.mxu0 0.0
    %2848 = vmatpush2.msra.mxu0 0.0
    %2849 = vmatprep.subr.mxu0 0.0
    %2850 = vmatpush2.msra.mxu0 0.0
    %2851 = vmatprep.subr.mxu0 0.0
    %2852 = vmatpush2.msra.mxu0 0.0
    %2853 = vmatprep.subr.mxu0 0.0
    %2854 = vmatpush2.msra.mxu0 0.0
    %2855 = vmatprep.subr.mxu0 0.0
    %2856 = vmatpush2.msra.mxu0 0.0
    %2857 = vmatprep.subr.mxu0 0.0
    %2858 = vmatpush2.msra.mxu0 0.0
    %2859 = vmatprep.subr.mxu0 0.0
    %2860 = vmatpush2.msra.mxu0 0.0
    %2861 = vmatprep.subr.mxu0 0.0
    %2862 = vmatpush2.msra.mxu0 0.0
    %2863 = vmatprep.subr.mxu0 0.0
    %2864 = vmatpush2.msra.mxu0 0.0
    %2865 = vmatprep.subr.mxu0 0.0
    %2866 = vmatpush2.msra.mxu0 0.0
    %2867 = vmatprep.subr.mxu0 0.0
    %2868 = vmatpush2.msra.mxu0 0.0
    %2869 = vmatprep.subr.mxu0 0.0
    %2870 = vmatpush2.msra.mxu0 0.0
    %2871 = vmatprep.subr.mxu0 0.0
    %2872 = vmatpush2.msra.mxu0 0.0
    %2873 = vmatprep.subr.mxu0 0.0
    %2874 = vmatpush2.msra.mxu0 0.0
    %2875 = vmatprep.mubr.f32.mxu0 0.0
    %2876 = vmatmul.mubr.f32.gmra.mxu0 %v2809
    %v2877 = vpop.f32.mrf.mxu0
    %v2878 = vadd.f32 0.0, %v2877
    %v2879 = vpop.f32.mrf.mxu0
    %2880 = vdwg.mxu0
    %v2882 = vrot.slane %v2878, 4
    %v2884 = vadd.f32 %v1635, %v2882
    %v2885 = vxor.u32 %v2884, 2147483648
    %v2886 = vmul.f32 %v2885, 1.442695
    %v2887 = vpow.pop %v2886
    %v2888 = vadd.f32 %v2887, 1.0
    %v2889 = vrcp.pop %v2888
    %v2890 = vmul.f32 1.0, %v2889
    %v2891 = vtanh.pop %v2884
    %v2893 = vrot.slane %v2786, 6
    %v2895 = vmul.f32 %v2890, %v2893
    %2897 = vrot.lane.b32.xlu0 %v2891, 64
    %v2898 = vpop.permute.xlu0 %2897
    %v2900 = vmul.f32 %v2890, %v2898
    %2902 = vrot.lane.b32.xlu0 %v2900, 32
    %v2903 = vpop.permute.xlu0 %2902
    %v2905 = vadd.f32 %v2895, %v2903
    %v2906 = vtanh.pop %v2905
    %2908 = vrot.lane.b32.xlu0 %v2906, 64
    %v2909 = vpop.permute.xlu0 %2908
    %v2911 = vmul.f32 %v2890, %v2909
    %v2913 = vcombine.high %v2911, %v2911
    %v2915 = vunpack.c.l.s4 1983009808
    %v2916 = vunpack.c.0.s8 %v2915
    %v2917 = vlaneseq
    %v2918 = vshrl.u32 %v2917, 7
    %v2919 = vsub.s32 %v2916, %v2918
    %v2920 = vrot.slane %v2913, %v2919
    %2921 = vrot.lane.b32.xlu0 %v2920, 96
    %v2922 = vpop.permute.xlu0 %2921
    %2924 = vst.msk [vmem:[%s9 + $0x4] sm:$0x3] %vm1982, %v2922
    %v2925 = vrot.slane %v2911, 4
    %2926 = vrot.lane.b32.xlu0 %v2925, 32
    %v2927 = vpop.permute.xlu0 %2926
    %v2928 = vsel %vm217, %v2927, 0
    %2930 = vmatprep.subr.mxu0 0.0
    %2931 = vmatpush1.msra.mxu0 0.0
    %2932 = vmatprep.subr.mxu0 0.0
    %2933 = vmatpush1.msra.mxu0 0.0
    %2934 = vmatprep.subr.mxu0 0.0
    %2935 = vmatpush1.msra.mxu0 0.0
    %2936 = vmatprep.subr.mxu0 0.0
    %2937 = vmatpush1.msra.mxu0 0.0
    %2938 = vmatprep.subr.mxu0 0.0
    %2939 = vmatpush1.msra.mxu0 0.0
    %2940 = vmatprep.subr.mxu0 0.0
    %2941 = vmatpush1.msra.mxu0 0.0
    %2942 = vmatprep.subr.mxu0 0.0
    %2943 = vmatpush1.msra.mxu0 0.0
    %2944 = vmatprep.subr.mxu0 0.0
    %2945 = vmatpush1.msra.mxu0 0.0
    %2946 = vmatprep.subr.mxu0 0.0
    %2947 = vmatpush1.msra.mxu0 0.0
    %2948 = vmatprep.subr.mxu0 0.0
    %2949 = vmatpush1.msra.mxu0 0.0
    %2950 = vmatprep.subr.mxu0 0.0
    %2951 = vmatpush1.msra.mxu0 0.0
    %2952 = vmatprep.subr.mxu0 0.0
    %2953 = vmatpush1.msra.mxu0 0.0
    %2954 = vmatprep.subr.mxu0 0.0
    %2955 = vmatpush1.msra.mxu0 %v1541
    %2956 = vmatprep.subr.mxu0 0.0
    %2957 = vmatpush1.msra.mxu0 %v1540
    %2958 = vmatprep.subr.mxu0 0.0
    %2959 = vmatpush1.msra.mxu0 %v1539
    %2960 = vmatprep.subr.mxu0 0.0
    %2961 = vmatpush1.msra.mxu0 %v1538
    %2962 = vmatprep.subr.mxu0 0.0
    %2963 = vmatpush2.msra.mxu0 0.0
    %2964 = vmatprep.subr.mxu0 0.0
    %2965 = vmatpush2.msra.mxu0 0.0
    %2966 = vmatprep.subr.mxu0 0.0
    %2967 = vmatpush2.msra.mxu0 0.0
    %2968 = vmatprep.subr.mxu0 0.0
    %2969 = vmatpush2.msra.mxu0 0.0
    %2970 = vmatprep.subr.mxu0 0.0
    %2971 = vmatpush2.msra.mxu0 0.0
    %2972 = vmatprep.subr.mxu0 0.0
    %2973 = vmatpush2.msra.mxu0 0.0
    %2974 = vmatprep.subr.mxu0 0.0
    %2975 = vmatpush2.msra.mxu0 0.0
    %2976 = vmatprep.subr.mxu0 0.0
    %2977 = vmatpush2.msra.mxu0 0.0
    %2978 = vmatprep.subr.mxu0 0.0
    %2979 = vmatpush2.msra.mxu0 0.0
    %2980 = vmatprep.subr.mxu0 0.0
    %2981 = vmatpush2.msra.mxu0 0.0
    %2982 = vmatprep.subr.mxu0 0.0
    %2983 = vmatpush2.msra.mxu0 0.0
    %2984 = vmatprep.subr.mxu0 0.0
    %2985 = vmatpush2.msra.mxu0 0.0
    %2986 = vmatprep.subr.mxu0 0.0
    %2987 = vmatpush2.msra.mxu0 0.0
    %2988 = vmatprep.subr.mxu0 0.0
    %2989 = vmatpush2.msra.mxu0 0.0
    %2990 = vmatprep.subr.mxu0 0.0
    %2991 = vmatpush2.msra.mxu0 0.0
    %2992 = vmatprep.subr.mxu0 0.0
    %2993 = vmatpush2.msra.mxu0 0.0
    %2994 = vmatprep.mubr.f32.mxu0 0.0
    %2995 = vmatmul.mubr.f32.gmra.mxu0 %v2928
    %v2996 = vpop.f32.mrf.mxu0
    %v2997 = vadd.f32 0.0, %v2996
    %v2998 = vpop.f32.mrf.mxu0
    %2999 = vdwg.mxu0
    %v3001 = vrot.slane %v2997, 2
    %v3003 = vadd.f32 %v1635, %v3001
    %v3004 = vxor.u32 %v3003, 2147483648
    %v3005 = vmul.f32 %v3004, 1.442695
    %v3006 = vpow.pop %v3005
    %v3007 = vadd.f32 %v3006, 1.0
    %v3008 = vrcp.pop %v3007
    %v3009 = vmul.f32 1.0, %v3008
    %v3010 = vtanh.pop %v3003
    %v3012 = vrot.slane %v2905, 6
    %v3014 = vmul.f32 %v3009, %v3012
    %3016 = vrot.lane.b32.xlu0 %v3010, 64
    %v3017 = vpop.permute.xlu0 %3016
    %v3019 = vmul.f32 %v3009, %v3017
    %3021 = vrot.lane.b32.xlu0 %v3019, 32
    %v3022 = vpop.permute.xlu0 %3021
    %v3024 = vadd.f32 %v3014, %v3022
    %v3025 = vtanh.pop %v3024
    %3027 = vrot.lane.b32.xlu0 %v3025, 64
    %v3028 = vpop.permute.xlu0 %3027
    %v3030 = vmul.f32 %v3009, %v3028
    %v3032 = vcombine.high %v3030, %v3030
    %v3034 = vunpack.c.l.s4 1983009808
    %v3035 = vunpack.c.0.s8 %v3034
    %v3036 = vlaneseq
    %v3037 = vshrl.u32 %v3036, 7
    %v3038 = vsub.s32 %v3035, %v3037
    %v3039 = vrot.slane %v3032, %v3038
    %v3040 = vcombine.high %v3039, %v3039
    %3042 = vst.msk [vmem:[%s9 + $0x4] sm:$0x3] %vm2101, %v3040
    %v3043 = vld [vmem:[%s7] sm:$0xff]
    %v3044 = vld [vmem:[%s7 + $0x8] sm:$0xff]
    %v3045 = vld [vmem:[%s7 + $0x10] sm:$0xff]
    %v3046 = vld [vmem:[%s7 + $0x18] sm:$0xff]
    %v3047 = vld [vmem:[#allocation12] sm:$0x1]
    %v3049 = vlaneseq
    %v3050 = vshrl.u32 %v3049, 7
    %v3051 = vsub.s32 0, %v3050
    %v3052 = vrot.slane %v3047, %v3051
    %v3054 = vrot.slane %v3030, 6
    %3055 = vrot.lane.b32.xlu0 %v3054, 32
    %v3056 = vpop.permute.xlu0 %3055
    %v3057 = vsel %vm217, %v3056, 0
    %3059 = vmatprep.subr.mxu0 0.0
    %3060 = vmatpush1.msra.mxu0 0.0
    %3061 = vmatprep.subr.mxu0 0.0
    %3062 = vmatpush1.msra.mxu0 0.0
    %3063 = vmatprep.subr.mxu0 0.0
    %3064 = vmatpush1.msra.mxu0 0.0
    %3065 = vmatprep.subr.mxu0 0.0
    %3066 = vmatpush1.msra.mxu0 0.0
    %3067 = vmatprep.subr.mxu0 0.0
    %3068 = vmatpush1.msra.mxu0 0.0
    %3069 = vmatprep.subr.mxu0 0.0
    %3070 = vmatpush1.msra.mxu0 0.0
    %3071 = vmatprep.subr.mxu0 0.0
    %3072 = vmatpush1.msra.mxu0 0.0
    %3073 = vmatprep.subr.mxu0 0.0
    %3074 = vmatpush1.msra.mxu0 0.0
    %3075 = vmatprep.subr.mxu0 0.0
    %3076 = vmatpush1.msra.mxu0 0.0
    %3077 = vmatprep.subr.mxu0 0.0
    %3078 = vmatpush1.msra.mxu0 0.0
    %3079 = vmatprep.subr.mxu0 0.0
    %3080 = vmatpush1.msra.mxu0 0.0
    %3081 = vmatprep.subr.mxu0 0.0
    %3082 = vmatpush1.msra.mxu0 0.0
    %3083 = vmatprep.subr.mxu0 0.0
    %3084 = vmatpush1.msra.mxu0 %v3046
    %3085 = vmatprep.subr.mxu0 0.0
    %3086 = vmatpush1.msra.mxu0 %v3045
    %3087 = vmatprep.subr.mxu0 0.0
    %3088 = vmatpush1.msra.mxu0 %v3044
    %3089 = vmatprep.subr.mxu0 0.0
    %3090 = vmatpush1.msra.mxu0 %v3043
    %3091 = vmatprep.subr.mxu0 0.0
    %3092 = vmatpush2.msra.mxu0 0.0
    %3093 = vmatprep.subr.mxu0 0.0
    %3094 = vmatpush2.msra.mxu0 0.0
    %3095 = vmatprep.subr.mxu0 0.0
    %3096 = vmatpush2.msra.mxu0 0.0
    %3097 = vmatprep.subr.mxu0 0.0
    %3098 = vmatpush2.msra.mxu0 0.0
    %3099 = vmatprep.subr.mxu0 0.0
    %3100 = vmatpush2.msra.mxu0 0.0
    %3101 = vmatprep.subr.mxu0 0.0
    %3102 = vmatpush2.msra.mxu0 0.0
    %3103 = vmatprep.subr.mxu0 0.0
    %3104 = vmatpush2.msra.mxu0 0.0
    %3105 = vmatprep.subr.mxu0 0.0
    %3106 = vmatpush2.msra.mxu0 0.0
    %3107 = vmatprep.subr.mxu0 0.0
    %3108 = vmatpush2.msra.mxu0 0.0
    %3109 = vmatprep.subr.mxu0 0.0
    %3110 = vmatpush2.msra.mxu0 0.0
    %3111 = vmatprep.subr.mxu0 0.0
    %3112 = vmatpush2.msra.mxu0 0.0
    %3113 = vmatprep.subr.mxu0 0.0
    %3114 = vmatpush2.msra.mxu0 0.0
    %3115 = vmatprep.subr.mxu0 0.0
    %3116 = vmatpush2.msra.mxu0 0.0
    %3117 = vmatprep.subr.mxu0 0.0
    %3118 = vmatpush2.msra.mxu0 0.0
    %3119 = vmatprep.subr.mxu0 0.0
    %3120 = vmatpush2.msra.mxu0 0.0
    %3121 = vmatprep.subr.mxu0 0.0
    %3122 = vmatpush2.msra.mxu0 0.0
    %3123 = vmatprep.mubr.f32.mxu0 0.0
    %3124 = vmatmul.mubr.f32.gmra.mxu0 %v3057
    %v3125 = vpop.f32.mrf.mxu0
    %v3126 = vadd.f32 %v3052, %v3125
    %v3127 = vpop.f32.mrf.mxu0
    %3128 = vdwg.mxu0
    %vm3129 = vcmask 41984
    %3130 = vst.msk [vmem:[#allocation14] sm:$0x3] %vm3129, %v3126
    // Predicated region
    $region62: #{lstm_model_forward.1} parent=1 // pred_check
      _
    $region63: #{lstm_model_forward.1} parent=1 // pred_check_branch
      %3132 = sbr.rel (0) target = $region65
    $region64: #{lstm_model_forward.1} parent=1 // pred_region
      _
    $region65: #{lstm_model_forward.1} parent=1 // pred_fallthru
      _
    // Predicated region
    $region66: #{lstm_model_forward.1} parent=1 // pred_check
      _
    $region67: #{lstm_model_forward.1} parent=1 // pred_check_branch
      %3134 = sbr.rel (0) target = $region69
    $region68: #{lstm_model_forward.1} parent=1 // pred_region
      %s3136 = ssub.s32 32, 32
      %3137 = vsyncadd [#allocation5], %s3136
      %s3139 = sshll.u32 [#allocation14], 4
      %s3140 = int_to_ptr.vmem [resolvable:$true] %s3139
      %3142 = dma.vmem_to_hbm [thread:$0]  %s3140, 32, %s10, [#allocation5]
    $region69: #{lstm_model_forward.1} parent=1 // pred_fallthru
      _
    // Predicated region
    $region70: #{lstm_model_forward.1} parent=1 // pred_check
      _
    $region71: #{lstm_model_forward.1} parent=1 // pred_check_branch
      %3144 = sbr.rel (0) target = $region73
    $region72: #{lstm_model_forward.1} parent=1 // pred_region
      _
    $region73: #{lstm_model_forward.1} parent=1 // pred_fallthru
      _
    // Predicated region
    $region74: #{lstm_model_forward.1} parent=1 // pred_check
      _
    $region75: #{lstm_model_forward.1} parent=1 // pred_check_branch
      %3146 = sbr.rel (0) target = $region77
    $region76: #{lstm_model_forward.1} parent=1 // pred_region
      %3147 = dma.done [#allocation5], 32
    $region77: #{lstm_model_forward.1} parent=1 // pred_fallthru
      _
    %3148 = vsyncpa [#allocation4], 1
    %3149 = vsyncpa [#allocation7], 1
    %3150 = vsyncpa [#allocation10], 1
    %3151 = vsyncpa [#allocation13], 1
    %3152 = vsyncpa [#allocation5], 1

</llo_original>
